<compile_context>
chip_gen: v6e
topology: v6e:2x2x1
jax: 0.10.0
libtpu: 0.0.40
codegen_flags: <defaults>
</compile_context>

<pallas_src>
import jax
import jax.numpy as jnp
from jax.experimental import pallas as pl
from jax.experimental.pallas import tpu as pltpu

H, W, C = 224, 224, 3
K = H * W * C            # 150528 = in_features
N_OUT = 1                # out_features
TK = 50176               # K tile: 150528 / 50176 = 3 grid steps; 50176 % 128 == 0


def linear_kernel(x_ref, w_ref, b_ref, o_ref, acc_ref):
    """One grid step accumulates sum_k x[:, k_tile] * w[0, k_tile] into (B, 1)."""
    k = pl.program_id(0)

    @pl.when(k == 0)
    def _():
        acc_ref[...] = jnp.zeros_like(acc_ref)

    # (B, TK) * (1, TK) broadcast on the VPU, lane reduce on the XLU -> (B, 1).
    acc_ref[...] += jnp.sum(
        x_ref[...] * w_ref[...], axis=-1, keepdims=True
    )

    @pl.when(k == pl.num_programs(0) - 1)
    def _():
        o_ref[...] = (acc_ref[...] + b_ref[0]).astype(o_ref.dtype)


def linear_model_forward(x_nchw, weight, bias):
    """x_nchw: (B, 3, 224, 224) f32. weight: (N_OUT, K). bias: (N_OUT,).

    Returns (B, N_OUT) — identical semantics to the PyTorch forward.
    """
    B = x_nchw.shape[0]
    x2d = x_nchw.reshape(B, K)                      # == torch.flatten(x, 1, 3)
    w_row = weight.reshape(N_OUT, K)                # lane-dense (1, K) row, no transpose
    b1d = bias.reshape(N_OUT).astype(jnp.float32)   # scalar bias in SMEM

    grid = (K // TK,)                               # 3 reduction steps

    return pl.pallas_call(
        linear_kernel,
        out_shape=jax.ShapeDtypeStruct((B, N_OUT), x2d.dtype),
        grid_spec=pltpu.PrefetchScalarGridSpec(
            num_scalar_prefetch=0,
            grid=grid,
            in_specs=[
                pl.BlockSpec((B, TK), lambda k: (0, k)),          # x tile
                pl.BlockSpec((N_OUT, TK), lambda k: (0, k)),      # weight row tile
                pl.BlockSpec(memory_space=pltpu.MemorySpace.SMEM),  # bias scalar
            ],
            out_specs=pl.BlockSpec((B, N_OUT), lambda k: (0, 0)),  # resident accumulator
            scratch_shapes=[pltpu.VMEM((B, N_OUT), jnp.float32)],
        ),
        compiler_params=pltpu.CompilerParams(
            dimension_semantics=("arbitrary",),     # K is a reduction axis
            vmem_limit_bytes=32 * 1024 * 1024,      # ~7 MiB needed; safe on v5e/v6e/v7x
        ),
    )(x2d, w_row, b1d)


if __name__ == "__main__":
    key = jax.random.PRNGKey(0)
    kx, kw, kb = jax.random.split(key, 3)

    B = 2
    # The module hard-wires in_features = 3*224*224, so the input must be
    # (B, 3, 224, 224); only the batch dim is kept small.
    x = jax.random.normal(kx, (B, C, H, W), dtype=jnp.float32)

    # Deterministic parameter init mimicking nn.Linear's U(-1/sqrt(K), 1/sqrt(K)).
    bound = 1.0 / jnp.sqrt(jnp.float32(K))
    weight = jax.random.uniform(kw, (N_OUT, K), jnp.float32, -bound, bound)
    bias = jax.random.uniform(kb, (N_OUT,), jnp.float32, -bound, bound)

    out = linear_model_forward(x, weight, bias)
    out = jax.block_until_ready(out)

    # Cross-check against plain-JAX reference.
    ref = x.reshape(B, K) @ weight.T + bias
    assert out.shape == (B, N_OUT)
    assert jnp.allclose(out, ref, atol=1e-3, rtol=1e-3)

    print("KERNEL_OK")
</pallas_src>

<mosaic_0001>
module attributes {stable_mosaic.version = 11 : i64} {
  func.func @linear_kernel(%arg0: i32, %arg1: memref<2x50176xf32, #tpu.memory_space<vmem>>, %arg2: memref<1x50176xf32, #tpu.memory_space<vmem>>, %arg3: memref<1xf32, #tpu.memory_space<smem>>, %arg4: memref<2x1xf32, #tpu.memory_space<vmem>>, %arg5: memref<2x1xf32, #tpu.memory_space<vmem>>) attributes {dimension_semantics = [#tpu.dimension_semantics<arbitrary>], iteration_bounds = array<i64: 3>, scalar_prefetch = 0 : i64, scratch_operands = 1 : i64, tpu.core_type = #tpu.core_type<tc>, window_params = [{transform_indices = @transform_0, window_bounds = array<i64: 2, 50176>}, {transform_indices = @transform_1, window_bounds = array<i64: 1, 50176>}, {transform_indices = @transform_2, window_bounds = array<i64: 1>}, {pipeline_mode = #tpu.pipeline_mode<synchronous>, transform_indices = @transform_3, window_bounds = array<i64: 2, 1>}]} {
    %c0_i32 = arith.constant 0 : i32
    %0 = arith.cmpi eq, %arg0, %c0_i32 : i32
    %1 = arith.extui %0 : i1 to i32
    %c0_i32_0 = arith.constant 0 : i32
    %2 = arith.cmpi ne, %1, %c0_i32_0 : i32
    scf.if %2 {
      %cst_9 = arith.constant 0.000000e+00 : f32
      %15 = vector.broadcast %cst_9 : f32 to vector<2x1xf32>
      %c0_10 = arith.constant 0 : index
      %c0_11 = arith.constant 0 : index
      %16 = vector.load %arg5[%c0_10, %c0_11] : memref<2x1xf32, #tpu.memory_space<vmem>>, vector<2x1xf32>
      tpu.vector_store %arg5[%c0_10, %c0_11], %15 {strides = array<i32>} : memref<2x1xf32, #tpu.memory_space<vmem>>, vector<2x1xf32>,
    } else {
    }
    %c0 = arith.constant 0 : index
    %c0_1 = arith.constant 0 : index
    %3 = vector.load %arg5[%c0, %c0_1] : memref<2x1xf32, #tpu.memory_space<vmem>>, vector<2x1xf32>
    %c0_2 = arith.constant 0 : index
    %c0_3 = arith.constant 0 : index
    %4 = vector.load %arg1[%c0_2, %c0_3] : memref<2x50176xf32, #tpu.memory_space<vmem>>, vector<2x50176xf32>
    %c0_4 = arith.constant 0 : index
    %c0_5 = arith.constant 0 : index
    %5 = vector.load %arg2[%c0_4, %c0_5] : memref<1x50176xf32, #tpu.memory_space<vmem>>, vector<1x50176xf32>
    %6 = vector.broadcast %5 : vector<1x50176xf32> to vector<2x50176xf32>
    %7 = arith.mulf %4, %6 : vector<2x50176xf32>
    %cst = arith.constant dense<0.000000e+00> : vector<2xf32>
    %8 = vector.multi_reduction <add>, %7, %cst [1] : vector<2x50176xf32> to vector<2xf32>
    %9 = vector.shape_cast %8 : vector<2xf32> to vector<2x1xf32>
    %10 = arith.addf %3, %9 : vector<2x1xf32>
    %c0_6 = arith.constant 0 : index
    %c0_7 = arith.constant 0 : index
    %11 = vector.load %arg5[%c0_6, %c0_7] : memref<2x1xf32, #tpu.memory_space<vmem>>, vector<2x1xf32>
    tpu.vector_store %arg5[%c0_6, %c0_7], %10 {strides = array<i32>} : memref<2x1xf32, #tpu.memory_space<vmem>>, vector<2x1xf32>,
    %c2_i32 = arith.constant 2 : i32
    %12 = arith.cmpi eq, %arg0, %c2_i32 : i32
    %13 = arith.extui %12 : i1 to i32
    %c0_i32_8 = arith.constant 0 : i32
    %14 = arith.cmpi ne, %13, %c0_i32_8 : i32
    scf.if %14 {
      %c0_9 = arith.constant 0 : index
      %c0_10 = arith.constant 0 : index
      %15 = vector.load %arg5[%c0_9, %c0_10] : memref<2x1xf32, #tpu.memory_space<vmem>>, vector<2x1xf32>
      %c0_11 = arith.constant 0 : index
      %16 = memref.load %arg3[%c0_11] : memref<1xf32, #tpu.memory_space<smem>>
      %17 = vector.broadcast %16 : f32 to vector<2x1xf32>
      %18 = arith.addf %15, %17 : vector<2x1xf32>
      %c0_12 = arith.constant 0 : index
      %c0_13 = arith.constant 0 : index
      %19 = vector.load %arg4[%c0_12, %c0_13] : memref<2x1xf32, #tpu.memory_space<vmem>>, vector<2x1xf32>
      tpu.vector_store %arg4[%c0_12, %c0_13], %18 {strides = array<i32>} : memref<2x1xf32, #tpu.memory_space<vmem>>, vector<2x1xf32>,
    } else {
    }
    return
  }
  func.func @transform_0(%arg0: i32) -> (i32, i32) {
    %c0_i32 = arith.constant 0 : i32
    %c0_i32_0 = arith.constant 0 : i32
    return %c0_i32, %arg0 : i32, i32
  }
  func.func @transform_1(%arg0: i32) -> (i32, i32) {
    %c0_i32 = arith.constant 0 : i32
    %c0_i32_0 = arith.constant 0 : i32
    return %c0_i32, %arg0 : i32, i32
  }
  func.func @transform_2(%arg0: i32) -> i32 {
    %c0_i32 = arith.constant 0 : i32
    %c0_i32_0 = arith.constant 0 : i32
    return %c0_i32 : i32
  }
  func.func @transform_3(%arg0: i32) -> (i32, i32) {
    %c0_i32 = arith.constant 0 : i32
    %c0_i32_0 = arith.constant 0 : i32
    %c0_i32_1 = arith.constant 0 : i32
    return %c0_i32, %c0_i32_0 : i32, i32
  }
}

</mosaic_0001>

<llo_original>
// kernel: tpu_custom_call.1
$region0: #{tpu_custom_call.1}
  #allocation0 [shape = 'u32[]', space=smem, size = 0x4, offset = 0x4, fixed_abs, tag = 'smem constant byte address 0x4 - core index']
  #allocation1 [shape = 'u32[144,128]{1,0:T(1,128)}', space=vmem, size = 0x12000, scoped, tag = 'internal scratch']
  #allocation2 [shape = 'f32[2,1]{1,0:T(2,128)}', space=vmem, size = 0x400, scoped, tag = 'scratch operand']
  #allocation3 [shape = 'f32[1]{0:T(128)S(6)}', space=smem, size = 0x200, scoped, tag = 'scoped memory for tpu_custom_call.1']
  %s0 = inlined_call_operand.hbm [shape: f32[2,150528], index: 0, kind: input, shape index: {}]
  %s1 = inlined_call_operand.hbm [shape: f32[1,150528], index: 1, kind: input, shape index: {}]
  %s2 = inlined_call_operand.<no memory space> [shape: f32[1], index: 2, kind: input, shape index: {}]
  %s3 = inlined_call_operand.vmem [shape: f32[2,1], index: 3, kind: output, shape index: {}]
  %s4 = sld [smem:[#allocation0]]
  $region61: #{tpu_custom_call.1} parent=0
    _
  %s6 = ssub.s32 1, %s4
  %s7 = scalar_select 0, %s6, %s4
  %8 = sst [smem:[#allocation3]] %s2
  $region1: #{tpu_custom_call.1} parent=0
    #allocation4 [shape = 'u8[802816]{0}', space=vmem, size = 0xc4000, scoped, tag = 'input window, operand 0']
    #allocation5 [shape = 's32[2]{0}', space=sflag, size = 0x8, scoped, tag = 'scoped memory for tpu_custom_call.1']
    #allocation6 [shape = 'u8[401408]{0}', space=vmem, size = 0x62000, scoped, tag = 'input window, operand 1']
    #allocation7 [shape = 's32[2]{0}', space=sflag, size = 0x8, scoped, tag = 'scoped memory for tpu_custom_call.1']
    %9 = vsyncpa [#allocation5], 0
    %s10 = scalar_lea.sflag [#allocation5], 1
    %11 = vsyncpa %s10, 0
    %12 = vsyncpa [#allocation7], 0
    %s13 = scalar_lea.sflag [#allocation7], 1
    %14 = vsyncpa %s13, 0
    loop: start=0, step=1, limit=5
    $region2: #{tpu_custom_call.1} parent=1 // loop_pre_header
      _
    $region3: #{tpu_custom_call.1} parent=1 // loop_header
      %s16 = sphi 0, %s20
      %p17 = scmp.ge.s32.totalorder %s16, 5
      %s26 = sphi 0, %s28
      %s29 = sphi 0, %s26
      %s30 = sphi 0, %s29
      %s46 = sphi 0, %s30
      %s52 = sphi 0, %s54
      %s55 = sphi 0, %s52
      %s56 = sphi 0, %s55
      %s72 = sphi 0, %s56
      %s76 = sphi 0, %s76
      %s78 = sphi 0, %s76
      %s79 = sphi 0, %s78
      %s93 = sphi 0, %s79
      %s97 = sphi 0, %s97
      %s99 = sphi 0, %s97
      %s100 = sphi 0, %s99
      %s114 = sphi 0, %s100
    $region4: #{tpu_custom_call.1} parent=1 // loop_header_branch
      %19 = sbr.rel (%p17) target = $region8
    $region5: #{tpu_custom_call.1} parent=1 // loop_body
      %s21 = ssub.s32 %s16, 1
      %s22 = ssub.s32 %s16, 2
      %s23 = sadd.s32 %s16, 1
      %s24 = ssub.s32 %s16, %s23
      %p25 = scmp.eq.s32.totalorder %s24, 0
      %s27 = sadd.s32 %s26, 1
      %s28 = scalar_select %p25, %s26, %s27
      %p31 = pneg %p25
      %p32 = scmp.eq.s32.totalorder %s16, 2
      %p33 = por %p31, %p32
      %p34 = scmp.ne.s32.totalorder %s26, %s29
      %p35 = scmp.eq.s32.totalorder %s16, 0
      %p36 = por %p34, %p35
      %p37 = scmp.ne.s32.totalorder %s26, %s29
      %p38 = scmp.eq.s32.totalorder %s21, 2
      %p39 = por %p37, %p38
      %p40 = scmp.ne.s32.totalorder %s29, %s30
      %p41 = scmp.eq.s32.totalorder %s21, 0
      %p42 = por %p40, %p41
      %p43 = scmp.ne.s32.totalorder %s29, %s30
      %p44 = scmp.eq.s32.totalorder %s22, 2
      %p45 = por %p43, %p44
      %p47 = scmp.ne.s32.totalorder %s30, %s46
      %p48 = scmp.eq.s32.totalorder %s22, 0
      %p49 = por %p47, %p48
      %s50 = ssub.s32 %s16, %s23
      %p51 = scmp.eq.s32.totalorder %s50, 0
      %s53 = sadd.s32 %s52, 1
      %s54 = scalar_select %p51, %s52, %s53
      %p57 = pneg %p51
      %p58 = scmp.eq.s32.totalorder %s16, 2
      %p59 = por %p57, %p58
      %p60 = scmp.ne.s32.totalorder %s52, %s55
      %p61 = scmp.eq.s32.totalorder %s16, 0
      %p62 = por %p60, %p61
      %p63 = scmp.ne.s32.totalorder %s52, %s55
      %p64 = scmp.eq.s32.totalorder %s21, 2
      %p65 = por %p63, %p64
      %p66 = scmp.ne.s32.totalorder %s55, %s56
      %p67 = scmp.eq.s32.totalorder %s21, 0
      %p68 = por %p66, %p67
      %p69 = scmp.ne.s32.totalorder %s55, %s56
      %p70 = scmp.eq.s32.totalorder %s22, 2
      %p71 = por %p69, %p70
      %p73 = scmp.ne.s32.totalorder %s56, %s72
      %p74 = scmp.eq.s32.totalorder %s22, 0
      %p75 = por %p73, %p74
      %s77 = sadd.s32 %s76, 1
      %p80 = scmp.eq.s32.totalorder %s16, 2
      %p81 = scmp.ne.s32.totalorder %s76, %s78
      %p82 = scmp.eq.s32.totalorder %s16, 0
      %p83 = por %p81, %p82
      %p84 = scmp.ne.s32.totalorder %s76, %s78
      %p85 = scmp.eq.s32.totalorder %s21, 2
      %p86 = por %p84, %p85
      %p87 = scmp.ne.s32.totalorder %s78, %s79
      %p88 = scmp.eq.s32.totalorder %s21, 0
      %p89 = por %p87, %p88
      %p90 = scmp.ne.s32.totalorder %s78, %s79
      %p91 = scmp.eq.s32.totalorder %s22, 2
      %p92 = por %p90, %p91
      %p94 = scmp.ne.s32.totalorder %s79, %s93
      %p95 = scmp.eq.s32.totalorder %s22, 0
      %p96 = por %p94, %p95
      %s98 = sadd.s32 %s97, 1
      %p101 = scmp.eq.s32.totalorder %s16, 2
      %p102 = scmp.ne.s32.totalorder %s97, %s99
      %p103 = scmp.eq.s32.totalorder %s16, 0
      %p104 = por %p102, %p103
      %p105 = scmp.ne.s32.totalorder %s97, %s99
      %p106 = scmp.eq.s32.totalorder %s21, 2
      %p107 = por %p105, %p106
      %p108 = scmp.ne.s32.totalorder %s99, %s100
      %p109 = scmp.eq.s32.totalorder %s21, 0
      %p110 = por %p108, %p109
      %p111 = scmp.ne.s32.totalorder %s99, %s100
      %p112 = scmp.eq.s32.totalorder %s22, 2
      %p113 = por %p111, %p112
      %p115 = scmp.ne.s32.totalorder %s100, %s114
      %p116 = scmp.eq.s32.totalorder %s22, 0
      %p117 = por %p115, %p116
      %p118 = scmp.le.s32.totalorder 1, %s16
      %p119 = scmp.lt.s32.totalorder %s16, 4
      %p120 = pnand %p118, %p119
      %p121 = pneg %p120
      // Predicated region
      $region9: #{tpu_custom_call.1} parent=5 // pred_check
        _
      $region10: #{tpu_custom_call.1} parent=5 // pred_check_branch
        %123 = sbr.rel (%p120) target = $region12
      $region11: #{tpu_custom_call.1} parent=5 // pred_region
        %s124 = ssub.s32 %s16, 1
        // Predicated region
        $region13: #{tpu_custom_call.1} parent=11 // pred_check
          %p125 = pneg %p89
        $region14: #{tpu_custom_call.1} parent=11 // pred_check_branch
          %127 = sbr.rel (%p125) target = $region16
        $region15: #{tpu_custom_call.1} parent=11 // pred_region
          _
        $region16: #{tpu_custom_call.1} parent=11 // pred_fallthru
          _
      $region12: #{tpu_custom_call.1} parent=5 // pred_fallthru
        _
      %p128 = scmp.lt.s32.totalorder %s16, 3
      // Predicated region
      $region17: #{tpu_custom_call.1} parent=5 // pred_check
        %p129 = pneg %p128
      $region18: #{tpu_custom_call.1} parent=5 // pred_check_branch
        %131 = sbr.rel (%p129) target = $region20
      $region19: #{tpu_custom_call.1} parent=5 // pred_region
        // Predicated region
        $region21: #{tpu_custom_call.1} parent=19 // pred_check
          %p132 = pneg %p36
        $region22: #{tpu_custom_call.1} parent=19 // pred_check_branch
          %134 = sbr.rel (%p132) target = $region24
        $region23: #{tpu_custom_call.1} parent=19 // pred_region
          %s135 = sand.u32 %s26, 1
          %s136 = scalar_lea.sflag [#allocation5], %s135
          %s137 = sand.u32 %s26, 1
          %s138 = smul.addr %s137, 784
          %s139 = scalar_lea.vmem [#allocation4], %s138
          %s140 = smul.u32 392, %s16
          %s142 = ssub.s32 12544, 12544
          %143 = vsyncadd %s136, %s142
          %s144 = smul.addr %s140, 32
          %s145 = scalar_lea.hbm %s0, %s144
          %s147 = sshll.u32 %s139, 4
          %s148 = int_to_ptr.vmem [resolvable:$true] %s147
          %150 = dma.hbm_to_vmem [thread:$0]  %s145, 12544, %s148, %s136
        $region24: #{tpu_custom_call.1} parent=19 // pred_fallthru
          _
        // Predicated region
        $region25: #{tpu_custom_call.1} parent=19 // pred_check
          %p151 = pneg %p62
        $region26: #{tpu_custom_call.1} parent=19 // pred_check_branch
          %153 = sbr.rel (%p151) target = $region28
        $region27: #{tpu_custom_call.1} parent=19 // pred_region
          %s154 = sand.u32 %s52, 1
          %s155 = scalar_lea.sflag [#allocation7], %s154
          %s156 = sand.u32 %s52, 1
          %s157 = smul.addr %s156, 392
          %s158 = scalar_lea.vmem [#allocation6], %s157
          %s159 = smul.u32 392, %s16
          %s161 = ssub.s32 6272, 6272
          %162 = vsyncadd %s155, %s161
          %s163 = smul.addr %s159, 16
          %s164 = scalar_lea.hbm %s1, %s163
          %s166 = sshll.u32 %s158, 4
          %s167 = int_to_ptr.vmem [resolvable:$true] %s166
          %169 = dma.hbm_to_vmem [thread:$0]  %s164, 6272, %s167, %s155
        $region28: #{tpu_custom_call.1} parent=19 // pred_fallthru
          _
      $region20: #{tpu_custom_call.1} parent=5 // pred_fallthru
        _
      %p170 = scmp.le.s32.totalorder 1, %s16
      %p171 = scmp.lt.s32.totalorder %s16, 4
      %p172 = pnand %p170, %p171
      %p173 = pneg %p172
      // Predicated region
      $region29: #{tpu_custom_call.1} parent=5 // pred_check
        _
      $region30: #{tpu_custom_call.1} parent=5 // pred_check_branch
        %175 = sbr.rel (%p172) target = $region32
      $region31: #{tpu_custom_call.1} parent=5 // pred_region
        %s176 = ssub.s32 %s16, 1
        %s177 = sand.u32 %s29, 1
        %s178 = scalar_lea.sflag [#allocation5], %s177
        %s179 = sand.u32 %s29, 1
        %s180 = smul.addr %s179, 784
        %s181 = scalar_lea.vmem [#allocation4], %s180
        // Predicated region
        $region33: #{tpu_custom_call.1} parent=31 // pred_check
          %p182 = pneg %p42
        $region34: #{tpu_custom_call.1} parent=31 // pred_check_branch
          %184 = sbr.rel (%p182) target = $region36
        $region35: #{tpu_custom_call.1} parent=31 // pred_region
          %185 = dma.done %s178, 12544
        $region36: #{tpu_custom_call.1} parent=31 // pred_fallthru
          _
        %s186 = sand.u32 %s55, 1
        %s187 = scalar_lea.sflag [#allocation7], %s186
        %s188 = sand.u32 %s55, 1
        %s189 = smul.addr %s188, 392
        %s190 = scalar_lea.vmem [#allocation6], %s189
        // Predicated region
        $region37: #{tpu_custom_call.1} parent=31 // pred_check
          %p191 = pneg %p68
        $region38: #{tpu_custom_call.1} parent=31 // pred_check_branch
          %193 = sbr.rel (%p191) target = $region40
        $region39: #{tpu_custom_call.1} parent=31 // pred_region
          %194 = dma.done %s187, 6272
        $region40: #{tpu_custom_call.1} parent=31 // pred_fallthru
          _
        %s195 = sand.u32 %s29, 1
        %s196 = scalar_lea.sflag [#allocation5], %s195
        %s197 = sand.u32 %s29, 1
        %s198 = smul.addr %s197, 784
        %s199 = scalar_lea.vmem [#allocation4], %s198
        %p200 = pneg %p42
        %p201 = pneg %p39
        %s202 = sand.u32 %s55, 1
        %s203 = scalar_lea.sflag [#allocation7], %s202
        %s204 = sand.u32 %s55, 1
        %s205 = smul.addr %s204, 392
        %s206 = scalar_lea.vmem [#allocation6], %s205
        %p207 = pneg %p68
        %p208 = pneg %p65
        %p209 = pneg %p89
        %p210 = pneg %p86
        %p211 = pneg %p110
        %p212 = pneg %p107
        %s213 = smul.u32 392, %s21
        %s214 = smul.u32 392, %s21
        %p215 = scmp.eq.s32.totalorder %s21, 0
        // Predicated region
        $region41: #{tpu_custom_call.1} parent=31 // pred_check
          %p216 = pneg %p215
        $region42: #{tpu_custom_call.1} parent=31 // pred_check_branch
          %218 = sbr.rel (%p216) target = $region44
        $region43: #{tpu_custom_call.1} parent=31 // pred_region
          %vm219 = vcmask 1024
          %220 = vst.msk [vmem:[#allocation2] sm:$0x3] %vm219, 0.0
        $region44: #{tpu_custom_call.1} parent=31 // pred_fallthru
          _
        %v221 = vld [vmem:[#allocation2] sm:$0x3]
        %v222 = vld [vmem:[%s181] sm:$0xff]
        %v223 = vld [vmem:[%s181 + $0x8] sm:$0xff]
        %v224 = vld [vmem:[%s181 + $0x10] sm:$0xff]
        %v225 = vld [vmem:[%s181 + $0x18] sm:$0xff]
        %v226 = vld [vmem:[%s181 + $0x20] sm:$0xff]
        %v227 = vld [vmem:[%s181 + $0x28] sm:$0xff]
        %v228 = vld [vmem:[%s181 + $0x30] sm:$0xff]
        %v229 = vld [vmem:[%s181 + $0x38] sm:$0xff]
        %v230 = vld [vmem:[%s181 + $0x40] sm:$0xff]
        %v231 = vld [vmem:[%s181 + $0x48] sm:$0xff]
        %v232 = vld [vmem:[%s181 + $0x50] sm:$0xff]
        %v233 = vld [vmem:[%s181 + $0x58] sm:$0xff]
        %v234 = vld [vmem:[%s181 + $0x60] sm:$0xff]
        %v235 = vld [vmem:[%s181 + $0x68] sm:$0xff]
        %v236 = vld [vmem:[%s181 + $0x70] sm:$0xff]
        %v237 = vld [vmem:[%s181 + $0x78] sm:$0xff]
        %v238 = vld [vmem:[%s181 + $0x80] sm:$0xff]
        %v239 = vld [vmem:[%s181 + $0x88] sm:$0xff]
        %v240 = vld [vmem:[%s181 + $0x90] sm:$0xff]
        %v241 = vld [vmem:[%s181 + $0x98] sm:$0xff]
        %v242 = vld [vmem:[%s181 + $0xa0] sm:$0xff]
        %v243 = vld [vmem:[%s181 + $0xa8] sm:$0xff]
        %v244 = vld [vmem:[%s181 + $0xb0] sm:$0xff]
        %v245 = vld [vmem:[%s181 + $0xb8] sm:$0xff]
        %v246 = vld [vmem:[%s181 + $0xc0] sm:$0xff]
        %v247 = vld [vmem:[%s181 + $0xc8] sm:$0xff]
        %v248 = vld [vmem:[%s181 + $0xd0] sm:$0xff]
        %v249 = vld [vmem:[%s181 + $0xd8] sm:$0xff]
        %v250 = vld [vmem:[%s181 + $0xe0] sm:$0xff]
        %v251 = vld [vmem:[%s181 + $0xe8] sm:$0xff]
        %v252 = vld [vmem:[%s181 + $0xf0] sm:$0xff]
        %v253 = vld [vmem:[%s181 + $0xf8] sm:$0xff]
        %v254 = vld [vmem:[%s181 + $0x100] sm:$0xff]
        %v255 = vld [vmem:[%s181 + $0x108] sm:$0xff]
        %v256 = vld [vmem:[%s181 + $0x110] sm:$0xff]
        %v257 = vld [vmem:[%s181 + $0x118] sm:$0xff]
        %v258 = vld [vmem:[%s181 + $0x120] sm:$0xff]
        %v259 = vld [vmem:[%s181 + $0x128] sm:$0xff]
        %v260 = vld [vmem:[%s181 + $0x130] sm:$0xff]
        %v261 = vld [vmem:[%s181 + $0x138] sm:$0xff]
        %v262 = vld [vmem:[%s181 + $0x140] sm:$0xff]
        %v263 = vld [vmem:[%s181 + $0x148] sm:$0xff]
        %v264 = vld [vmem:[%s181 + $0x150] sm:$0xff]
        %v265 = vld [vmem:[%s181 + $0x158] sm:$0xff]
        %v266 = vld [vmem:[%s181 + $0x160] sm:$0xff]
        %v267 = vld [vmem:[%s181 + $0x168] sm:$0xff]
        %v268 = vld [vmem:[%s181 + $0x170] sm:$0xff]
        %v269 = vld [vmem:[%s181 + $0x178] sm:$0xff]
        %v270 = vld [vmem:[%s181 + $0x180] sm:$0xff]
        %v271 = vld [vmem:[%s181 + $0x188] sm:$0xff]
        %v272 = vld [vmem:[%s181 + $0x190] sm:$0xff]
        %v273 = vld [vmem:[%s181 + $0x198] sm:$0xff]
        %v274 = vld [vmem:[%s181 + $0x1a0] sm:$0xff]
        %v275 = vld [vmem:[%s181 + $0x1a8] sm:$0xff]
        %v276 = vld [vmem:[%s181 + $0x1b0] sm:$0xff]
        %v277 = vld [vmem:[%s181 + $0x1b8] sm:$0xff]
        %v278 = vld [vmem:[%s181 + $0x1c0] sm:$0xff]
        %v279 = vld [vmem:[%s181 + $0x1c8] sm:$0xff]
        %v280 = vld [vmem:[%s181 + $0x1d0] sm:$0xff]
        %v281 = vld [vmem:[%s181 + $0x1d8] sm:$0xff]
        %v282 = vld [vmem:[%s181 + $0x1e0] sm:$0xff]
        %v283 = vld [vmem:[%s181 + $0x1e8] sm:$0xff]
        %v284 = vld [vmem:[%s181 + $0x1f0] sm:$0xff]
        %v285 = vld [vmem:[%s181 + $0x1f8] sm:$0xff]
        %v286 = vld [vmem:[%s181 + $0x200] sm:$0xff]
        %v287 = vld [vmem:[%s181 + $0x208] sm:$0xff]
        %v288 = vld [vmem:[%s181 + $0x210] sm:$0xff]
        %v289 = vld [vmem:[%s181 + $0x218] sm:$0xff]
        %v290 = vld [vmem:[%s181 + $0x220] sm:$0xff]
        %v291 = vld [vmem:[%s181 + $0x228] sm:$0xff]
        %v292 = vld [vmem:[%s181 + $0x230] sm:$0xff]
        %v293 = vld [vmem:[%s181 + $0x238] sm:$0xff]
        %v294 = vld [vmem:[%s181 + $0x240] sm:$0xff]
        %v295 = vld [vmem:[%s181 + $0x248] sm:$0xff]
        %v296 = vld [vmem:[%s181 + $0x250] sm:$0xff]
        %v297 = vld [vmem:[%s181 + $0x258] sm:$0xff]
        %v298 = vld [vmem:[%s181 + $0x260] sm:$0xff]
        %v299 = vld [vmem:[%s181 + $0x268] sm:$0xff]
        %v300 = vld [vmem:[%s181 + $0x270] sm:$0xff]
        %v301 = vld [vmem:[%s181 + $0x278] sm:$0xff]
        %v302 = vld [vmem:[%s181 + $0x280] sm:$0xff]
        %v303 = vld [vmem:[%s181 + $0x288] sm:$0xff]
        %v304 = vld [vmem:[%s181 + $0x290] sm:$0xff]
        %v305 = vld [vmem:[%s181 + $0x298] sm:$0xff]
        %v306 = vld [vmem:[%s181 + $0x2a0] sm:$0xff]
        %v307 = vld [vmem:[%s181 + $0x2a8] sm:$0xff]
        %v308 = vld [vmem:[%s181 + $0x2b0] sm:$0xff]
        %v309 = vld [vmem:[%s181 + $0x2b8] sm:$0xff]
        %v310 = vld [vmem:[%s181 + $0x2c0] sm:$0xff]
        %v311 = vld [vmem:[%s181 + $0x2c8] sm:$0xff]
        %v312 = vld [vmem:[%s181 + $0x2d0] sm:$0xff]
        %v313 = vld [vmem:[%s181 + $0x2d8] sm:$0xff]
        %v314 = vld [vmem:[%s181 + $0x2e0] sm:$0xff]
        %v315 = vld [vmem:[%s181 + $0x2e8] sm:$0xff]
        %v316 = vld [vmem:[%s181 + $0x2f0] sm:$0xff]
        %v317 = vld [vmem:[%s181 + $0x2f8] sm:$0xff]
        %v318 = vld [vmem:[%s181 + $0x300] sm:$0xff]
        %v319 = vld [vmem:[%s181 + $0x308] sm:$0xff]
        %v320 = vld [vmem:[%s190] sm:$0xff]
        %v321 = vld [vmem:[%s190 + $0x8] sm:$0xff]
        %v322 = vld [vmem:[%s190 + $0x10] sm:$0xff]
        %v323 = vld [vmem:[%s190 + $0x18] sm:$0xff]
        %v324 = vld [vmem:[%s190 + $0x20] sm:$0xff]
        %v325 = vld [vmem:[%s190 + $0x28] sm:$0xff]
        %v326 = vld [vmem:[%s190 + $0x30] sm:$0xff]
        %v327 = vld [vmem:[%s190 + $0x38] sm:$0xff]
        %v328 = vld [vmem:[%s190 + $0x40] sm:$0xff]
        %v329 = vld [vmem:[%s190 + $0x48] sm:$0xff]
        %v330 = vld [vmem:[%s190 + $0x50] sm:$0xff]
        %v331 = vld [vmem:[%s190 + $0x58] sm:$0xff]
        %v332 = vld [vmem:[%s190 + $0x60] sm:$0xff]
        %v333 = vld [vmem:[%s190 + $0x68] sm:$0xff]
        %v334 = vld [vmem:[%s190 + $0x70] sm:$0xff]
        %v335 = vld [vmem:[%s190 + $0x78] sm:$0xff]
        %v336 = vld [vmem:[%s190 + $0x80] sm:$0xff]
        %v337 = vld [vmem:[%s190 + $0x88] sm:$0xff]
        %v338 = vld [vmem:[%s190 + $0x90] sm:$0xff]
        %v339 = vld [vmem:[%s190 + $0x98] sm:$0xff]
        %v340 = vld [vmem:[%s190 + $0xa0] sm:$0xff]
        %v341 = vld [vmem:[%s190 + $0xa8] sm:$0xff]
        %v342 = vld [vmem:[%s190 + $0xb0] sm:$0xff]
        %v343 = vld [vmem:[%s190 + $0xb8] sm:$0xff]
        %v344 = vld [vmem:[%s190 + $0xc0] sm:$0xff]
        %v345 = vld [vmem:[%s190 + $0xc8] sm:$0xff]
        %v346 = vld [vmem:[%s190 + $0xd0] sm:$0xff]
        %v347 = vld [vmem:[%s190 + $0xd8] sm:$0xff]
        %v348 = vld [vmem:[%s190 + $0xe0] sm:$0xff]
        %v349 = vld [vmem:[%s190 + $0xe8] sm:$0xff]
        %v350 = vld [vmem:[%s190 + $0xf0] sm:$0xff]
        %v351 = vld [vmem:[%s190 + $0xf8] sm:$0xff]
        %v352 = vld [vmem:[%s190 + $0x100] sm:$0xff]
        %v353 = vld [vmem:[%s190 + $0x108] sm:$0xff]
        %v354 = vld [vmem:[%s190 + $0x110] sm:$0xff]
        %v355 = vld [vmem:[%s190 + $0x118] sm:$0xff]
        %v356 = vld [vmem:[%s190 + $0x120] sm:$0xff]
        %v357 = vld [vmem:[%s190 + $0x128] sm:$0xff]
        %v358 = vld [vmem:[%s190 + $0x130] sm:$0xff]
        %v359 = vld [vmem:[%s190 + $0x138] sm:$0xff]
        %v360 = vld [vmem:[%s190 + $0x140] sm:$0xff]
        %v361 = vld [vmem:[%s190 + $0x148] sm:$0xff]
        %v362 = vld [vmem:[%s190 + $0x150] sm:$0xff]
        %v363 = vld [vmem:[%s190 + $0x158] sm:$0xff]
        %v364 = vld [vmem:[%s190 + $0x160] sm:$0xff]
        %v365 = vld [vmem:[%s190 + $0x168] sm:$0xff]
        %v366 = vld [vmem:[%s190 + $0x170] sm:$0xff]
        %v367 = vld [vmem:[%s190 + $0x178] sm:$0xff]
        %v368 = vld [vmem:[%s190 + $0x180] sm:$0xff]
        %v418 = vlaneseq
        %v419 = vshrl.u32 %v418, 7
        %v420 = vsub.s32 0, %v419
        %v421 = vrot.slane %v320, %v420
        %v422 = vlaneseq
        %v423 = vshrl.u32 %v422, 7
        %v424 = vsub.s32 1, %v423
        %v425 = vrot.slane %v320, %v424
        %v426 = vlaneseq
        %v427 = vshrl.u32 %v426, 7
        %v428 = vsub.s32 2, %v427
        %v429 = vrot.slane %v320, %v428
        %v430 = vlaneseq
        %v431 = vshrl.u32 %v430, 7
        %v432 = vsub.s32 3, %v431
        %v433 = vrot.slane %v320, %v432
        %v434 = vlaneseq
        %v435 = vshrl.u32 %v434, 7
        %v436 = vsub.s32 4, %v435
        %v437 = vrot.slane %v320, %v436
        %v438 = vlaneseq
        %v439 = vshrl.u32 %v438, 7
        %v440 = vsub.s32 5, %v439
        %v441 = vrot.slane %v320, %v440
        %v442 = vlaneseq
        %v443 = vshrl.u32 %v442, 7
        %v444 = vsub.s32 6, %v443
        %v445 = vrot.slane %v320, %v444
        %v446 = vlaneseq
        %v447 = vshrl.u32 %v446, 7
        %v448 = vsub.s32 7, %v447
        %v449 = vrot.slane %v320, %v448
        %v450 = vlaneseq
        %v451 = vshrl.u32 %v450, 7
        %v452 = vsub.s32 0, %v451
        %v453 = vrot.slane %v321, %v452
        %v454 = vlaneseq
        %v455 = vshrl.u32 %v454, 7
        %v456 = vsub.s32 1, %v455
        %v457 = vrot.slane %v321, %v456
        %v458 = vlaneseq
        %v459 = vshrl.u32 %v458, 7
        %v460 = vsub.s32 2, %v459
        %v461 = vrot.slane %v321, %v460
        %v462 = vlaneseq
        %v463 = vshrl.u32 %v462, 7
        %v464 = vsub.s32 3, %v463
        %v465 = vrot.slane %v321, %v464
        %v466 = vlaneseq
        %v467 = vshrl.u32 %v466, 7
        %v468 = vsub.s32 4, %v467
        %v469 = vrot.slane %v321, %v468
        %v470 = vlaneseq
        %v471 = vshrl.u32 %v470, 7
        %v472 = vsub.s32 5, %v471
        %v473 = vrot.slane %v321, %v472
        %v474 = vlaneseq
        %v475 = vshrl.u32 %v474, 7
        %v476 = vsub.s32 6, %v475
        %v477 = vrot.slane %v321, %v476
        %v478 = vlaneseq
        %v479 = vshrl.u32 %v478, 7
        %v480 = vsub.s32 7, %v479
        %v481 = vrot.slane %v321, %v480
        %v482 = vlaneseq
        %v483 = vshrl.u32 %v482, 7
        %v484 = vsub.s32 0, %v483
        %v485 = vrot.slane %v322, %v484
        %v486 = vlaneseq
        %v487 = vshrl.u32 %v486, 7
        %v488 = vsub.s32 1, %v487
        %v489 = vrot.slane %v322, %v488
        %v490 = vlaneseq
        %v491 = vshrl.u32 %v490, 7
        %v492 = vsub.s32 2, %v491
        %v493 = vrot.slane %v322, %v492
        %v494 = vlaneseq
        %v495 = vshrl.u32 %v494, 7
        %v496 = vsub.s32 3, %v495
        %v497 = vrot.slane %v322, %v496
        %v498 = vlaneseq
        %v499 = vshrl.u32 %v498, 7
        %v500 = vsub.s32 4, %v499
        %v501 = vrot.slane %v322, %v500
        %v502 = vlaneseq
        %v503 = vshrl.u32 %v502, 7
        %v504 = vsub.s32 5, %v503
        %v505 = vrot.slane %v322, %v504
        %v506 = vlaneseq
        %v507 = vshrl.u32 %v506, 7
        %v508 = vsub.s32 6, %v507
        %v509 = vrot.slane %v322, %v508
        %v510 = vlaneseq
        %v511 = vshrl.u32 %v510, 7
        %v512 = vsub.s32 7, %v511
        %v513 = vrot.slane %v322, %v512
        %v514 = vlaneseq
        %v515 = vshrl.u32 %v514, 7
        %v516 = vsub.s32 0, %v515
        %v517 = vrot.slane %v323, %v516
        %v518 = vlaneseq
        %v519 = vshrl.u32 %v518, 7
        %v520 = vsub.s32 1, %v519
        %v521 = vrot.slane %v323, %v520
        %v522 = vlaneseq
        %v523 = vshrl.u32 %v522, 7
        %v524 = vsub.s32 2, %v523
        %v525 = vrot.slane %v323, %v524
        %v526 = vlaneseq
        %v527 = vshrl.u32 %v526, 7
        %v528 = vsub.s32 3, %v527
        %v529 = vrot.slane %v323, %v528
        %v530 = vlaneseq
        %v531 = vshrl.u32 %v530, 7
        %v532 = vsub.s32 4, %v531
        %v533 = vrot.slane %v323, %v532
        %v534 = vlaneseq
        %v535 = vshrl.u32 %v534, 7
        %v536 = vsub.s32 5, %v535
        %v537 = vrot.slane %v323, %v536
        %v538 = vlaneseq
        %v539 = vshrl.u32 %v538, 7
        %v540 = vsub.s32 6, %v539
        %v541 = vrot.slane %v323, %v540
        %v542 = vlaneseq
        %v543 = vshrl.u32 %v542, 7
        %v544 = vsub.s32 7, %v543
        %v545 = vrot.slane %v323, %v544
        %v546 = vlaneseq
        %v547 = vshrl.u32 %v546, 7
        %v548 = vsub.s32 0, %v547
        %v549 = vrot.slane %v324, %v548
        %v550 = vlaneseq
        %v551 = vshrl.u32 %v550, 7
        %v552 = vsub.s32 1, %v551
        %v553 = vrot.slane %v324, %v552
        %v554 = vlaneseq
        %v555 = vshrl.u32 %v554, 7
        %v556 = vsub.s32 2, %v555
        %v557 = vrot.slane %v324, %v556
        %v558 = vlaneseq
        %v559 = vshrl.u32 %v558, 7
        %v560 = vsub.s32 3, %v559
        %v561 = vrot.slane %v324, %v560
        %v562 = vlaneseq
        %v563 = vshrl.u32 %v562, 7
        %v564 = vsub.s32 4, %v563
        %v565 = vrot.slane %v324, %v564
        %v566 = vlaneseq
        %v567 = vshrl.u32 %v566, 7
        %v568 = vsub.s32 5, %v567
        %v569 = vrot.slane %v324, %v568
        %v570 = vlaneseq
        %v571 = vshrl.u32 %v570, 7
        %v572 = vsub.s32 6, %v571
        %v573 = vrot.slane %v324, %v572
        %v574 = vlaneseq
        %v575 = vshrl.u32 %v574, 7
        %v576 = vsub.s32 7, %v575
        %v577 = vrot.slane %v324, %v576
        %v578 = vlaneseq
        %v579 = vshrl.u32 %v578, 7
        %v580 = vsub.s32 0, %v579
        %v581 = vrot.slane %v325, %v580
        %v582 = vlaneseq
        %v583 = vshrl.u32 %v582, 7
        %v584 = vsub.s32 1, %v583
        %v585 = vrot.slane %v325, %v584
        %v586 = vlaneseq
        %v587 = vshrl.u32 %v586, 7
        %v588 = vsub.s32 2, %v587
        %v589 = vrot.slane %v325, %v588
        %v590 = vlaneseq
        %v591 = vshrl.u32 %v590, 7
        %v592 = vsub.s32 3, %v591
        %v593 = vrot.slane %v325, %v592
        %v594 = vlaneseq
        %v595 = vshrl.u32 %v594, 7
        %v596 = vsub.s32 4, %v595
        %v597 = vrot.slane %v325, %v596
        %v598 = vlaneseq
        %v599 = vshrl.u32 %v598, 7
        %v600 = vsub.s32 5, %v599
        %v601 = vrot.slane %v325, %v600
        %v602 = vlaneseq
        %v603 = vshrl.u32 %v602, 7
        %v604 = vsub.s32 6, %v603
        %v605 = vrot.slane %v325, %v604
        %v606 = vlaneseq
        %v607 = vshrl.u32 %v606, 7
        %v608 = vsub.s32 7, %v607
        %v609 = vrot.slane %v325, %v608
        %v610 = vlaneseq
        %v611 = vshrl.u32 %v610, 7
        %v612 = vsub.s32 0, %v611
        %v613 = vrot.slane %v326, %v612
        %v614 = vlaneseq
        %v615 = vshrl.u32 %v614, 7
        %v616 = vsub.s32 1, %v615
        %v617 = vrot.slane %v326, %v616
        %v618 = vlaneseq
        %v619 = vshrl.u32 %v618, 7
        %v620 = vsub.s32 2, %v619
        %v621 = vrot.slane %v326, %v620
        %v622 = vlaneseq
        %v623 = vshrl.u32 %v622, 7
        %v624 = vsub.s32 3, %v623
        %v625 = vrot.slane %v326, %v624
        %v626 = vlaneseq
        %v627 = vshrl.u32 %v626, 7
        %v628 = vsub.s32 4, %v627
        %v629 = vrot.slane %v326, %v628
        %v630 = vlaneseq
        %v631 = vshrl.u32 %v630, 7
        %v632 = vsub.s32 5, %v631
        %v633 = vrot.slane %v326, %v632
        %v634 = vlaneseq
        %v635 = vshrl.u32 %v634, 7
        %v636 = vsub.s32 6, %v635
        %v637 = vrot.slane %v326, %v636
        %v638 = vlaneseq
        %v639 = vshrl.u32 %v638, 7
        %v640 = vsub.s32 7, %v639
        %v641 = vrot.slane %v326, %v640
        %v642 = vlaneseq
        %v643 = vshrl.u32 %v642, 7
        %v644 = vsub.s32 0, %v643
        %v645 = vrot.slane %v327, %v644
        %v646 = vlaneseq
        %v647 = vshrl.u32 %v646, 7
        %v648 = vsub.s32 1, %v647
        %v649 = vrot.slane %v327, %v648
        %v650 = vlaneseq
        %v651 = vshrl.u32 %v650, 7
        %v652 = vsub.s32 2, %v651
        %v653 = vrot.slane %v327, %v652
        %v654 = vlaneseq
        %v655 = vshrl.u32 %v654, 7
        %v656 = vsub.s32 3, %v655
        %v657 = vrot.slane %v327, %v656
        %v658 = vlaneseq
        %v659 = vshrl.u32 %v658, 7
        %v660 = vsub.s32 4, %v659
        %v661 = vrot.slane %v327, %v660
        %v662 = vlaneseq
        %v663 = vshrl.u32 %v662, 7
        %v664 = vsub.s32 5, %v663
        %v665 = vrot.slane %v327, %v664
        %v666 = vlaneseq
        %v667 = vshrl.u32 %v666, 7
        %v668 = vsub.s32 6, %v667
        %v669 = vrot.slane %v327, %v668
        %v670 = vlaneseq
        %v671 = vshrl.u32 %v670, 7
        %v672 = vsub.s32 7, %v671
        %v673 = vrot.slane %v327, %v672
        %v674 = vlaneseq
        %v675 = vshrl.u32 %v674, 7
        %v676 = vsub.s32 0, %v675
        %v677 = vrot.slane %v328, %v676
        %v678 = vlaneseq
        %v679 = vshrl.u32 %v678, 7
        %v680 = vsub.s32 1, %v679
        %v681 = vrot.slane %v328, %v680
        %v682 = vlaneseq
        %v683 = vshrl.u32 %v682, 7
        %v684 = vsub.s32 2, %v683
        %v685 = vrot.slane %v328, %v684
        %v686 = vlaneseq
        %v687 = vshrl.u32 %v686, 7
        %v688 = vsub.s32 3, %v687
        %v689 = vrot.slane %v328, %v688
        %v690 = vlaneseq
        %v691 = vshrl.u32 %v690, 7
        %v692 = vsub.s32 4, %v691
        %v693 = vrot.slane %v328, %v692
        %v694 = vlaneseq
        %v695 = vshrl.u32 %v694, 7
        %v696 = vsub.s32 5, %v695
        %v697 = vrot.slane %v328, %v696
        %v698 = vlaneseq
        %v699 = vshrl.u32 %v698, 7
        %v700 = vsub.s32 6, %v699
        %v701 = vrot.slane %v328, %v700
        %v702 = vlaneseq
        %v703 = vshrl.u32 %v702, 7
        %v704 = vsub.s32 7, %v703
        %v705 = vrot.slane %v328, %v704
        %v706 = vlaneseq
        %v707 = vshrl.u32 %v706, 7
        %v708 = vsub.s32 0, %v707
        %v709 = vrot.slane %v329, %v708
        %v710 = vlaneseq
        %v711 = vshrl.u32 %v710, 7
        %v712 = vsub.s32 1, %v711
        %v713 = vrot.slane %v329, %v712
        %v714 = vlaneseq
        %v715 = vshrl.u32 %v714, 7
        %v716 = vsub.s32 2, %v715
        %v717 = vrot.slane %v329, %v716
        %v718 = vlaneseq
        %v719 = vshrl.u32 %v718, 7
        %v720 = vsub.s32 3, %v719
        %v721 = vrot.slane %v329, %v720
        %v722 = vlaneseq
        %v723 = vshrl.u32 %v722, 7
        %v724 = vsub.s32 4, %v723
        %v725 = vrot.slane %v329, %v724
        %v726 = vlaneseq
        %v727 = vshrl.u32 %v726, 7
        %v728 = vsub.s32 5, %v727
        %v729 = vrot.slane %v329, %v728
        %v730 = vlaneseq
        %v731 = vshrl.u32 %v730, 7
        %v732 = vsub.s32 6, %v731
        %v733 = vrot.slane %v329, %v732
        %v734 = vlaneseq
        %v735 = vshrl.u32 %v734, 7
        %v736 = vsub.s32 7, %v735
        %v737 = vrot.slane %v329, %v736
        %v738 = vlaneseq
        %v739 = vshrl.u32 %v738, 7
        %v740 = vsub.s32 0, %v739
        %v741 = vrot.slane %v330, %v740
        %v742 = vlaneseq
        %v743 = vshrl.u32 %v742, 7
        %v744 = vsub.s32 1, %v743
        %v745 = vrot.slane %v330, %v744
        %v746 = vlaneseq
        %v747 = vshrl.u32 %v746, 7
        %v748 = vsub.s32 2, %v747
        %v749 = vrot.slane %v330, %v748
        %v750 = vlaneseq
        %v751 = vshrl.u32 %v750, 7
        %v752 = vsub.s32 3, %v751
        %v753 = vrot.slane %v330, %v752
        %v754 = vlaneseq
        %v755 = vshrl.u32 %v754, 7
        %v756 = vsub.s32 4, %v755
        %v757 = vrot.slane %v330, %v756
        %v758 = vlaneseq
        %v759 = vshrl.u32 %v758, 7
        %v760 = vsub.s32 5, %v759
        %v761 = vrot.slane %v330, %v760
        %v762 = vlaneseq
        %v763 = vshrl.u32 %v762, 7
        %v764 = vsub.s32 6, %v763
        %v765 = vrot.slane %v330, %v764
        %v766 = vlaneseq
        %v767 = vshrl.u32 %v766, 7
        %v768 = vsub.s32 7, %v767
        %v769 = vrot.slane %v330, %v768
        %v770 = vlaneseq
        %v771 = vshrl.u32 %v770, 7
        %v772 = vsub.s32 0, %v771
        %v773 = vrot.slane %v331, %v772
        %v774 = vlaneseq
        %v775 = vshrl.u32 %v774, 7
        %v776 = vsub.s32 1, %v775
        %v777 = vrot.slane %v331, %v776
        %v778 = vlaneseq
        %v779 = vshrl.u32 %v778, 7
        %v780 = vsub.s32 2, %v779
        %v781 = vrot.slane %v331, %v780
        %v782 = vlaneseq
        %v783 = vshrl.u32 %v782, 7
        %v784 = vsub.s32 3, %v783
        %v785 = vrot.slane %v331, %v784
        %v786 = vlaneseq
        %v787 = vshrl.u32 %v786, 7
        %v788 = vsub.s32 4, %v787
        %v789 = vrot.slane %v331, %v788
        %v790 = vlaneseq
        %v791 = vshrl.u32 %v790, 7
        %v792 = vsub.s32 5, %v791
        %v793 = vrot.slane %v331, %v792
        %v794 = vlaneseq
        %v795 = vshrl.u32 %v794, 7
        %v796 = vsub.s32 6, %v795
        %v797 = vrot.slane %v331, %v796
        %v798 = vlaneseq
        %v799 = vshrl.u32 %v798, 7
        %v800 = vsub.s32 7, %v799
        %v801 = vrot.slane %v331, %v800
        %v802 = vlaneseq
        %v803 = vshrl.u32 %v802, 7
        %v804 = vsub.s32 0, %v803
        %v805 = vrot.slane %v332, %v804
        %v806 = vlaneseq
        %v807 = vshrl.u32 %v806, 7
        %v808 = vsub.s32 1, %v807
        %v809 = vrot.slane %v332, %v808
        %v810 = vlaneseq
        %v811 = vshrl.u32 %v810, 7
        %v812 = vsub.s32 2, %v811
        %v813 = vrot.slane %v332, %v812
        %v814 = vlaneseq
        %v815 = vshrl.u32 %v814, 7
        %v816 = vsub.s32 3, %v815
        %v817 = vrot.slane %v332, %v816
        %v818 = vlaneseq
        %v819 = vshrl.u32 %v818, 7
        %v820 = vsub.s32 4, %v819
        %v821 = vrot.slane %v332, %v820
        %v822 = vlaneseq
        %v823 = vshrl.u32 %v822, 7
        %v824 = vsub.s32 5, %v823
        %v825 = vrot.slane %v332, %v824
        %v826 = vlaneseq
        %v827 = vshrl.u32 %v826, 7
        %v828 = vsub.s32 6, %v827
        %v829 = vrot.slane %v332, %v828
        %v830 = vlaneseq
        %v831 = vshrl.u32 %v830, 7
        %v832 = vsub.s32 7, %v831
        %v833 = vrot.slane %v332, %v832
        %v834 = vlaneseq
        %v835 = vshrl.u32 %v834, 7
        %v836 = vsub.s32 0, %v835
        %v837 = vrot.slane %v333, %v836
        %v838 = vlaneseq
        %v839 = vshrl.u32 %v838, 7
        %v840 = vsub.s32 1, %v839
        %v841 = vrot.slane %v333, %v840
        %v842 = vlaneseq
        %v843 = vshrl.u32 %v842, 7
        %v844 = vsub.s32 2, %v843
        %v845 = vrot.slane %v333, %v844
        %v846 = vlaneseq
        %v847 = vshrl.u32 %v846, 7
        %v848 = vsub.s32 3, %v847
        %v849 = vrot.slane %v333, %v848
        %v850 = vlaneseq
        %v851 = vshrl.u32 %v850, 7
        %v852 = vsub.s32 4, %v851
        %v853 = vrot.slane %v333, %v852
        %v854 = vlaneseq
        %v855 = vshrl.u32 %v854, 7
        %v856 = vsub.s32 5, %v855
        %v857 = vrot.slane %v333, %v856
        %v858 = vlaneseq
        %v859 = vshrl.u32 %v858, 7
        %v860 = vsub.s32 6, %v859
        %v861 = vrot.slane %v333, %v860
        %v862 = vlaneseq
        %v863 = vshrl.u32 %v862, 7
        %v864 = vsub.s32 7, %v863
        %v865 = vrot.slane %v333, %v864
        %v866 = vlaneseq
        %v867 = vshrl.u32 %v866, 7
        %v868 = vsub.s32 0, %v867
        %v869 = vrot.slane %v334, %v868
        %v870 = vlaneseq
        %v871 = vshrl.u32 %v870, 7
        %v872 = vsub.s32 1, %v871
        %v873 = vrot.slane %v334, %v872
        %v874 = vlaneseq
        %v875 = vshrl.u32 %v874, 7
        %v876 = vsub.s32 2, %v875
        %v877 = vrot.slane %v334, %v876
        %v878 = vlaneseq
        %v879 = vshrl.u32 %v878, 7
        %v880 = vsub.s32 3, %v879
        %v881 = vrot.slane %v334, %v880
        %v882 = vlaneseq
        %v883 = vshrl.u32 %v882, 7
        %v884 = vsub.s32 4, %v883
        %v885 = vrot.slane %v334, %v884
        %v886 = vlaneseq
        %v887 = vshrl.u32 %v886, 7
        %v888 = vsub.s32 5, %v887
        %v889 = vrot.slane %v334, %v888
        %v890 = vlaneseq
        %v891 = vshrl.u32 %v890, 7
        %v892 = vsub.s32 6, %v891
        %v893 = vrot.slane %v334, %v892
        %v894 = vlaneseq
        %v895 = vshrl.u32 %v894, 7
        %v896 = vsub.s32 7, %v895
        %v897 = vrot.slane %v334, %v896
        %v898 = vlaneseq
        %v899 = vshrl.u32 %v898, 7
        %v900 = vsub.s32 0, %v899
        %v901 = vrot.slane %v335, %v900
        %v902 = vlaneseq
        %v903 = vshrl.u32 %v902, 7
        %v904 = vsub.s32 1, %v903
        %v905 = vrot.slane %v335, %v904
        %v906 = vlaneseq
        %v907 = vshrl.u32 %v906, 7
        %v908 = vsub.s32 2, %v907
        %v909 = vrot.slane %v335, %v908
        %v910 = vlaneseq
        %v911 = vshrl.u32 %v910, 7
        %v912 = vsub.s32 3, %v911
        %v913 = vrot.slane %v335, %v912
        %v914 = vlaneseq
        %v915 = vshrl.u32 %v914, 7
        %v916 = vsub.s32 4, %v915
        %v917 = vrot.slane %v335, %v916
        %v918 = vlaneseq
        %v919 = vshrl.u32 %v918, 7
        %v920 = vsub.s32 5, %v919
        %v921 = vrot.slane %v335, %v920
        %v922 = vlaneseq
        %v923 = vshrl.u32 %v922, 7
        %v924 = vsub.s32 6, %v923
        %v925 = vrot.slane %v335, %v924
        %v926 = vlaneseq
        %v927 = vshrl.u32 %v926, 7
        %v928 = vsub.s32 7, %v927
        %v929 = vrot.slane %v335, %v928
        %v930 = vlaneseq
        %v931 = vshrl.u32 %v930, 7
        %v932 = vsub.s32 0, %v931
        %v933 = vrot.slane %v336, %v932
        %v934 = vlaneseq
        %v935 = vshrl.u32 %v934, 7
        %v936 = vsub.s32 1, %v935
        %v937 = vrot.slane %v336, %v936
        %v938 = vlaneseq
        %v939 = vshrl.u32 %v938, 7
        %v940 = vsub.s32 2, %v939
        %v941 = vrot.slane %v336, %v940
        %v942 = vlaneseq
        %v943 = vshrl.u32 %v942, 7
        %v944 = vsub.s32 3, %v943
        %v945 = vrot.slane %v336, %v944
        %v946 = vlaneseq
        %v947 = vshrl.u32 %v946, 7
        %v948 = vsub.s32 4, %v947
        %v949 = vrot.slane %v336, %v948
        %v950 = vlaneseq
        %v951 = vshrl.u32 %v950, 7
        %v952 = vsub.s32 5, %v951
        %v953 = vrot.slane %v336, %v952
        %v954 = vlaneseq
        %v955 = vshrl.u32 %v954, 7
        %v956 = vsub.s32 6, %v955
        %v957 = vrot.slane %v336, %v956
        %v958 = vlaneseq
        %v959 = vshrl.u32 %v958, 7
        %v960 = vsub.s32 7, %v959
        %v961 = vrot.slane %v336, %v960
        %v962 = vlaneseq
        %v963 = vshrl.u32 %v962, 7
        %v964 = vsub.s32 0, %v963
        %v965 = vrot.slane %v337, %v964
        %v966 = vlaneseq
        %v967 = vshrl.u32 %v966, 7
        %v968 = vsub.s32 1, %v967
        %v969 = vrot.slane %v337, %v968
        %v970 = vlaneseq
        %v971 = vshrl.u32 %v970, 7
        %v972 = vsub.s32 2, %v971
        %v973 = vrot.slane %v337, %v972
        %v974 = vlaneseq
        %v975 = vshrl.u32 %v974, 7
        %v976 = vsub.s32 3, %v975
        %v977 = vrot.slane %v337, %v976
        %v978 = vlaneseq
        %v979 = vshrl.u32 %v978, 7
        %v980 = vsub.s32 4, %v979
        %v981 = vrot.slane %v337, %v980
        %v982 = vlaneseq
        %v983 = vshrl.u32 %v982, 7
        %v984 = vsub.s32 5, %v983
        %v985 = vrot.slane %v337, %v984
        %v986 = vlaneseq
        %v987 = vshrl.u32 %v986, 7
        %v988 = vsub.s32 6, %v987
        %v989 = vrot.slane %v337, %v988
        %v990 = vlaneseq
        %v991 = vshrl.u32 %v990, 7
        %v992 = vsub.s32 7, %v991
        %v993 = vrot.slane %v337, %v992
        %v994 = vlaneseq
        %v995 = vshrl.u32 %v994, 7
        %v996 = vsub.s32 0, %v995
        %v997 = vrot.slane %v338, %v996
        %v998 = vlaneseq
        %v999 = vshrl.u32 %v998, 7
        %v1000 = vsub.s32 1, %v999
        %v1001 = vrot.slane %v338, %v1000
        %v1002 = vlaneseq
        %v1003 = vshrl.u32 %v1002, 7
        %v1004 = vsub.s32 2, %v1003
        %v1005 = vrot.slane %v338, %v1004
        %v1006 = vlaneseq
        %v1007 = vshrl.u32 %v1006, 7
        %v1008 = vsub.s32 3, %v1007
        %v1009 = vrot.slane %v338, %v1008
        %v1010 = vlaneseq
        %v1011 = vshrl.u32 %v1010, 7
        %v1012 = vsub.s32 4, %v1011
        %v1013 = vrot.slane %v338, %v1012
        %v1014 = vlaneseq
        %v1015 = vshrl.u32 %v1014, 7
        %v1016 = vsub.s32 5, %v1015
        %v1017 = vrot.slane %v338, %v1016
        %v1018 = vlaneseq
        %v1019 = vshrl.u32 %v1018, 7
        %v1020 = vsub.s32 6, %v1019
        %v1021 = vrot.slane %v338, %v1020
        %v1022 = vlaneseq
        %v1023 = vshrl.u32 %v1022, 7
        %v1024 = vsub.s32 7, %v1023
        %v1025 = vrot.slane %v338, %v1024
        %v1026 = vlaneseq
        %v1027 = vshrl.u32 %v1026, 7
        %v1028 = vsub.s32 0, %v1027
        %v1029 = vrot.slane %v339, %v1028
        %v1030 = vlaneseq
        %v1031 = vshrl.u32 %v1030, 7
        %v1032 = vsub.s32 1, %v1031
        %v1033 = vrot.slane %v339, %v1032
        %v1034 = vlaneseq
        %v1035 = vshrl.u32 %v1034, 7
        %v1036 = vsub.s32 2, %v1035
        %v1037 = vrot.slane %v339, %v1036
        %v1038 = vlaneseq
        %v1039 = vshrl.u32 %v1038, 7
        %v1040 = vsub.s32 3, %v1039
        %v1041 = vrot.slane %v339, %v1040
        %v1042 = vlaneseq
        %v1043 = vshrl.u32 %v1042, 7
        %v1044 = vsub.s32 4, %v1043
        %v1045 = vrot.slane %v339, %v1044
        %v1046 = vlaneseq
        %v1047 = vshrl.u32 %v1046, 7
        %v1048 = vsub.s32 5, %v1047
        %v1049 = vrot.slane %v339, %v1048
        %v1050 = vlaneseq
        %v1051 = vshrl.u32 %v1050, 7
        %v1052 = vsub.s32 6, %v1051
        %v1053 = vrot.slane %v339, %v1052
        %v1054 = vlaneseq
        %v1055 = vshrl.u32 %v1054, 7
        %v1056 = vsub.s32 7, %v1055
        %v1057 = vrot.slane %v339, %v1056
        %v1058 = vlaneseq
        %v1059 = vshrl.u32 %v1058, 7
        %v1060 = vsub.s32 0, %v1059
        %v1061 = vrot.slane %v340, %v1060
        %v1062 = vlaneseq
        %v1063 = vshrl.u32 %v1062, 7
        %v1064 = vsub.s32 1, %v1063
        %v1065 = vrot.slane %v340, %v1064
        %v1066 = vlaneseq
        %v1067 = vshrl.u32 %v1066, 7
        %v1068 = vsub.s32 2, %v1067
        %v1069 = vrot.slane %v340, %v1068
        %v1070 = vlaneseq
        %v1071 = vshrl.u32 %v1070, 7
        %v1072 = vsub.s32 3, %v1071
        %v1073 = vrot.slane %v340, %v1072
        %v1074 = vlaneseq
        %v1075 = vshrl.u32 %v1074, 7
        %v1076 = vsub.s32 4, %v1075
        %v1077 = vrot.slane %v340, %v1076
        %v1078 = vlaneseq
        %v1079 = vshrl.u32 %v1078, 7
        %v1080 = vsub.s32 5, %v1079
        %v1081 = vrot.slane %v340, %v1080
        %v1082 = vlaneseq
        %v1083 = vshrl.u32 %v1082, 7
        %v1084 = vsub.s32 6, %v1083
        %v1085 = vrot.slane %v340, %v1084
        %v1086 = vlaneseq
        %v1087 = vshrl.u32 %v1086, 7
        %v1088 = vsub.s32 7, %v1087
        %v1089 = vrot.slane %v340, %v1088
        %v1090 = vlaneseq
        %v1091 = vshrl.u32 %v1090, 7
        %v1092 = vsub.s32 0, %v1091
        %v1093 = vrot.slane %v341, %v1092
        %v1094 = vlaneseq
        %v1095 = vshrl.u32 %v1094, 7
        %v1096 = vsub.s32 1, %v1095
        %v1097 = vrot.slane %v341, %v1096
        %v1098 = vlaneseq
        %v1099 = vshrl.u32 %v1098, 7
        %v1100 = vsub.s32 2, %v1099
        %v1101 = vrot.slane %v341, %v1100
        %v1102 = vlaneseq
        %v1103 = vshrl.u32 %v1102, 7
        %v1104 = vsub.s32 3, %v1103
        %v1105 = vrot.slane %v341, %v1104
        %v1106 = vlaneseq
        %v1107 = vshrl.u32 %v1106, 7
        %v1108 = vsub.s32 4, %v1107
        %v1109 = vrot.slane %v341, %v1108
        %v1110 = vlaneseq
        %v1111 = vshrl.u32 %v1110, 7
        %v1112 = vsub.s32 5, %v1111
        %v1113 = vrot.slane %v341, %v1112
        %v1114 = vlaneseq
        %v1115 = vshrl.u32 %v1114, 7
        %v1116 = vsub.s32 6, %v1115
        %v1117 = vrot.slane %v341, %v1116
        %v1118 = vlaneseq
        %v1119 = vshrl.u32 %v1118, 7
        %v1120 = vsub.s32 7, %v1119
        %v1121 = vrot.slane %v341, %v1120
        %v1122 = vlaneseq
        %v1123 = vshrl.u32 %v1122, 7
        %v1124 = vsub.s32 0, %v1123
        %v1125 = vrot.slane %v342, %v1124
        %v1126 = vlaneseq
        %v1127 = vshrl.u32 %v1126, 7
        %v1128 = vsub.s32 1, %v1127
        %v1129 = vrot.slane %v342, %v1128
        %v1130 = vlaneseq
        %v1131 = vshrl.u32 %v1130, 7
        %v1132 = vsub.s32 2, %v1131
        %v1133 = vrot.slane %v342, %v1132
        %v1134 = vlaneseq
        %v1135 = vshrl.u32 %v1134, 7
        %v1136 = vsub.s32 3, %v1135
        %v1137 = vrot.slane %v342, %v1136
        %v1138 = vlaneseq
        %v1139 = vshrl.u32 %v1138, 7
        %v1140 = vsub.s32 4, %v1139
        %v1141 = vrot.slane %v342, %v1140
        %v1142 = vlaneseq
        %v1143 = vshrl.u32 %v1142, 7
        %v1144 = vsub.s32 5, %v1143
        %v1145 = vrot.slane %v342, %v1144
        %v1146 = vlaneseq
        %v1147 = vshrl.u32 %v1146, 7
        %v1148 = vsub.s32 6, %v1147
        %v1149 = vrot.slane %v342, %v1148
        %v1150 = vlaneseq
        %v1151 = vshrl.u32 %v1150, 7
        %v1152 = vsub.s32 7, %v1151
        %v1153 = vrot.slane %v342, %v1152
        %v1154 = vlaneseq
        %v1155 = vshrl.u32 %v1154, 7
        %v1156 = vsub.s32 0, %v1155
        %v1157 = vrot.slane %v343, %v1156
        %v1158 = vlaneseq
        %v1159 = vshrl.u32 %v1158, 7
        %v1160 = vsub.s32 1, %v1159
        %v1161 = vrot.slane %v343, %v1160
        %v1162 = vlaneseq
        %v1163 = vshrl.u32 %v1162, 7
        %v1164 = vsub.s32 2, %v1163
        %v1165 = vrot.slane %v343, %v1164
        %v1166 = vlaneseq
        %v1167 = vshrl.u32 %v1166, 7
        %v1168 = vsub.s32 3, %v1167
        %v1169 = vrot.slane %v343, %v1168
        %v1170 = vlaneseq
        %v1171 = vshrl.u32 %v1170, 7
        %v1172 = vsub.s32 4, %v1171
        %v1173 = vrot.slane %v343, %v1172
        %v1174 = vlaneseq
        %v1175 = vshrl.u32 %v1174, 7
        %v1176 = vsub.s32 5, %v1175
        %v1177 = vrot.slane %v343, %v1176
        %v1178 = vlaneseq
        %v1179 = vshrl.u32 %v1178, 7
        %v1180 = vsub.s32 6, %v1179
        %v1181 = vrot.slane %v343, %v1180
        %v1182 = vlaneseq
        %v1183 = vshrl.u32 %v1182, 7
        %v1184 = vsub.s32 7, %v1183
        %v1185 = vrot.slane %v343, %v1184
        %v1186 = vlaneseq
        %v1187 = vshrl.u32 %v1186, 7
        %v1188 = vsub.s32 0, %v1187
        %v1189 = vrot.slane %v344, %v1188
        %v1190 = vlaneseq
        %v1191 = vshrl.u32 %v1190, 7
        %v1192 = vsub.s32 1, %v1191
        %v1193 = vrot.slane %v344, %v1192
        %v1194 = vlaneseq
        %v1195 = vshrl.u32 %v1194, 7
        %v1196 = vsub.s32 2, %v1195
        %v1197 = vrot.slane %v344, %v1196
        %v1198 = vlaneseq
        %v1199 = vshrl.u32 %v1198, 7
        %v1200 = vsub.s32 3, %v1199
        %v1201 = vrot.slane %v344, %v1200
        %v1202 = vlaneseq
        %v1203 = vshrl.u32 %v1202, 7
        %v1204 = vsub.s32 4, %v1203
        %v1205 = vrot.slane %v344, %v1204
        %v1206 = vlaneseq
        %v1207 = vshrl.u32 %v1206, 7
        %v1208 = vsub.s32 5, %v1207
        %v1209 = vrot.slane %v344, %v1208
        %v1210 = vlaneseq
        %v1211 = vshrl.u32 %v1210, 7
        %v1212 = vsub.s32 6, %v1211
        %v1213 = vrot.slane %v344, %v1212
        %v1214 = vlaneseq
        %v1215 = vshrl.u32 %v1214, 7
        %v1216 = vsub.s32 7, %v1215
        %v1217 = vrot.slane %v344, %v1216
        %v1218 = vlaneseq
        %v1219 = vshrl.u32 %v1218, 7
        %v1220 = vsub.s32 0, %v1219
        %v1221 = vrot.slane %v345, %v1220
        %v1222 = vlaneseq
        %v1223 = vshrl.u32 %v1222, 7
        %v1224 = vsub.s32 1, %v1223
        %v1225 = vrot.slane %v345, %v1224
        %v1226 = vlaneseq
        %v1227 = vshrl.u32 %v1226, 7
        %v1228 = vsub.s32 2, %v1227
        %v1229 = vrot.slane %v345, %v1228
        %v1230 = vlaneseq
        %v1231 = vshrl.u32 %v1230, 7
        %v1232 = vsub.s32 3, %v1231
        %v1233 = vrot.slane %v345, %v1232
        %v1234 = vlaneseq
        %v1235 = vshrl.u32 %v1234, 7
        %v1236 = vsub.s32 4, %v1235
        %v1237 = vrot.slane %v345, %v1236
        %v1238 = vlaneseq
        %v1239 = vshrl.u32 %v1238, 7
        %v1240 = vsub.s32 5, %v1239
        %v1241 = vrot.slane %v345, %v1240
        %v1242 = vlaneseq
        %v1243 = vshrl.u32 %v1242, 7
        %v1244 = vsub.s32 6, %v1243
        %v1245 = vrot.slane %v345, %v1244
        %v1246 = vlaneseq
        %v1247 = vshrl.u32 %v1246, 7
        %v1248 = vsub.s32 7, %v1247
        %v1249 = vrot.slane %v345, %v1248
        %v1250 = vlaneseq
        %v1251 = vshrl.u32 %v1250, 7
        %v1252 = vsub.s32 0, %v1251
        %v1253 = vrot.slane %v346, %v1252
        %v1254 = vlaneseq
        %v1255 = vshrl.u32 %v1254, 7
        %v1256 = vsub.s32 1, %v1255
        %v1257 = vrot.slane %v346, %v1256
        %v1258 = vlaneseq
        %v1259 = vshrl.u32 %v1258, 7
        %v1260 = vsub.s32 2, %v1259
        %v1261 = vrot.slane %v346, %v1260
        %v1262 = vlaneseq
        %v1263 = vshrl.u32 %v1262, 7
        %v1264 = vsub.s32 3, %v1263
        %v1265 = vrot.slane %v346, %v1264
        %v1266 = vlaneseq
        %v1267 = vshrl.u32 %v1266, 7
        %v1268 = vsub.s32 4, %v1267
        %v1269 = vrot.slane %v346, %v1268
        %v1270 = vlaneseq
        %v1271 = vshrl.u32 %v1270, 7
        %v1272 = vsub.s32 5, %v1271
        %v1273 = vrot.slane %v346, %v1272
        %v1274 = vlaneseq
        %v1275 = vshrl.u32 %v1274, 7
        %v1276 = vsub.s32 6, %v1275
        %v1277 = vrot.slane %v346, %v1276
        %v1278 = vlaneseq
        %v1279 = vshrl.u32 %v1278, 7
        %v1280 = vsub.s32 7, %v1279
        %v1281 = vrot.slane %v346, %v1280
        %v1282 = vlaneseq
        %v1283 = vshrl.u32 %v1282, 7
        %v1284 = vsub.s32 0, %v1283
        %v1285 = vrot.slane %v347, %v1284
        %v1286 = vlaneseq
        %v1287 = vshrl.u32 %v1286, 7
        %v1288 = vsub.s32 1, %v1287
        %v1289 = vrot.slane %v347, %v1288
        %v1290 = vlaneseq
        %v1291 = vshrl.u32 %v1290, 7
        %v1292 = vsub.s32 2, %v1291
        %v1293 = vrot.slane %v347, %v1292
        %v1294 = vlaneseq
        %v1295 = vshrl.u32 %v1294, 7
        %v1296 = vsub.s32 3, %v1295
        %v1297 = vrot.slane %v347, %v1296
        %v1298 = vlaneseq
        %v1299 = vshrl.u32 %v1298, 7
        %v1300 = vsub.s32 4, %v1299
        %v1301 = vrot.slane %v347, %v1300
        %v1302 = vlaneseq
        %v1303 = vshrl.u32 %v1302, 7
        %v1304 = vsub.s32 5, %v1303
        %v1305 = vrot.slane %v347, %v1304
        %v1306 = vlaneseq
        %v1307 = vshrl.u32 %v1306, 7
        %v1308 = vsub.s32 6, %v1307
        %v1309 = vrot.slane %v347, %v1308
        %v1310 = vlaneseq
        %v1311 = vshrl.u32 %v1310, 7
        %v1312 = vsub.s32 7, %v1311
        %v1313 = vrot.slane %v347, %v1312
        %v1314 = vlaneseq
        %v1315 = vshrl.u32 %v1314, 7
        %v1316 = vsub.s32 0, %v1315
        %v1317 = vrot.slane %v348, %v1316
        %v1318 = vlaneseq
        %v1319 = vshrl.u32 %v1318, 7
        %v1320 = vsub.s32 1, %v1319
        %v1321 = vrot.slane %v348, %v1320
        %v1322 = vlaneseq
        %v1323 = vshrl.u32 %v1322, 7
        %v1324 = vsub.s32 2, %v1323
        %v1325 = vrot.slane %v348, %v1324
        %v1326 = vlaneseq
        %v1327 = vshrl.u32 %v1326, 7
        %v1328 = vsub.s32 3, %v1327
        %v1329 = vrot.slane %v348, %v1328
        %v1330 = vlaneseq
        %v1331 = vshrl.u32 %v1330, 7
        %v1332 = vsub.s32 4, %v1331
        %v1333 = vrot.slane %v348, %v1332
        %v1334 = vlaneseq
        %v1335 = vshrl.u32 %v1334, 7
        %v1336 = vsub.s32 5, %v1335
        %v1337 = vrot.slane %v348, %v1336
        %v1338 = vlaneseq
        %v1339 = vshrl.u32 %v1338, 7
        %v1340 = vsub.s32 6, %v1339
        %v1341 = vrot.slane %v348, %v1340
        %v1342 = vlaneseq
        %v1343 = vshrl.u32 %v1342, 7
        %v1344 = vsub.s32 7, %v1343
        %v1345 = vrot.slane %v348, %v1344
        %v1346 = vlaneseq
        %v1347 = vshrl.u32 %v1346, 7
        %v1348 = vsub.s32 0, %v1347
        %v1349 = vrot.slane %v349, %v1348
        %v1350 = vlaneseq
        %v1351 = vshrl.u32 %v1350, 7
        %v1352 = vsub.s32 1, %v1351
        %v1353 = vrot.slane %v349, %v1352
        %v1354 = vlaneseq
        %v1355 = vshrl.u32 %v1354, 7
        %v1356 = vsub.s32 2, %v1355
        %v1357 = vrot.slane %v349, %v1356
        %v1358 = vlaneseq
        %v1359 = vshrl.u32 %v1358, 7
        %v1360 = vsub.s32 3, %v1359
        %v1361 = vrot.slane %v349, %v1360
        %v1362 = vlaneseq
        %v1363 = vshrl.u32 %v1362, 7
        %v1364 = vsub.s32 4, %v1363
        %v1365 = vrot.slane %v349, %v1364
        %v1366 = vlaneseq
        %v1367 = vshrl.u32 %v1366, 7
        %v1368 = vsub.s32 5, %v1367
        %v1369 = vrot.slane %v349, %v1368
        %v1370 = vlaneseq
        %v1371 = vshrl.u32 %v1370, 7
        %v1372 = vsub.s32 6, %v1371
        %v1373 = vrot.slane %v349, %v1372
        %v1374 = vlaneseq
        %v1375 = vshrl.u32 %v1374, 7
        %v1376 = vsub.s32 7, %v1375
        %v1377 = vrot.slane %v349, %v1376
        %v1378 = vlaneseq
        %v1379 = vshrl.u32 %v1378, 7
        %v1380 = vsub.s32 0, %v1379
        %v1381 = vrot.slane %v350, %v1380
        %v1382 = vlaneseq
        %v1383 = vshrl.u32 %v1382, 7
        %v1384 = vsub.s32 1, %v1383
        %v1385 = vrot.slane %v350, %v1384
        %v1386 = vlaneseq
        %v1387 = vshrl.u32 %v1386, 7
        %v1388 = vsub.s32 2, %v1387
        %v1389 = vrot.slane %v350, %v1388
        %v1390 = vlaneseq
        %v1391 = vshrl.u32 %v1390, 7
        %v1392 = vsub.s32 3, %v1391
        %v1393 = vrot.slane %v350, %v1392
        %v1394 = vlaneseq
        %v1395 = vshrl.u32 %v1394, 7
        %v1396 = vsub.s32 4, %v1395
        %v1397 = vrot.slane %v350, %v1396
        %v1398 = vlaneseq
        %v1399 = vshrl.u32 %v1398, 7
        %v1400 = vsub.s32 5, %v1399
        %v1401 = vrot.slane %v350, %v1400
        %v1402 = vlaneseq
        %v1403 = vshrl.u32 %v1402, 7
        %v1404 = vsub.s32 6, %v1403
        %v1405 = vrot.slane %v350, %v1404
        %v1406 = vlaneseq
        %v1407 = vshrl.u32 %v1406, 7
        %v1408 = vsub.s32 7, %v1407
        %v1409 = vrot.slane %v350, %v1408
        %v1410 = vlaneseq
        %v1411 = vshrl.u32 %v1410, 7
        %v1412 = vsub.s32 0, %v1411
        %v1413 = vrot.slane %v351, %v1412
        %v1414 = vlaneseq
        %v1415 = vshrl.u32 %v1414, 7
        %v1416 = vsub.s32 1, %v1415
        %v1417 = vrot.slane %v351, %v1416
        %v1418 = vlaneseq
        %v1419 = vshrl.u32 %v1418, 7
        %v1420 = vsub.s32 2, %v1419
        %v1421 = vrot.slane %v351, %v1420
        %v1422 = vlaneseq
        %v1423 = vshrl.u32 %v1422, 7
        %v1424 = vsub.s32 3, %v1423
        %v1425 = vrot.slane %v351, %v1424
        %v1426 = vlaneseq
        %v1427 = vshrl.u32 %v1426, 7
        %v1428 = vsub.s32 4, %v1427
        %v1429 = vrot.slane %v351, %v1428
        %v1430 = vlaneseq
        %v1431 = vshrl.u32 %v1430, 7
        %v1432 = vsub.s32 5, %v1431
        %v1433 = vrot.slane %v351, %v1432
        %v1434 = vlaneseq
        %v1435 = vshrl.u32 %v1434, 7
        %v1436 = vsub.s32 6, %v1435
        %v1437 = vrot.slane %v351, %v1436
        %v1438 = vlaneseq
        %v1439 = vshrl.u32 %v1438, 7
        %v1440 = vsub.s32 7, %v1439
        %v1441 = vrot.slane %v351, %v1440
        %v1442 = vlaneseq
        %v1443 = vshrl.u32 %v1442, 7
        %v1444 = vsub.s32 0, %v1443
        %v1445 = vrot.slane %v352, %v1444
        %v1446 = vlaneseq
        %v1447 = vshrl.u32 %v1446, 7
        %v1448 = vsub.s32 1, %v1447
        %v1449 = vrot.slane %v352, %v1448
        %v1450 = vlaneseq
        %v1451 = vshrl.u32 %v1450, 7
        %v1452 = vsub.s32 2, %v1451
        %v1453 = vrot.slane %v352, %v1452
        %v1454 = vlaneseq
        %v1455 = vshrl.u32 %v1454, 7
        %v1456 = vsub.s32 3, %v1455
        %v1457 = vrot.slane %v352, %v1456
        %v1458 = vlaneseq
        %v1459 = vshrl.u32 %v1458, 7
        %v1460 = vsub.s32 4, %v1459
        %v1461 = vrot.slane %v352, %v1460
        %v1462 = vlaneseq
        %v1463 = vshrl.u32 %v1462, 7
        %v1464 = vsub.s32 5, %v1463
        %v1465 = vrot.slane %v352, %v1464
        %v1466 = vlaneseq
        %v1467 = vshrl.u32 %v1466, 7
        %v1468 = vsub.s32 6, %v1467
        %v1469 = vrot.slane %v352, %v1468
        %v1470 = vlaneseq
        %v1471 = vshrl.u32 %v1470, 7
        %v1472 = vsub.s32 7, %v1471
        %v1473 = vrot.slane %v352, %v1472
        %v1474 = vlaneseq
        %v1475 = vshrl.u32 %v1474, 7
        %v1476 = vsub.s32 0, %v1475
        %v1477 = vrot.slane %v353, %v1476
        %v1478 = vlaneseq
        %v1479 = vshrl.u32 %v1478, 7
        %v1480 = vsub.s32 1, %v1479
        %v1481 = vrot.slane %v353, %v1480
        %v1482 = vlaneseq
        %v1483 = vshrl.u32 %v1482, 7
        %v1484 = vsub.s32 2, %v1483
        %v1485 = vrot.slane %v353, %v1484
        %v1486 = vlaneseq
        %v1487 = vshrl.u32 %v1486, 7
        %v1488 = vsub.s32 3, %v1487
        %v1489 = vrot.slane %v353, %v1488
        %v1490 = vlaneseq
        %v1491 = vshrl.u32 %v1490, 7
        %v1492 = vsub.s32 4, %v1491
        %v1493 = vrot.slane %v353, %v1492
        %v1494 = vlaneseq
        %v1495 = vshrl.u32 %v1494, 7
        %v1496 = vsub.s32 5, %v1495
        %v1497 = vrot.slane %v353, %v1496
        %v1498 = vlaneseq
        %v1499 = vshrl.u32 %v1498, 7
        %v1500 = vsub.s32 6, %v1499
        %v1501 = vrot.slane %v353, %v1500
        %v1502 = vlaneseq
        %v1503 = vshrl.u32 %v1502, 7
        %v1504 = vsub.s32 7, %v1503
        %v1505 = vrot.slane %v353, %v1504
        %v1506 = vlaneseq
        %v1507 = vshrl.u32 %v1506, 7
        %v1508 = vsub.s32 0, %v1507
        %v1509 = vrot.slane %v354, %v1508
        %v1510 = vlaneseq
        %v1511 = vshrl.u32 %v1510, 7
        %v1512 = vsub.s32 1, %v1511
        %v1513 = vrot.slane %v354, %v1512
        %v1514 = vlaneseq
        %v1515 = vshrl.u32 %v1514, 7
        %v1516 = vsub.s32 2, %v1515
        %v1517 = vrot.slane %v354, %v1516
        %v1518 = vlaneseq
        %v1519 = vshrl.u32 %v1518, 7
        %v1520 = vsub.s32 3, %v1519
        %v1521 = vrot.slane %v354, %v1520
        %v1522 = vlaneseq
        %v1523 = vshrl.u32 %v1522, 7
        %v1524 = vsub.s32 4, %v1523
        %v1525 = vrot.slane %v354, %v1524
        %v1526 = vlaneseq
        %v1527 = vshrl.u32 %v1526, 7
        %v1528 = vsub.s32 5, %v1527
        %v1529 = vrot.slane %v354, %v1528
        %v1530 = vlaneseq
        %v1531 = vshrl.u32 %v1530, 7
        %v1532 = vsub.s32 6, %v1531
        %v1533 = vrot.slane %v354, %v1532
        %v1534 = vlaneseq
        %v1535 = vshrl.u32 %v1534, 7
        %v1536 = vsub.s32 7, %v1535
        %v1537 = vrot.slane %v354, %v1536
        %v1538 = vlaneseq
        %v1539 = vshrl.u32 %v1538, 7
        %v1540 = vsub.s32 0, %v1539
        %v1541 = vrot.slane %v355, %v1540
        %v1542 = vlaneseq
        %v1543 = vshrl.u32 %v1542, 7
        %v1544 = vsub.s32 1, %v1543
        %v1545 = vrot.slane %v355, %v1544
        %v1546 = vlaneseq
        %v1547 = vshrl.u32 %v1546, 7
        %v1548 = vsub.s32 2, %v1547
        %v1549 = vrot.slane %v355, %v1548
        %v1550 = vlaneseq
        %v1551 = vshrl.u32 %v1550, 7
        %v1552 = vsub.s32 3, %v1551
        %v1553 = vrot.slane %v355, %v1552
        %v1554 = vlaneseq
        %v1555 = vshrl.u32 %v1554, 7
        %v1556 = vsub.s32 4, %v1555
        %v1557 = vrot.slane %v355, %v1556
        %v1558 = vlaneseq
        %v1559 = vshrl.u32 %v1558, 7
        %v1560 = vsub.s32 5, %v1559
        %v1561 = vrot.slane %v355, %v1560
        %v1562 = vlaneseq
        %v1563 = vshrl.u32 %v1562, 7
        %v1564 = vsub.s32 6, %v1563
        %v1565 = vrot.slane %v355, %v1564
        %v1566 = vlaneseq
        %v1567 = vshrl.u32 %v1566, 7
        %v1568 = vsub.s32 7, %v1567
        %v1569 = vrot.slane %v355, %v1568
        %v1570 = vlaneseq
        %v1571 = vshrl.u32 %v1570, 7
        %v1572 = vsub.s32 0, %v1571
        %v1573 = vrot.slane %v356, %v1572
        %v1574 = vlaneseq
        %v1575 = vshrl.u32 %v1574, 7
        %v1576 = vsub.s32 1, %v1575
        %v1577 = vrot.slane %v356, %v1576
        %v1578 = vlaneseq
        %v1579 = vshrl.u32 %v1578, 7
        %v1580 = vsub.s32 2, %v1579
        %v1581 = vrot.slane %v356, %v1580
        %v1582 = vlaneseq
        %v1583 = vshrl.u32 %v1582, 7
        %v1584 = vsub.s32 3, %v1583
        %v1585 = vrot.slane %v356, %v1584
        %v1586 = vlaneseq
        %v1587 = vshrl.u32 %v1586, 7
        %v1588 = vsub.s32 4, %v1587
        %v1589 = vrot.slane %v356, %v1588
        %v1590 = vlaneseq
        %v1591 = vshrl.u32 %v1590, 7
        %v1592 = vsub.s32 5, %v1591
        %v1593 = vrot.slane %v356, %v1592
        %v1594 = vlaneseq
        %v1595 = vshrl.u32 %v1594, 7
        %v1596 = vsub.s32 6, %v1595
        %v1597 = vrot.slane %v356, %v1596
        %v1598 = vlaneseq
        %v1599 = vshrl.u32 %v1598, 7
        %v1600 = vsub.s32 7, %v1599
        %v1601 = vrot.slane %v356, %v1600
        %v1602 = vlaneseq
        %v1603 = vshrl.u32 %v1602, 7
        %v1604 = vsub.s32 0, %v1603
        %v1605 = vrot.slane %v357, %v1604
        %v1606 = vlaneseq
        %v1607 = vshrl.u32 %v1606, 7
        %v1608 = vsub.s32 1, %v1607
        %v1609 = vrot.slane %v357, %v1608
        %v1610 = vlaneseq
        %v1611 = vshrl.u32 %v1610, 7
        %v1612 = vsub.s32 2, %v1611
        %v1613 = vrot.slane %v357, %v1612
        %v1614 = vlaneseq
        %v1615 = vshrl.u32 %v1614, 7
        %v1616 = vsub.s32 3, %v1615
        %v1617 = vrot.slane %v357, %v1616
        %v1618 = vlaneseq
        %v1619 = vshrl.u32 %v1618, 7
        %v1620 = vsub.s32 4, %v1619
        %v1621 = vrot.slane %v357, %v1620
        %v1622 = vlaneseq
        %v1623 = vshrl.u32 %v1622, 7
        %v1624 = vsub.s32 5, %v1623
        %v1625 = vrot.slane %v357, %v1624
        %v1626 = vlaneseq
        %v1627 = vshrl.u32 %v1626, 7
        %v1628 = vsub.s32 6, %v1627
        %v1629 = vrot.slane %v357, %v1628
        %v1630 = vlaneseq
        %v1631 = vshrl.u32 %v1630, 7
        %v1632 = vsub.s32 7, %v1631
        %v1633 = vrot.slane %v357, %v1632
        %v1634 = vlaneseq
        %v1635 = vshrl.u32 %v1634, 7
        %v1636 = vsub.s32 0, %v1635
        %v1637 = vrot.slane %v358, %v1636
        %v1638 = vlaneseq
        %v1639 = vshrl.u32 %v1638, 7
        %v1640 = vsub.s32 1, %v1639
        %v1641 = vrot.slane %v358, %v1640
        %v1642 = vlaneseq
        %v1643 = vshrl.u32 %v1642, 7
        %v1644 = vsub.s32 2, %v1643
        %v1645 = vrot.slane %v358, %v1644
        %v1646 = vlaneseq
        %v1647 = vshrl.u32 %v1646, 7
        %v1648 = vsub.s32 3, %v1647
        %v1649 = vrot.slane %v358, %v1648
        %v1650 = vlaneseq
        %v1651 = vshrl.u32 %v1650, 7
        %v1652 = vsub.s32 4, %v1651
        %v1653 = vrot.slane %v358, %v1652
        %v1654 = vlaneseq
        %v1655 = vshrl.u32 %v1654, 7
        %v1656 = vsub.s32 5, %v1655
        %v1657 = vrot.slane %v358, %v1656
        %v1658 = vlaneseq
        %v1659 = vshrl.u32 %v1658, 7
        %v1660 = vsub.s32 6, %v1659
        %v1661 = vrot.slane %v358, %v1660
        %v1662 = vlaneseq
        %v1663 = vshrl.u32 %v1662, 7
        %v1664 = vsub.s32 7, %v1663
        %v1665 = vrot.slane %v358, %v1664
        %v1666 = vlaneseq
        %v1667 = vshrl.u32 %v1666, 7
        %v1668 = vsub.s32 0, %v1667
        %v1669 = vrot.slane %v359, %v1668
        %v1670 = vlaneseq
        %v1671 = vshrl.u32 %v1670, 7
        %v1672 = vsub.s32 1, %v1671
        %v1673 = vrot.slane %v359, %v1672
        %v1674 = vlaneseq
        %v1675 = vshrl.u32 %v1674, 7
        %v1676 = vsub.s32 2, %v1675
        %v1677 = vrot.slane %v359, %v1676
        %v1678 = vlaneseq
        %v1679 = vshrl.u32 %v1678, 7
        %v1680 = vsub.s32 3, %v1679
        %v1681 = vrot.slane %v359, %v1680
        %v1682 = vlaneseq
        %v1683 = vshrl.u32 %v1682, 7
        %v1684 = vsub.s32 4, %v1683
        %v1685 = vrot.slane %v359, %v1684
        %v1686 = vlaneseq
        %v1687 = vshrl.u32 %v1686, 7
        %v1688 = vsub.s32 5, %v1687
        %v1689 = vrot.slane %v359, %v1688
        %v1690 = vlaneseq
        %v1691 = vshrl.u32 %v1690, 7
        %v1692 = vsub.s32 6, %v1691
        %v1693 = vrot.slane %v359, %v1692
        %v1694 = vlaneseq
        %v1695 = vshrl.u32 %v1694, 7
        %v1696 = vsub.s32 7, %v1695
        %v1697 = vrot.slane %v359, %v1696
        %v1698 = vlaneseq
        %v1699 = vshrl.u32 %v1698, 7
        %v1700 = vsub.s32 0, %v1699
        %v1701 = vrot.slane %v360, %v1700
        %v1702 = vlaneseq
        %v1703 = vshrl.u32 %v1702, 7
        %v1704 = vsub.s32 1, %v1703
        %v1705 = vrot.slane %v360, %v1704
        %v1706 = vlaneseq
        %v1707 = vshrl.u32 %v1706, 7
        %v1708 = vsub.s32 2, %v1707
        %v1709 = vrot.slane %v360, %v1708
        %v1710 = vlaneseq
        %v1711 = vshrl.u32 %v1710, 7
        %v1712 = vsub.s32 3, %v1711
        %v1713 = vrot.slane %v360, %v1712
        %v1714 = vlaneseq
        %v1715 = vshrl.u32 %v1714, 7
        %v1716 = vsub.s32 4, %v1715
        %v1717 = vrot.slane %v360, %v1716
        %v1718 = vlaneseq
        %v1719 = vshrl.u32 %v1718, 7
        %v1720 = vsub.s32 5, %v1719
        %v1721 = vrot.slane %v360, %v1720
        %v1722 = vlaneseq
        %v1723 = vshrl.u32 %v1722, 7
        %v1724 = vsub.s32 6, %v1723
        %v1725 = vrot.slane %v360, %v1724
        %v1726 = vlaneseq
        %v1727 = vshrl.u32 %v1726, 7
        %v1728 = vsub.s32 7, %v1727
        %v1729 = vrot.slane %v360, %v1728
        %v1730 = vlaneseq
        %v1731 = vshrl.u32 %v1730, 7
        %v1732 = vsub.s32 0, %v1731
        %v1733 = vrot.slane %v361, %v1732
        %v1734 = vlaneseq
        %v1735 = vshrl.u32 %v1734, 7
        %v1736 = vsub.s32 1, %v1735
        %v1737 = vrot.slane %v361, %v1736
        %v1738 = vlaneseq
        %v1739 = vshrl.u32 %v1738, 7
        %v1740 = vsub.s32 2, %v1739
        %v1741 = vrot.slane %v361, %v1740
        %v1742 = vlaneseq
        %v1743 = vshrl.u32 %v1742, 7
        %v1744 = vsub.s32 3, %v1743
        %v1745 = vrot.slane %v361, %v1744
        %v1746 = vlaneseq
        %v1747 = vshrl.u32 %v1746, 7
        %v1748 = vsub.s32 4, %v1747
        %v1749 = vrot.slane %v361, %v1748
        %v1750 = vlaneseq
        %v1751 = vshrl.u32 %v1750, 7
        %v1752 = vsub.s32 5, %v1751
        %v1753 = vrot.slane %v361, %v1752
        %v1754 = vlaneseq
        %v1755 = vshrl.u32 %v1754, 7
        %v1756 = vsub.s32 6, %v1755
        %v1757 = vrot.slane %v361, %v1756
        %v1758 = vlaneseq
        %v1759 = vshrl.u32 %v1758, 7
        %v1760 = vsub.s32 7, %v1759
        %v1761 = vrot.slane %v361, %v1760
        %v1762 = vlaneseq
        %v1763 = vshrl.u32 %v1762, 7
        %v1764 = vsub.s32 0, %v1763
        %v1765 = vrot.slane %v362, %v1764
        %v1766 = vlaneseq
        %v1767 = vshrl.u32 %v1766, 7
        %v1768 = vsub.s32 1, %v1767
        %v1769 = vrot.slane %v362, %v1768
        %v1770 = vlaneseq
        %v1771 = vshrl.u32 %v1770, 7
        %v1772 = vsub.s32 2, %v1771
        %v1773 = vrot.slane %v362, %v1772
        %v1774 = vlaneseq
        %v1775 = vshrl.u32 %v1774, 7
        %v1776 = vsub.s32 3, %v1775
        %v1777 = vrot.slane %v362, %v1776
        %v1778 = vlaneseq
        %v1779 = vshrl.u32 %v1778, 7
        %v1780 = vsub.s32 4, %v1779
        %v1781 = vrot.slane %v362, %v1780
        %v1782 = vlaneseq
        %v1783 = vshrl.u32 %v1782, 7
        %v1784 = vsub.s32 5, %v1783
        %v1785 = vrot.slane %v362, %v1784
        %v1786 = vlaneseq
        %v1787 = vshrl.u32 %v1786, 7
        %v1788 = vsub.s32 6, %v1787
        %v1789 = vrot.slane %v362, %v1788
        %v1790 = vlaneseq
        %v1791 = vshrl.u32 %v1790, 7
        %v1792 = vsub.s32 7, %v1791
        %v1793 = vrot.slane %v362, %v1792
        %v1794 = vlaneseq
        %v1795 = vshrl.u32 %v1794, 7
        %v1796 = vsub.s32 0, %v1795
        %v1797 = vrot.slane %v363, %v1796
        %v1798 = vlaneseq
        %v1799 = vshrl.u32 %v1798, 7
        %v1800 = vsub.s32 1, %v1799
        %v1801 = vrot.slane %v363, %v1800
        %v1802 = vlaneseq
        %v1803 = vshrl.u32 %v1802, 7
        %v1804 = vsub.s32 2, %v1803
        %v1805 = vrot.slane %v363, %v1804
        %v1806 = vlaneseq
        %v1807 = vshrl.u32 %v1806, 7
        %v1808 = vsub.s32 3, %v1807
        %v1809 = vrot.slane %v363, %v1808
        %v1810 = vlaneseq
        %v1811 = vshrl.u32 %v1810, 7
        %v1812 = vsub.s32 4, %v1811
        %v1813 = vrot.slane %v363, %v1812
        %v1814 = vlaneseq
        %v1815 = vshrl.u32 %v1814, 7
        %v1816 = vsub.s32 5, %v1815
        %v1817 = vrot.slane %v363, %v1816
        %v1818 = vlaneseq
        %v1819 = vshrl.u32 %v1818, 7
        %v1820 = vsub.s32 6, %v1819
        %v1821 = vrot.slane %v363, %v1820
        %v1822 = vlaneseq
        %v1823 = vshrl.u32 %v1822, 7
        %v1824 = vsub.s32 7, %v1823
        %v1825 = vrot.slane %v363, %v1824
        %v1826 = vlaneseq
        %v1827 = vshrl.u32 %v1826, 7
        %v1828 = vsub.s32 0, %v1827
        %v1829 = vrot.slane %v364, %v1828
        %v1830 = vlaneseq
        %v1831 = vshrl.u32 %v1830, 7
        %v1832 = vsub.s32 1, %v1831
        %v1833 = vrot.slane %v364, %v1832
        %v1834 = vlaneseq
        %v1835 = vshrl.u32 %v1834, 7
        %v1836 = vsub.s32 2, %v1835
        %v1837 = vrot.slane %v364, %v1836
        %v1838 = vlaneseq
        %v1839 = vshrl.u32 %v1838, 7
        %v1840 = vsub.s32 3, %v1839
        %v1841 = vrot.slane %v364, %v1840
        %v1842 = vlaneseq
        %v1843 = vshrl.u32 %v1842, 7
        %v1844 = vsub.s32 4, %v1843
        %v1845 = vrot.slane %v364, %v1844
        %v1846 = vlaneseq
        %v1847 = vshrl.u32 %v1846, 7
        %v1848 = vsub.s32 5, %v1847
        %v1849 = vrot.slane %v364, %v1848
        %v1850 = vlaneseq
        %v1851 = vshrl.u32 %v1850, 7
        %v1852 = vsub.s32 6, %v1851
        %v1853 = vrot.slane %v364, %v1852
        %v1854 = vlaneseq
        %v1855 = vshrl.u32 %v1854, 7
        %v1856 = vsub.s32 7, %v1855
        %v1857 = vrot.slane %v364, %v1856
        %v1858 = vlaneseq
        %v1859 = vshrl.u32 %v1858, 7
        %v1860 = vsub.s32 0, %v1859
        %v1861 = vrot.slane %v365, %v1860
        %v1862 = vlaneseq
        %v1863 = vshrl.u32 %v1862, 7
        %v1864 = vsub.s32 1, %v1863
        %v1865 = vrot.slane %v365, %v1864
        %v1866 = vlaneseq
        %v1867 = vshrl.u32 %v1866, 7
        %v1868 = vsub.s32 2, %v1867
        %v1869 = vrot.slane %v365, %v1868
        %v1870 = vlaneseq
        %v1871 = vshrl.u32 %v1870, 7
        %v1872 = vsub.s32 3, %v1871
        %v1873 = vrot.slane %v365, %v1872
        %v1874 = vlaneseq
        %v1875 = vshrl.u32 %v1874, 7
        %v1876 = vsub.s32 4, %v1875
        %v1877 = vrot.slane %v365, %v1876
        %v1878 = vlaneseq
        %v1879 = vshrl.u32 %v1878, 7
        %v1880 = vsub.s32 5, %v1879
        %v1881 = vrot.slane %v365, %v1880
        %v1882 = vlaneseq
        %v1883 = vshrl.u32 %v1882, 7
        %v1884 = vsub.s32 6, %v1883
        %v1885 = vrot.slane %v365, %v1884
        %v1886 = vlaneseq
        %v1887 = vshrl.u32 %v1886, 7
        %v1888 = vsub.s32 7, %v1887
        %v1889 = vrot.slane %v365, %v1888
        %v1890 = vlaneseq
        %v1891 = vshrl.u32 %v1890, 7
        %v1892 = vsub.s32 0, %v1891
        %v1893 = vrot.slane %v366, %v1892
        %v1894 = vlaneseq
        %v1895 = vshrl.u32 %v1894, 7
        %v1896 = vsub.s32 1, %v1895
        %v1897 = vrot.slane %v366, %v1896
        %v1898 = vlaneseq
        %v1899 = vshrl.u32 %v1898, 7
        %v1900 = vsub.s32 2, %v1899
        %v1901 = vrot.slane %v366, %v1900
        %v1902 = vlaneseq
        %v1903 = vshrl.u32 %v1902, 7
        %v1904 = vsub.s32 3, %v1903
        %v1905 = vrot.slane %v366, %v1904
        %v1906 = vlaneseq
        %v1907 = vshrl.u32 %v1906, 7
        %v1908 = vsub.s32 4, %v1907
        %v1909 = vrot.slane %v366, %v1908
        %v1910 = vlaneseq
        %v1911 = vshrl.u32 %v1910, 7
        %v1912 = vsub.s32 5, %v1911
        %v1913 = vrot.slane %v366, %v1912
        %v1914 = vlaneseq
        %v1915 = vshrl.u32 %v1914, 7
        %v1916 = vsub.s32 6, %v1915
        %v1917 = vrot.slane %v366, %v1916
        %v1918 = vlaneseq
        %v1919 = vshrl.u32 %v1918, 7
        %v1920 = vsub.s32 7, %v1919
        %v1921 = vrot.slane %v366, %v1920
        %v1922 = vlaneseq
        %v1923 = vshrl.u32 %v1922, 7
        %v1924 = vsub.s32 0, %v1923
        %v1925 = vrot.slane %v367, %v1924
        %v1926 = vlaneseq
        %v1927 = vshrl.u32 %v1926, 7
        %v1928 = vsub.s32 1, %v1927
        %v1929 = vrot.slane %v367, %v1928
        %v1930 = vlaneseq
        %v1931 = vshrl.u32 %v1930, 7
        %v1932 = vsub.s32 2, %v1931
        %v1933 = vrot.slane %v367, %v1932
        %v1934 = vlaneseq
        %v1935 = vshrl.u32 %v1934, 7
        %v1936 = vsub.s32 3, %v1935
        %v1937 = vrot.slane %v367, %v1936
        %v1938 = vlaneseq
        %v1939 = vshrl.u32 %v1938, 7
        %v1940 = vsub.s32 4, %v1939
        %v1941 = vrot.slane %v367, %v1940
        %v1942 = vlaneseq
        %v1943 = vshrl.u32 %v1942, 7
        %v1944 = vsub.s32 5, %v1943
        %v1945 = vrot.slane %v367, %v1944
        %v1946 = vlaneseq
        %v1947 = vshrl.u32 %v1946, 7
        %v1948 = vsub.s32 6, %v1947
        %v1949 = vrot.slane %v367, %v1948
        %v1950 = vlaneseq
        %v1951 = vshrl.u32 %v1950, 7
        %v1952 = vsub.s32 7, %v1951
        %v1953 = vrot.slane %v367, %v1952
        %v1954 = vlaneseq
        %v1955 = vshrl.u32 %v1954, 7
        %v1956 = vsub.s32 0, %v1955
        %v1957 = vrot.slane %v368, %v1956
        %v1958 = vlaneseq
        %v1959 = vshrl.u32 %v1958, 7
        %v1960 = vsub.s32 1, %v1959
        %v1961 = vrot.slane %v368, %v1960
        %v1962 = vlaneseq
        %v1963 = vshrl.u32 %v1962, 7
        %v1964 = vsub.s32 2, %v1963
        %v1965 = vrot.slane %v368, %v1964
        %v1966 = vlaneseq
        %v1967 = vshrl.u32 %v1966, 7
        %v1968 = vsub.s32 3, %v1967
        %v1969 = vrot.slane %v368, %v1968
        %v1970 = vlaneseq
        %v1971 = vshrl.u32 %v1970, 7
        %v1972 = vsub.s32 4, %v1971
        %v1973 = vrot.slane %v368, %v1972
        %v1974 = vlaneseq
        %v1975 = vshrl.u32 %v1974, 7
        %v1976 = vsub.s32 5, %v1975
        %v1977 = vrot.slane %v368, %v1976
        %v1978 = vlaneseq
        %v1979 = vshrl.u32 %v1978, 7
        %v1980 = vsub.s32 6, %v1979
        %v1981 = vrot.slane %v368, %v1980
        %v1982 = vlaneseq
        %v1983 = vshrl.u32 %v1982, 7
        %v1984 = vsub.s32 7, %v1983
        %v1985 = vrot.slane %v368, %v1984
        %v1986 = vcombine.low %v421, %v425
        %v1987 = vcombine.low %v429, %v433
        %v1989 = vunpack.c.l.s4 1983009808
        %v1990 = vunpack.c.0.s8 %v1989
        %v1991 = vlaneseq
        %v1992 = vshrl.u32 %v1991, 7
        %v1993 = vsub.s32 %v1990, %v1992
        %v1994 = vrot.slane %v1986, %v1993
        %v1996 = vunpack.c.l.s4 1983009808
        %v1997 = vunpack.c.0.s8 %v1996
        %v1998 = vlaneseq
        %v1999 = vshrl.u32 %v1998, 7
        %v2000 = vsub.s32 %v1997, %v1999
        %v2001 = vrot.slane %v1987, %v2000
        %v2002 = vcombine.low %v1994, %v2001
        %v2003 = vcombine.low %v437, %v441
        %v2004 = vcombine.low %v445, %v449
        %v2006 = vunpack.c.l.s4 1983009808
        %v2007 = vunpack.c.0.s8 %v2006
        %v2008 = vlaneseq
        %v2009 = vshrl.u32 %v2008, 7
        %v2010 = vsub.s32 %v2007, %v2009
        %v2011 = vrot.slane %v2003, %v2010
        %v2013 = vunpack.c.l.s4 1983009808
        %v2014 = vunpack.c.0.s8 %v2013
        %v2015 = vlaneseq
        %v2016 = vshrl.u32 %v2015, 7
        %v2017 = vsub.s32 %v2014, %v2016
        %v2018 = vrot.slane %v2004, %v2017
        %v2019 = vcombine.low %v2011, %v2018
        %v2020 = vcombine.low %v453, %v457
        %v2021 = vcombine.low %v461, %v465
        %v2023 = vunpack.c.l.s4 1983009808
        %v2024 = vunpack.c.0.s8 %v2023
        %v2025 = vlaneseq
        %v2026 = vshrl.u32 %v2025, 7
        %v2027 = vsub.s32 %v2024, %v2026
        %v2028 = vrot.slane %v2020, %v2027
        %v2030 = vunpack.c.l.s4 1983009808
        %v2031 = vunpack.c.0.s8 %v2030
        %v2032 = vlaneseq
        %v2033 = vshrl.u32 %v2032, 7
        %v2034 = vsub.s32 %v2031, %v2033
        %v2035 = vrot.slane %v2021, %v2034
        %v2036 = vcombine.low %v2028, %v2035
        %v2037 = vcombine.low %v469, %v473
        %v2038 = vcombine.low %v477, %v481
        %v2040 = vunpack.c.l.s4 1983009808
        %v2041 = vunpack.c.0.s8 %v2040
        %v2042 = vlaneseq
        %v2043 = vshrl.u32 %v2042, 7
        %v2044 = vsub.s32 %v2041, %v2043
        %v2045 = vrot.slane %v2037, %v2044
        %v2047 = vunpack.c.l.s4 1983009808
        %v2048 = vunpack.c.0.s8 %v2047
        %v2049 = vlaneseq
        %v2050 = vshrl.u32 %v2049, 7
        %v2051 = vsub.s32 %v2048, %v2050
        %v2052 = vrot.slane %v2038, %v2051
        %v2053 = vcombine.low %v2045, %v2052
        %v2054 = vcombine.low %v485, %v489
        %v2055 = vcombine.low %v493, %v497
        %v2057 = vunpack.c.l.s4 1983009808
        %v2058 = vunpack.c.0.s8 %v2057
        %v2059 = vlaneseq
        %v2060 = vshrl.u32 %v2059, 7
        %v2061 = vsub.s32 %v2058, %v2060
        %v2062 = vrot.slane %v2054, %v2061
        %v2064 = vunpack.c.l.s4 1983009808
        %v2065 = vunpack.c.0.s8 %v2064
        %v2066 = vlaneseq
        %v2067 = vshrl.u32 %v2066, 7
        %v2068 = vsub.s32 %v2065, %v2067
        %v2069 = vrot.slane %v2055, %v2068
        %v2070 = vcombine.low %v2062, %v2069
        %v2071 = vcombine.low %v501, %v505
        %v2072 = vcombine.low %v509, %v513
        %v2074 = vunpack.c.l.s4 1983009808
        %v2075 = vunpack.c.0.s8 %v2074
        %v2076 = vlaneseq
        %v2077 = vshrl.u32 %v2076, 7
        %v2078 = vsub.s32 %v2075, %v2077
        %v2079 = vrot.slane %v2071, %v2078
        %v2081 = vunpack.c.l.s4 1983009808
        %v2082 = vunpack.c.0.s8 %v2081
        %v2083 = vlaneseq
        %v2084 = vshrl.u32 %v2083, 7
        %v2085 = vsub.s32 %v2082, %v2084
        %v2086 = vrot.slane %v2072, %v2085
        %v2087 = vcombine.low %v2079, %v2086
        %v2088 = vcombine.low %v517, %v521
        %v2089 = vcombine.low %v525, %v529
        %v2091 = vunpack.c.l.s4 1983009808
        %v2092 = vunpack.c.0.s8 %v2091
        %v2093 = vlaneseq
        %v2094 = vshrl.u32 %v2093, 7
        %v2095 = vsub.s32 %v2092, %v2094
        %v2096 = vrot.slane %v2088, %v2095
        %v2098 = vunpack.c.l.s4 1983009808
        %v2099 = vunpack.c.0.s8 %v2098
        %v2100 = vlaneseq
        %v2101 = vshrl.u32 %v2100, 7
        %v2102 = vsub.s32 %v2099, %v2101
        %v2103 = vrot.slane %v2089, %v2102
        %v2104 = vcombine.low %v2096, %v2103
        %v2105 = vcombine.low %v533, %v537
        %v2106 = vcombine.low %v541, %v545
        %v2108 = vunpack.c.l.s4 1983009808
        %v2109 = vunpack.c.0.s8 %v2108
        %v2110 = vlaneseq
        %v2111 = vshrl.u32 %v2110, 7
        %v2112 = vsub.s32 %v2109, %v2111
        %v2113 = vrot.slane %v2105, %v2112
        %v2115 = vunpack.c.l.s4 1983009808
        %v2116 = vunpack.c.0.s8 %v2115
        %v2117 = vlaneseq
        %v2118 = vshrl.u32 %v2117, 7
        %v2119 = vsub.s32 %v2116, %v2118
        %v2120 = vrot.slane %v2106, %v2119
        %v2121 = vcombine.low %v2113, %v2120
        %v2122 = vcombine.low %v549, %v553
        %v2123 = vcombine.low %v557, %v561
        %v2125 = vunpack.c.l.s4 1983009808
        %v2126 = vunpack.c.0.s8 %v2125
        %v2127 = vlaneseq
        %v2128 = vshrl.u32 %v2127, 7
        %v2129 = vsub.s32 %v2126, %v2128
        %v2130 = vrot.slane %v2122, %v2129
        %v2132 = vunpack.c.l.s4 1983009808
        %v2133 = vunpack.c.0.s8 %v2132
        %v2134 = vlaneseq
        %v2135 = vshrl.u32 %v2134, 7
        %v2136 = vsub.s32 %v2133, %v2135
        %v2137 = vrot.slane %v2123, %v2136
        %v2138 = vcombine.low %v2130, %v2137
        %v2139 = vcombine.low %v565, %v569
        %v2140 = vcombine.low %v573, %v577
        %v2142 = vunpack.c.l.s4 1983009808
        %v2143 = vunpack.c.0.s8 %v2142
        %v2144 = vlaneseq
        %v2145 = vshrl.u32 %v2144, 7
        %v2146 = vsub.s32 %v2143, %v2145
        %v2147 = vrot.slane %v2139, %v2146
        %v2149 = vunpack.c.l.s4 1983009808
        %v2150 = vunpack.c.0.s8 %v2149
        %v2151 = vlaneseq
        %v2152 = vshrl.u32 %v2151, 7
        %v2153 = vsub.s32 %v2150, %v2152
        %v2154 = vrot.slane %v2140, %v2153
        %v2155 = vcombine.low %v2147, %v2154
        %v2156 = vcombine.low %v581, %v585
        %v2157 = vcombine.low %v589, %v593
        %v2159 = vunpack.c.l.s4 1983009808
        %v2160 = vunpack.c.0.s8 %v2159
        %v2161 = vlaneseq
        %v2162 = vshrl.u32 %v2161, 7
        %v2163 = vsub.s32 %v2160, %v2162
        %v2164 = vrot.slane %v2156, %v2163
        %v2166 = vunpack.c.l.s4 1983009808
        %v2167 = vunpack.c.0.s8 %v2166
        %v2168 = vlaneseq
        %v2169 = vshrl.u32 %v2168, 7
        %v2170 = vsub.s32 %v2167, %v2169
        %v2171 = vrot.slane %v2157, %v2170
        %v2172 = vcombine.low %v2164, %v2171
        %v2173 = vcombine.low %v597, %v601
        %v2174 = vcombine.low %v605, %v609
        %v2176 = vunpack.c.l.s4 1983009808
        %v2177 = vunpack.c.0.s8 %v2176
        %v2178 = vlaneseq
        %v2179 = vshrl.u32 %v2178, 7
        %v2180 = vsub.s32 %v2177, %v2179
        %v2181 = vrot.slane %v2173, %v2180
        %v2183 = vunpack.c.l.s4 1983009808
        %v2184 = vunpack.c.0.s8 %v2183
        %v2185 = vlaneseq
        %v2186 = vshrl.u32 %v2185, 7
        %v2187 = vsub.s32 %v2184, %v2186
        %v2188 = vrot.slane %v2174, %v2187
        %v2189 = vcombine.low %v2181, %v2188
        %v2190 = vcombine.low %v613, %v617
        %v2191 = vcombine.low %v621, %v625
        %v2193 = vunpack.c.l.s4 1983009808
        %v2194 = vunpack.c.0.s8 %v2193
        %v2195 = vlaneseq
        %v2196 = vshrl.u32 %v2195, 7
        %v2197 = vsub.s32 %v2194, %v2196
        %v2198 = vrot.slane %v2190, %v2197
        %v2200 = vunpack.c.l.s4 1983009808
        %v2201 = vunpack.c.0.s8 %v2200
        %v2202 = vlaneseq
        %v2203 = vshrl.u32 %v2202, 7
        %v2204 = vsub.s32 %v2201, %v2203
        %v2205 = vrot.slane %v2191, %v2204
        %v2206 = vcombine.low %v2198, %v2205
        %v2207 = vcombine.low %v629, %v633
        %v2208 = vcombine.low %v637, %v641
        %v2210 = vunpack.c.l.s4 1983009808
        %v2211 = vunpack.c.0.s8 %v2210
        %v2212 = vlaneseq
        %v2213 = vshrl.u32 %v2212, 7
        %v2214 = vsub.s32 %v2211, %v2213
        %v2215 = vrot.slane %v2207, %v2214
        %v2217 = vunpack.c.l.s4 1983009808
        %v2218 = vunpack.c.0.s8 %v2217
        %v2219 = vlaneseq
        %v2220 = vshrl.u32 %v2219, 7
        %v2221 = vsub.s32 %v2218, %v2220
        %v2222 = vrot.slane %v2208, %v2221
        %v2223 = vcombine.low %v2215, %v2222
        %v2224 = vcombine.low %v645, %v649
        %v2225 = vcombine.low %v653, %v657
        %v2227 = vunpack.c.l.s4 1983009808
        %v2228 = vunpack.c.0.s8 %v2227
        %v2229 = vlaneseq
        %v2230 = vshrl.u32 %v2229, 7
        %v2231 = vsub.s32 %v2228, %v2230
        %v2232 = vrot.slane %v2224, %v2231
        %v2234 = vunpack.c.l.s4 1983009808
        %v2235 = vunpack.c.0.s8 %v2234
        %v2236 = vlaneseq
        %v2237 = vshrl.u32 %v2236, 7
        %v2238 = vsub.s32 %v2235, %v2237
        %v2239 = vrot.slane %v2225, %v2238
        %v2240 = vcombine.low %v2232, %v2239
        %v2241 = vcombine.low %v661, %v665
        %v2242 = vcombine.low %v669, %v673
        %v2244 = vunpack.c.l.s4 1983009808
        %v2245 = vunpack.c.0.s8 %v2244
        %v2246 = vlaneseq
        %v2247 = vshrl.u32 %v2246, 7
        %v2248 = vsub.s32 %v2245, %v2247
        %v2249 = vrot.slane %v2241, %v2248
        %v2251 = vunpack.c.l.s4 1983009808
        %v2252 = vunpack.c.0.s8 %v2251
        %v2253 = vlaneseq
        %v2254 = vshrl.u32 %v2253, 7
        %v2255 = vsub.s32 %v2252, %v2254
        %v2256 = vrot.slane %v2242, %v2255
        %v2257 = vcombine.low %v2249, %v2256
        %v2258 = vcombine.low %v677, %v681
        %v2259 = vcombine.low %v685, %v689
        %v2261 = vunpack.c.l.s4 1983009808
        %v2262 = vunpack.c.0.s8 %v2261
        %v2263 = vlaneseq
        %v2264 = vshrl.u32 %v2263, 7
        %v2265 = vsub.s32 %v2262, %v2264
        %v2266 = vrot.slane %v2258, %v2265
        %v2268 = vunpack.c.l.s4 1983009808
        %v2269 = vunpack.c.0.s8 %v2268
        %v2270 = vlaneseq
        %v2271 = vshrl.u32 %v2270, 7
        %v2272 = vsub.s32 %v2269, %v2271
        %v2273 = vrot.slane %v2259, %v2272
        %v2274 = vcombine.low %v2266, %v2273
        %v2275 = vcombine.low %v693, %v697
        %v2276 = vcombine.low %v701, %v705
        %v2278 = vunpack.c.l.s4 1983009808
        %v2279 = vunpack.c.0.s8 %v2278
        %v2280 = vlaneseq
        %v2281 = vshrl.u32 %v2280, 7
        %v2282 = vsub.s32 %v2279, %v2281
        %v2283 = vrot.slane %v2275, %v2282
        %v2285 = vunpack.c.l.s4 1983009808
        %v2286 = vunpack.c.0.s8 %v2285
        %v2287 = vlaneseq
        %v2288 = vshrl.u32 %v2287, 7
        %v2289 = vsub.s32 %v2286, %v2288
        %v2290 = vrot.slane %v2276, %v2289
        %v2291 = vcombine.low %v2283, %v2290
        %v2292 = vcombine.low %v709, %v713
        %v2293 = vcombine.low %v717, %v721
        %v2295 = vunpack.c.l.s4 1983009808
        %v2296 = vunpack.c.0.s8 %v2295
        %v2297 = vlaneseq
        %v2298 = vshrl.u32 %v2297, 7
        %v2299 = vsub.s32 %v2296, %v2298
        %v2300 = vrot.slane %v2292, %v2299
        %v2302 = vunpack.c.l.s4 1983009808
        %v2303 = vunpack.c.0.s8 %v2302
        %v2304 = vlaneseq
        %v2305 = vshrl.u32 %v2304, 7
        %v2306 = vsub.s32 %v2303, %v2305
        %v2307 = vrot.slane %v2293, %v2306
        %v2308 = vcombine.low %v2300, %v2307
        %v2309 = vcombine.low %v725, %v729
        %v2310 = vcombine.low %v733, %v737
        %v2312 = vunpack.c.l.s4 1983009808
        %v2313 = vunpack.c.0.s8 %v2312
        %v2314 = vlaneseq
        %v2315 = vshrl.u32 %v2314, 7
        %v2316 = vsub.s32 %v2313, %v2315
        %v2317 = vrot.slane %v2309, %v2316
        %v2319 = vunpack.c.l.s4 1983009808
        %v2320 = vunpack.c.0.s8 %v2319
        %v2321 = vlaneseq
        %v2322 = vshrl.u32 %v2321, 7
        %v2323 = vsub.s32 %v2320, %v2322
        %v2324 = vrot.slane %v2310, %v2323
        %v2325 = vcombine.low %v2317, %v2324
        %v2326 = vcombine.low %v741, %v745
        %v2327 = vcombine.low %v749, %v753
        %v2329 = vunpack.c.l.s4 1983009808
        %v2330 = vunpack.c.0.s8 %v2329
        %v2331 = vlaneseq
        %v2332 = vshrl.u32 %v2331, 7
        %v2333 = vsub.s32 %v2330, %v2332
        %v2334 = vrot.slane %v2326, %v2333
        %v2336 = vunpack.c.l.s4 1983009808
        %v2337 = vunpack.c.0.s8 %v2336
        %v2338 = vlaneseq
        %v2339 = vshrl.u32 %v2338, 7
        %v2340 = vsub.s32 %v2337, %v2339
        %v2341 = vrot.slane %v2327, %v2340
        %v2342 = vcombine.low %v2334, %v2341
        %v2343 = vcombine.low %v757, %v761
        %v2344 = vcombine.low %v765, %v769
        %v2346 = vunpack.c.l.s4 1983009808
        %v2347 = vunpack.c.0.s8 %v2346
        %v2348 = vlaneseq
        %v2349 = vshrl.u32 %v2348, 7
        %v2350 = vsub.s32 %v2347, %v2349
        %v2351 = vrot.slane %v2343, %v2350
        %v2353 = vunpack.c.l.s4 1983009808
        %v2354 = vunpack.c.0.s8 %v2353
        %v2355 = vlaneseq
        %v2356 = vshrl.u32 %v2355, 7
        %v2357 = vsub.s32 %v2354, %v2356
        %v2358 = vrot.slane %v2344, %v2357
        %v2359 = vcombine.low %v2351, %v2358
        %v2360 = vcombine.low %v773, %v777
        %v2361 = vcombine.low %v781, %v785
        %v2363 = vunpack.c.l.s4 1983009808
        %v2364 = vunpack.c.0.s8 %v2363
        %v2365 = vlaneseq
        %v2366 = vshrl.u32 %v2365, 7
        %v2367 = vsub.s32 %v2364, %v2366
        %v2368 = vrot.slane %v2360, %v2367
        %v2370 = vunpack.c.l.s4 1983009808
        %v2371 = vunpack.c.0.s8 %v2370
        %v2372 = vlaneseq
        %v2373 = vshrl.u32 %v2372, 7
        %v2374 = vsub.s32 %v2371, %v2373
        %v2375 = vrot.slane %v2361, %v2374
        %v2376 = vcombine.low %v2368, %v2375
        %v2377 = vcombine.low %v789, %v793
        %v2378 = vcombine.low %v797, %v801
        %v2380 = vunpack.c.l.s4 1983009808
        %v2381 = vunpack.c.0.s8 %v2380
        %v2382 = vlaneseq
        %v2383 = vshrl.u32 %v2382, 7
        %v2384 = vsub.s32 %v2381, %v2383
        %v2385 = vrot.slane %v2377, %v2384
        %v2387 = vunpack.c.l.s4 1983009808
        %v2388 = vunpack.c.0.s8 %v2387
        %v2389 = vlaneseq
        %v2390 = vshrl.u32 %v2389, 7
        %v2391 = vsub.s32 %v2388, %v2390
        %v2392 = vrot.slane %v2378, %v2391
        %v2393 = vcombine.low %v2385, %v2392
        %v2394 = vcombine.low %v805, %v809
        %v2395 = vcombine.low %v813, %v817
        %v2397 = vunpack.c.l.s4 1983009808
        %v2398 = vunpack.c.0.s8 %v2397
        %v2399 = vlaneseq
        %v2400 = vshrl.u32 %v2399, 7
        %v2401 = vsub.s32 %v2398, %v2400
        %v2402 = vrot.slane %v2394, %v2401
        %v2404 = vunpack.c.l.s4 1983009808
        %v2405 = vunpack.c.0.s8 %v2404
        %v2406 = vlaneseq
        %v2407 = vshrl.u32 %v2406, 7
        %v2408 = vsub.s32 %v2405, %v2407
        %v2409 = vrot.slane %v2395, %v2408
        %v2410 = vcombine.low %v2402, %v2409
        %v2411 = vcombine.low %v821, %v825
        %v2412 = vcombine.low %v829, %v833
        %v2414 = vunpack.c.l.s4 1983009808
        %v2415 = vunpack.c.0.s8 %v2414
        %v2416 = vlaneseq
        %v2417 = vshrl.u32 %v2416, 7
        %v2418 = vsub.s32 %v2415, %v2417
        %v2419 = vrot.slane %v2411, %v2418
        %v2421 = vunpack.c.l.s4 1983009808
        %v2422 = vunpack.c.0.s8 %v2421
        %v2423 = vlaneseq
        %v2424 = vshrl.u32 %v2423, 7
        %v2425 = vsub.s32 %v2422, %v2424
        %v2426 = vrot.slane %v2412, %v2425
        %v2427 = vcombine.low %v2419, %v2426
        %v2428 = vcombine.low %v837, %v841
        %v2429 = vcombine.low %v845, %v849
        %v2431 = vunpack.c.l.s4 1983009808
        %v2432 = vunpack.c.0.s8 %v2431
        %v2433 = vlaneseq
        %v2434 = vshrl.u32 %v2433, 7
        %v2435 = vsub.s32 %v2432, %v2434
        %v2436 = vrot.slane %v2428, %v2435
        %v2438 = vunpack.c.l.s4 1983009808
        %v2439 = vunpack.c.0.s8 %v2438
        %v2440 = vlaneseq
        %v2441 = vshrl.u32 %v2440, 7
        %v2442 = vsub.s32 %v2439, %v2441
        %v2443 = vrot.slane %v2429, %v2442
        %v2444 = vcombine.low %v2436, %v2443
        %v2445 = vcombine.low %v853, %v857
        %v2446 = vcombine.low %v861, %v865
        %v2448 = vunpack.c.l.s4 1983009808
        %v2449 = vunpack.c.0.s8 %v2448
        %v2450 = vlaneseq
        %v2451 = vshrl.u32 %v2450, 7
        %v2452 = vsub.s32 %v2449, %v2451
        %v2453 = vrot.slane %v2445, %v2452
        %v2455 = vunpack.c.l.s4 1983009808
        %v2456 = vunpack.c.0.s8 %v2455
        %v2457 = vlaneseq
        %v2458 = vshrl.u32 %v2457, 7
        %v2459 = vsub.s32 %v2456, %v2458
        %v2460 = vrot.slane %v2446, %v2459
        %v2461 = vcombine.low %v2453, %v2460
        %v2462 = vcombine.low %v869, %v873
        %v2463 = vcombine.low %v877, %v881
        %v2465 = vunpack.c.l.s4 1983009808
        %v2466 = vunpack.c.0.s8 %v2465
        %v2467 = vlaneseq
        %v2468 = vshrl.u32 %v2467, 7
        %v2469 = vsub.s32 %v2466, %v2468
        %v2470 = vrot.slane %v2462, %v2469
        %v2472 = vunpack.c.l.s4 1983009808
        %v2473 = vunpack.c.0.s8 %v2472
        %v2474 = vlaneseq
        %v2475 = vshrl.u32 %v2474, 7
        %v2476 = vsub.s32 %v2473, %v2475
        %v2477 = vrot.slane %v2463, %v2476
        %v2478 = vcombine.low %v2470, %v2477
        %v2479 = vcombine.low %v885, %v889
        %v2480 = vcombine.low %v893, %v897
        %v2482 = vunpack.c.l.s4 1983009808
        %v2483 = vunpack.c.0.s8 %v2482
        %v2484 = vlaneseq
        %v2485 = vshrl.u32 %v2484, 7
        %v2486 = vsub.s32 %v2483, %v2485
        %v2487 = vrot.slane %v2479, %v2486
        %v2489 = vunpack.c.l.s4 1983009808
        %v2490 = vunpack.c.0.s8 %v2489
        %v2491 = vlaneseq
        %v2492 = vshrl.u32 %v2491, 7
        %v2493 = vsub.s32 %v2490, %v2492
        %v2494 = vrot.slane %v2480, %v2493
        %v2495 = vcombine.low %v2487, %v2494
        %v2496 = vcombine.low %v901, %v905
        %v2497 = vcombine.low %v909, %v913
        %v2499 = vunpack.c.l.s4 1983009808
        %v2500 = vunpack.c.0.s8 %v2499
        %v2501 = vlaneseq
        %v2502 = vshrl.u32 %v2501, 7
        %v2503 = vsub.s32 %v2500, %v2502
        %v2504 = vrot.slane %v2496, %v2503
        %v2506 = vunpack.c.l.s4 1983009808
        %v2507 = vunpack.c.0.s8 %v2506
        %v2508 = vlaneseq
        %v2509 = vshrl.u32 %v2508, 7
        %v2510 = vsub.s32 %v2507, %v2509
        %v2511 = vrot.slane %v2497, %v2510
        %v2512 = vcombine.low %v2504, %v2511
        %v2513 = vcombine.low %v917, %v921
        %v2514 = vcombine.low %v925, %v929
        %v2516 = vunpack.c.l.s4 1983009808
        %v2517 = vunpack.c.0.s8 %v2516
        %v2518 = vlaneseq
        %v2519 = vshrl.u32 %v2518, 7
        %v2520 = vsub.s32 %v2517, %v2519
        %v2521 = vrot.slane %v2513, %v2520
        %v2523 = vunpack.c.l.s4 1983009808
        %v2524 = vunpack.c.0.s8 %v2523
        %v2525 = vlaneseq
        %v2526 = vshrl.u32 %v2525, 7
        %v2527 = vsub.s32 %v2524, %v2526
        %v2528 = vrot.slane %v2514, %v2527
        %v2529 = vcombine.low %v2521, %v2528
        %v2530 = vcombine.low %v933, %v937
        %v2531 = vcombine.low %v941, %v945
        %v2533 = vunpack.c.l.s4 1983009808
        %v2534 = vunpack.c.0.s8 %v2533
        %v2535 = vlaneseq
        %v2536 = vshrl.u32 %v2535, 7
        %v2537 = vsub.s32 %v2534, %v2536
        %v2538 = vrot.slane %v2530, %v2537
        %v2540 = vunpack.c.l.s4 1983009808
        %v2541 = vunpack.c.0.s8 %v2540
        %v2542 = vlaneseq
        %v2543 = vshrl.u32 %v2542, 7
        %v2544 = vsub.s32 %v2541, %v2543
        %v2545 = vrot.slane %v2531, %v2544
        %v2546 = vcombine.low %v2538, %v2545
        %v2547 = vcombine.low %v949, %v953
        %v2548 = vcombine.low %v957, %v961
        %v2550 = vunpack.c.l.s4 1983009808
        %v2551 = vunpack.c.0.s8 %v2550
        %v2552 = vlaneseq
        %v2553 = vshrl.u32 %v2552, 7
        %v2554 = vsub.s32 %v2551, %v2553
        %v2555 = vrot.slane %v2547, %v2554
        %v2557 = vunpack.c.l.s4 1983009808
        %v2558 = vunpack.c.0.s8 %v2557
        %v2559 = vlaneseq
        %v2560 = vshrl.u32 %v2559, 7
        %v2561 = vsub.s32 %v2558, %v2560
        %v2562 = vrot.slane %v2548, %v2561
        %v2563 = vcombine.low %v2555, %v2562
        %v2564 = vcombine.low %v965, %v969
        %v2565 = vcombine.low %v973, %v977
        %v2567 = vunpack.c.l.s4 1983009808
        %v2568 = vunpack.c.0.s8 %v2567
        %v2569 = vlaneseq
        %v2570 = vshrl.u32 %v2569, 7
        %v2571 = vsub.s32 %v2568, %v2570
        %v2572 = vrot.slane %v2564, %v2571
        %v2574 = vunpack.c.l.s4 1983009808
        %v2575 = vunpack.c.0.s8 %v2574
        %v2576 = vlaneseq
        %v2577 = vshrl.u32 %v2576, 7
        %v2578 = vsub.s32 %v2575, %v2577
        %v2579 = vrot.slane %v2565, %v2578
        %v2580 = vcombine.low %v2572, %v2579
        %v2581 = vcombine.low %v981, %v985
        %v2582 = vcombine.low %v989, %v993
        %v2584 = vunpack.c.l.s4 1983009808
        %v2585 = vunpack.c.0.s8 %v2584
        %v2586 = vlaneseq
        %v2587 = vshrl.u32 %v2586, 7
        %v2588 = vsub.s32 %v2585, %v2587
        %v2589 = vrot.slane %v2581, %v2588
        %v2591 = vunpack.c.l.s4 1983009808
        %v2592 = vunpack.c.0.s8 %v2591
        %v2593 = vlaneseq
        %v2594 = vshrl.u32 %v2593, 7
        %v2595 = vsub.s32 %v2592, %v2594
        %v2596 = vrot.slane %v2582, %v2595
        %v2597 = vcombine.low %v2589, %v2596
        %v2598 = vcombine.low %v997, %v1001
        %v2599 = vcombine.low %v1005, %v1009
        %v2601 = vunpack.c.l.s4 1983009808
        %v2602 = vunpack.c.0.s8 %v2601
        %v2603 = vlaneseq
        %v2604 = vshrl.u32 %v2603, 7
        %v2605 = vsub.s32 %v2602, %v2604
        %v2606 = vrot.slane %v2598, %v2605
        %v2608 = vunpack.c.l.s4 1983009808
        %v2609 = vunpack.c.0.s8 %v2608
        %v2610 = vlaneseq
        %v2611 = vshrl.u32 %v2610, 7
        %v2612 = vsub.s32 %v2609, %v2611
        %v2613 = vrot.slane %v2599, %v2612
        %v2614 = vcombine.low %v2606, %v2613
        %v2615 = vcombine.low %v1013, %v1017
        %v2616 = vcombine.low %v1021, %v1025
        %v2618 = vunpack.c.l.s4 1983009808
        %v2619 = vunpack.c.0.s8 %v2618
        %v2620 = vlaneseq
        %v2621 = vshrl.u32 %v2620, 7
        %v2622 = vsub.s32 %v2619, %v2621
        %v2623 = vrot.slane %v2615, %v2622
        %v2625 = vunpack.c.l.s4 1983009808
        %v2626 = vunpack.c.0.s8 %v2625
        %v2627 = vlaneseq
        %v2628 = vshrl.u32 %v2627, 7
        %v2629 = vsub.s32 %v2626, %v2628
        %v2630 = vrot.slane %v2616, %v2629
        %v2631 = vcombine.low %v2623, %v2630
        %v2632 = vcombine.low %v1029, %v1033
        %v2633 = vcombine.low %v1037, %v1041
        %v2635 = vunpack.c.l.s4 1983009808
        %v2636 = vunpack.c.0.s8 %v2635
        %v2637 = vlaneseq
        %v2638 = vshrl.u32 %v2637, 7
        %v2639 = vsub.s32 %v2636, %v2638
        %v2640 = vrot.slane %v2632, %v2639
        %v2642 = vunpack.c.l.s4 1983009808
        %v2643 = vunpack.c.0.s8 %v2642
        %v2644 = vlaneseq
        %v2645 = vshrl.u32 %v2644, 7
        %v2646 = vsub.s32 %v2643, %v2645
        %v2647 = vrot.slane %v2633, %v2646
        %v2648 = vcombine.low %v2640, %v2647
        %v2649 = vcombine.low %v1045, %v1049
        %v2650 = vcombine.low %v1053, %v1057
        %v2652 = vunpack.c.l.s4 1983009808
        %v2653 = vunpack.c.0.s8 %v2652
        %v2654 = vlaneseq
        %v2655 = vshrl.u32 %v2654, 7
        %v2656 = vsub.s32 %v2653, %v2655
        %v2657 = vrot.slane %v2649, %v2656
        %v2659 = vunpack.c.l.s4 1983009808
        %v2660 = vunpack.c.0.s8 %v2659
        %v2661 = vlaneseq
        %v2662 = vshrl.u32 %v2661, 7
        %v2663 = vsub.s32 %v2660, %v2662
        %v2664 = vrot.slane %v2650, %v2663
        %v2665 = vcombine.low %v2657, %v2664
        %v2666 = vcombine.low %v1061, %v1065
        %v2667 = vcombine.low %v1069, %v1073
        %v2669 = vunpack.c.l.s4 1983009808
        %v2670 = vunpack.c.0.s8 %v2669
        %v2671 = vlaneseq
        %v2672 = vshrl.u32 %v2671, 7
        %v2673 = vsub.s32 %v2670, %v2672
        %v2674 = vrot.slane %v2666, %v2673
        %v2676 = vunpack.c.l.s4 1983009808
        %v2677 = vunpack.c.0.s8 %v2676
        %v2678 = vlaneseq
        %v2679 = vshrl.u32 %v2678, 7
        %v2680 = vsub.s32 %v2677, %v2679
        %v2681 = vrot.slane %v2667, %v2680
        %v2682 = vcombine.low %v2674, %v2681
        %v2683 = vcombine.low %v1077, %v1081
        %v2684 = vcombine.low %v1085, %v1089
        %v2686 = vunpack.c.l.s4 1983009808
        %v2687 = vunpack.c.0.s8 %v2686
        %v2688 = vlaneseq
        %v2689 = vshrl.u32 %v2688, 7
        %v2690 = vsub.s32 %v2687, %v2689
        %v2691 = vrot.slane %v2683, %v2690
        %v2693 = vunpack.c.l.s4 1983009808
        %v2694 = vunpack.c.0.s8 %v2693
        %v2695 = vlaneseq
        %v2696 = vshrl.u32 %v2695, 7
        %v2697 = vsub.s32 %v2694, %v2696
        %v2698 = vrot.slane %v2684, %v2697
        %v2699 = vcombine.low %v2691, %v2698
        %v2700 = vcombine.low %v1093, %v1097
        %v2701 = vcombine.low %v1101, %v1105
        %v2703 = vunpack.c.l.s4 1983009808
        %v2704 = vunpack.c.0.s8 %v2703
        %v2705 = vlaneseq
        %v2706 = vshrl.u32 %v2705, 7
        %v2707 = vsub.s32 %v2704, %v2706
        %v2708 = vrot.slane %v2700, %v2707
        %v2710 = vunpack.c.l.s4 1983009808
        %v2711 = vunpack.c.0.s8 %v2710
        %v2712 = vlaneseq
        %v2713 = vshrl.u32 %v2712, 7
        %v2714 = vsub.s32 %v2711, %v2713
        %v2715 = vrot.slane %v2701, %v2714
        %v2716 = vcombine.low %v2708, %v2715
        %v2717 = vcombine.low %v1109, %v1113
        %v2718 = vcombine.low %v1117, %v1121
        %v2720 = vunpack.c.l.s4 1983009808
        %v2721 = vunpack.c.0.s8 %v2720
        %v2722 = vlaneseq
        %v2723 = vshrl.u32 %v2722, 7
        %v2724 = vsub.s32 %v2721, %v2723
        %v2725 = vrot.slane %v2717, %v2724
        %v2727 = vunpack.c.l.s4 1983009808
        %v2728 = vunpack.c.0.s8 %v2727
        %v2729 = vlaneseq
        %v2730 = vshrl.u32 %v2729, 7
        %v2731 = vsub.s32 %v2728, %v2730
        %v2732 = vrot.slane %v2718, %v2731
        %v2733 = vcombine.low %v2725, %v2732
        %v2734 = vcombine.low %v1125, %v1129
        %v2735 = vcombine.low %v1133, %v1137
        %v2737 = vunpack.c.l.s4 1983009808
        %v2738 = vunpack.c.0.s8 %v2737
        %v2739 = vlaneseq
        %v2740 = vshrl.u32 %v2739, 7
        %v2741 = vsub.s32 %v2738, %v2740
        %v2742 = vrot.slane %v2734, %v2741
        %v2744 = vunpack.c.l.s4 1983009808
        %v2745 = vunpack.c.0.s8 %v2744
        %v2746 = vlaneseq
        %v2747 = vshrl.u32 %v2746, 7
        %v2748 = vsub.s32 %v2745, %v2747
        %v2749 = vrot.slane %v2735, %v2748
        %v2750 = vcombine.low %v2742, %v2749
        %v2751 = vcombine.low %v1141, %v1145
        %v2752 = vcombine.low %v1149, %v1153
        %v2754 = vunpack.c.l.s4 1983009808
        %v2755 = vunpack.c.0.s8 %v2754
        %v2756 = vlaneseq
        %v2757 = vshrl.u32 %v2756, 7
        %v2758 = vsub.s32 %v2755, %v2757
        %v2759 = vrot.slane %v2751, %v2758
        %v2761 = vunpack.c.l.s4 1983009808
        %v2762 = vunpack.c.0.s8 %v2761
        %v2763 = vlaneseq
        %v2764 = vshrl.u32 %v2763, 7
        %v2765 = vsub.s32 %v2762, %v2764
        %v2766 = vrot.slane %v2752, %v2765
        %v2767 = vcombine.low %v2759, %v2766
        %v2768 = vcombine.low %v1157, %v1161
        %v2769 = vcombine.low %v1165, %v1169
        %v2771 = vunpack.c.l.s4 1983009808
        %v2772 = vunpack.c.0.s8 %v2771
        %v2773 = vlaneseq
        %v2774 = vshrl.u32 %v2773, 7
        %v2775 = vsub.s32 %v2772, %v2774
        %v2776 = vrot.slane %v2768, %v2775
        %v2778 = vunpack.c.l.s4 1983009808
        %v2779 = vunpack.c.0.s8 %v2778
        %v2780 = vlaneseq
        %v2781 = vshrl.u32 %v2780, 7
        %v2782 = vsub.s32 %v2779, %v2781
        %v2783 = vrot.slane %v2769, %v2782
        %v2784 = vcombine.low %v2776, %v2783
        %v2785 = vcombine.low %v1173, %v1177
        %v2786 = vcombine.low %v1181, %v1185
        %v2788 = vunpack.c.l.s4 1983009808
        %v2789 = vunpack.c.0.s8 %v2788
        %v2790 = vlaneseq
        %v2791 = vshrl.u32 %v2790, 7
        %v2792 = vsub.s32 %v2789, %v2791
        %v2793 = vrot.slane %v2785, %v2792
        %v2795 = vunpack.c.l.s4 1983009808
        %v2796 = vunpack.c.0.s8 %v2795
        %v2797 = vlaneseq
        %v2798 = vshrl.u32 %v2797, 7
        %v2799 = vsub.s32 %v2796, %v2798
        %v2800 = vrot.slane %v2786, %v2799
        %v2801 = vcombine.low %v2793, %v2800
        %v2802 = vcombine.low %v1189, %v1193
        %v2803 = vcombine.low %v1197, %v1201
        %v2805 = vunpack.c.l.s4 1983009808
        %v2806 = vunpack.c.0.s8 %v2805
        %v2807 = vlaneseq
        %v2808 = vshrl.u32 %v2807, 7
        %v2809 = vsub.s32 %v2806, %v2808
        %v2810 = vrot.slane %v2802, %v2809
        %v2812 = vunpack.c.l.s4 1983009808
        %v2813 = vunpack.c.0.s8 %v2812
        %v2814 = vlaneseq
        %v2815 = vshrl.u32 %v2814, 7
        %v2816 = vsub.s32 %v2813, %v2815
        %v2817 = vrot.slane %v2803, %v2816
        %v2818 = vcombine.low %v2810, %v2817
        %v2819 = vcombine.low %v1205, %v1209
        %v2820 = vcombine.low %v1213, %v1217
        %v2822 = vunpack.c.l.s4 1983009808
        %v2823 = vunpack.c.0.s8 %v2822
        %v2824 = vlaneseq
        %v2825 = vshrl.u32 %v2824, 7
        %v2826 = vsub.s32 %v2823, %v2825
        %v2827 = vrot.slane %v2819, %v2826
        %v2829 = vunpack.c.l.s4 1983009808
        %v2830 = vunpack.c.0.s8 %v2829
        %v2831 = vlaneseq
        %v2832 = vshrl.u32 %v2831, 7
        %v2833 = vsub.s32 %v2830, %v2832
        %v2834 = vrot.slane %v2820, %v2833
        %v2835 = vcombine.low %v2827, %v2834
        %v2836 = vcombine.low %v1221, %v1225
        %v2837 = vcombine.low %v1229, %v1233
        %v2839 = vunpack.c.l.s4 1983009808
        %v2840 = vunpack.c.0.s8 %v2839
        %v2841 = vlaneseq
        %v2842 = vshrl.u32 %v2841, 7
        %v2843 = vsub.s32 %v2840, %v2842
        %v2844 = vrot.slane %v2836, %v2843
        %v2846 = vunpack.c.l.s4 1983009808
        %v2847 = vunpack.c.0.s8 %v2846
        %v2848 = vlaneseq
        %v2849 = vshrl.u32 %v2848, 7
        %v2850 = vsub.s32 %v2847, %v2849
        %v2851 = vrot.slane %v2837, %v2850
        %v2852 = vcombine.low %v2844, %v2851
        %v2853 = vcombine.low %v1237, %v1241
        %v2854 = vcombine.low %v1245, %v1249
        %v2856 = vunpack.c.l.s4 1983009808
        %v2857 = vunpack.c.0.s8 %v2856
        %v2858 = vlaneseq
        %v2859 = vshrl.u32 %v2858, 7
        %v2860 = vsub.s32 %v2857, %v2859
        %v2861 = vrot.slane %v2853, %v2860
        %v2863 = vunpack.c.l.s4 1983009808
        %v2864 = vunpack.c.0.s8 %v2863
        %v2865 = vlaneseq
        %v2866 = vshrl.u32 %v2865, 7
        %v2867 = vsub.s32 %v2864, %v2866
        %v2868 = vrot.slane %v2854, %v2867
        %v2869 = vcombine.low %v2861, %v2868
        %v2870 = vcombine.low %v1253, %v1257
        %v2871 = vcombine.low %v1261, %v1265
        %v2873 = vunpack.c.l.s4 1983009808
        %v2874 = vunpack.c.0.s8 %v2873
        %v2875 = vlaneseq
        %v2876 = vshrl.u32 %v2875, 7
        %v2877 = vsub.s32 %v2874, %v2876
        %v2878 = vrot.slane %v2870, %v2877
        %v2880 = vunpack.c.l.s4 1983009808
        %v2881 = vunpack.c.0.s8 %v2880
        %v2882 = vlaneseq
        %v2883 = vshrl.u32 %v2882, 7
        %v2884 = vsub.s32 %v2881, %v2883
        %v2885 = vrot.slane %v2871, %v2884
        %v2886 = vcombine.low %v2878, %v2885
        %v2887 = vcombine.low %v1269, %v1273
        %v2888 = vcombine.low %v1277, %v1281
        %v2890 = vunpack.c.l.s4 1983009808
        %v2891 = vunpack.c.0.s8 %v2890
        %v2892 = vlaneseq
        %v2893 = vshrl.u32 %v2892, 7
        %v2894 = vsub.s32 %v2891, %v2893
        %v2895 = vrot.slane %v2887, %v2894
        %v2897 = vunpack.c.l.s4 1983009808
        %v2898 = vunpack.c.0.s8 %v2897
        %v2899 = vlaneseq
        %v2900 = vshrl.u32 %v2899, 7
        %v2901 = vsub.s32 %v2898, %v2900
        %v2902 = vrot.slane %v2888, %v2901
        %v2903 = vcombine.low %v2895, %v2902
        %v2904 = vcombine.low %v1285, %v1289
        %v2905 = vcombine.low %v1293, %v1297
        %v2907 = vunpack.c.l.s4 1983009808
        %v2908 = vunpack.c.0.s8 %v2907
        %v2909 = vlaneseq
        %v2910 = vshrl.u32 %v2909, 7
        %v2911 = vsub.s32 %v2908, %v2910
        %v2912 = vrot.slane %v2904, %v2911
        %v2914 = vunpack.c.l.s4 1983009808
        %v2915 = vunpack.c.0.s8 %v2914
        %v2916 = vlaneseq
        %v2917 = vshrl.u32 %v2916, 7
        %v2918 = vsub.s32 %v2915, %v2917
        %v2919 = vrot.slane %v2905, %v2918
        %v2920 = vcombine.low %v2912, %v2919
        %v2921 = vcombine.low %v1301, %v1305
        %v2922 = vcombine.low %v1309, %v1313
        %v2924 = vunpack.c.l.s4 1983009808
        %v2925 = vunpack.c.0.s8 %v2924
        %v2926 = vlaneseq
        %v2927 = vshrl.u32 %v2926, 7
        %v2928 = vsub.s32 %v2925, %v2927
        %v2929 = vrot.slane %v2921, %v2928
        %v2931 = vunpack.c.l.s4 1983009808
        %v2932 = vunpack.c.0.s8 %v2931
        %v2933 = vlaneseq
        %v2934 = vshrl.u32 %v2933, 7
        %v2935 = vsub.s32 %v2932, %v2934
        %v2936 = vrot.slane %v2922, %v2935
        %v2937 = vcombine.low %v2929, %v2936
        %v2938 = vcombine.low %v1317, %v1321
        %v2939 = vcombine.low %v1325, %v1329
        %v2941 = vunpack.c.l.s4 1983009808
        %v2942 = vunpack.c.0.s8 %v2941
        %v2943 = vlaneseq
        %v2944 = vshrl.u32 %v2943, 7
        %v2945 = vsub.s32 %v2942, %v2944
        %v2946 = vrot.slane %v2938, %v2945
        %v2948 = vunpack.c.l.s4 1983009808
        %v2949 = vunpack.c.0.s8 %v2948
        %v2950 = vlaneseq
        %v2951 = vshrl.u32 %v2950, 7
        %v2952 = vsub.s32 %v2949, %v2951
        %v2953 = vrot.slane %v2939, %v2952
        %v2954 = vcombine.low %v2946, %v2953
        %v2955 = vcombine.low %v1333, %v1337
        %v2956 = vcombine.low %v1341, %v1345
        %v2958 = vunpack.c.l.s4 1983009808
        %v2959 = vunpack.c.0.s8 %v2958
        %v2960 = vlaneseq
        %v2961 = vshrl.u32 %v2960, 7
        %v2962 = vsub.s32 %v2959, %v2961
        %v2963 = vrot.slane %v2955, %v2962
        %v2965 = vunpack.c.l.s4 1983009808
        %v2966 = vunpack.c.0.s8 %v2965
        %v2967 = vlaneseq
        %v2968 = vshrl.u32 %v2967, 7
        %v2969 = vsub.s32 %v2966, %v2968
        %v2970 = vrot.slane %v2956, %v2969
        %v2971 = vcombine.low %v2963, %v2970
        %v2972 = vcombine.low %v1349, %v1353
        %v2973 = vcombine.low %v1357, %v1361
        %v2975 = vunpack.c.l.s4 1983009808
        %v2976 = vunpack.c.0.s8 %v2975
        %v2977 = vlaneseq
        %v2978 = vshrl.u32 %v2977, 7
        %v2979 = vsub.s32 %v2976, %v2978
        %v2980 = vrot.slane %v2972, %v2979
        %v2982 = vunpack.c.l.s4 1983009808
        %v2983 = vunpack.c.0.s8 %v2982
        %v2984 = vlaneseq
        %v2985 = vshrl.u32 %v2984, 7
        %v2986 = vsub.s32 %v2983, %v2985
        %v2987 = vrot.slane %v2973, %v2986
        %v2988 = vcombine.low %v2980, %v2987
        %v2989 = vcombine.low %v1365, %v1369
        %v2990 = vcombine.low %v1373, %v1377
        %v2992 = vunpack.c.l.s4 1983009808
        %v2993 = vunpack.c.0.s8 %v2992
        %v2994 = vlaneseq
        %v2995 = vshrl.u32 %v2994, 7
        %v2996 = vsub.s32 %v2993, %v2995
        %v2997 = vrot.slane %v2989, %v2996
        %v2999 = vunpack.c.l.s4 1983009808
        %v3000 = vunpack.c.0.s8 %v2999
        %v3001 = vlaneseq
        %v3002 = vshrl.u32 %v3001, 7
        %v3003 = vsub.s32 %v3000, %v3002
        %v3004 = vrot.slane %v2990, %v3003
        %v3005 = vcombine.low %v2997, %v3004
        %v3006 = vcombine.low %v1381, %v1385
        %v3007 = vcombine.low %v1389, %v1393
        %v3009 = vunpack.c.l.s4 1983009808
        %v3010 = vunpack.c.0.s8 %v3009
        %v3011 = vlaneseq
        %v3012 = vshrl.u32 %v3011, 7
        %v3013 = vsub.s32 %v3010, %v3012
        %v3014 = vrot.slane %v3006, %v3013
        %v3016 = vunpack.c.l.s4 1983009808
        %v3017 = vunpack.c.0.s8 %v3016
        %v3018 = vlaneseq
        %v3019 = vshrl.u32 %v3018, 7
        %v3020 = vsub.s32 %v3017, %v3019
        %v3021 = vrot.slane %v3007, %v3020
        %v3022 = vcombine.low %v3014, %v3021
        %v3023 = vcombine.low %v1397, %v1401
        %v3024 = vcombine.low %v1405, %v1409
        %v3026 = vunpack.c.l.s4 1983009808
        %v3027 = vunpack.c.0.s8 %v3026
        %v3028 = vlaneseq
        %v3029 = vshrl.u32 %v3028, 7
        %v3030 = vsub.s32 %v3027, %v3029
        %v3031 = vrot.slane %v3023, %v3030
        %v3033 = vunpack.c.l.s4 1983009808
        %v3034 = vunpack.c.0.s8 %v3033
        %v3035 = vlaneseq
        %v3036 = vshrl.u32 %v3035, 7
        %v3037 = vsub.s32 %v3034, %v3036
        %v3038 = vrot.slane %v3024, %v3037
        %v3039 = vcombine.low %v3031, %v3038
        %v3040 = vcombine.low %v1413, %v1417
        %v3041 = vcombine.low %v1421, %v1425
        %v3043 = vunpack.c.l.s4 1983009808
        %v3044 = vunpack.c.0.s8 %v3043
        %v3045 = vlaneseq
        %v3046 = vshrl.u32 %v3045, 7
        %v3047 = vsub.s32 %v3044, %v3046
        %v3048 = vrot.slane %v3040, %v3047
        %v3050 = vunpack.c.l.s4 1983009808
        %v3051 = vunpack.c.0.s8 %v3050
        %v3052 = vlaneseq
        %v3053 = vshrl.u32 %v3052, 7
        %v3054 = vsub.s32 %v3051, %v3053
        %v3055 = vrot.slane %v3041, %v3054
        %v3056 = vcombine.low %v3048, %v3055
        %v3057 = vcombine.low %v1429, %v1433
        %v3058 = vcombine.low %v1437, %v1441
        %v3060 = vunpack.c.l.s4 1983009808
        %v3061 = vunpack.c.0.s8 %v3060
        %v3062 = vlaneseq
        %v3063 = vshrl.u32 %v3062, 7
        %v3064 = vsub.s32 %v3061, %v3063
        %v3065 = vrot.slane %v3057, %v3064
        %v3067 = vunpack.c.l.s4 1983009808
        %v3068 = vunpack.c.0.s8 %v3067
        %v3069 = vlaneseq
        %v3070 = vshrl.u32 %v3069, 7
        %v3071 = vsub.s32 %v3068, %v3070
        %v3072 = vrot.slane %v3058, %v3071
        %v3073 = vcombine.low %v3065, %v3072
        %v3074 = vcombine.low %v1445, %v1449
        %v3075 = vcombine.low %v1453, %v1457
        %v3077 = vunpack.c.l.s4 1983009808
        %v3078 = vunpack.c.0.s8 %v3077
        %v3079 = vlaneseq
        %v3080 = vshrl.u32 %v3079, 7
        %v3081 = vsub.s32 %v3078, %v3080
        %v3082 = vrot.slane %v3074, %v3081
        %v3084 = vunpack.c.l.s4 1983009808
        %v3085 = vunpack.c.0.s8 %v3084
        %v3086 = vlaneseq
        %v3087 = vshrl.u32 %v3086, 7
        %v3088 = vsub.s32 %v3085, %v3087
        %v3089 = vrot.slane %v3075, %v3088
        %v3090 = vcombine.low %v3082, %v3089
        %v3091 = vcombine.low %v1461, %v1465
        %v3092 = vcombine.low %v1469, %v1473
        %v3094 = vunpack.c.l.s4 1983009808
        %v3095 = vunpack.c.0.s8 %v3094
        %v3096 = vlaneseq
        %v3097 = vshrl.u32 %v3096, 7
        %v3098 = vsub.s32 %v3095, %v3097
        %v3099 = vrot.slane %v3091, %v3098
        %v3101 = vunpack.c.l.s4 1983009808
        %v3102 = vunpack.c.0.s8 %v3101
        %v3103 = vlaneseq
        %v3104 = vshrl.u32 %v3103, 7
        %v3105 = vsub.s32 %v3102, %v3104
        %v3106 = vrot.slane %v3092, %v3105
        %v3107 = vcombine.low %v3099, %v3106
        %v3108 = vcombine.low %v1477, %v1481
        %v3109 = vcombine.low %v1485, %v1489
        %v3111 = vunpack.c.l.s4 1983009808
        %v3112 = vunpack.c.0.s8 %v3111
        %v3113 = vlaneseq
        %v3114 = vshrl.u32 %v3113, 7
        %v3115 = vsub.s32 %v3112, %v3114
        %v3116 = vrot.slane %v3108, %v3115
        %v3118 = vunpack.c.l.s4 1983009808
        %v3119 = vunpack.c.0.s8 %v3118
        %v3120 = vlaneseq
        %v3121 = vshrl.u32 %v3120, 7
        %v3122 = vsub.s32 %v3119, %v3121
        %v3123 = vrot.slane %v3109, %v3122
        %v3124 = vcombine.low %v3116, %v3123
        %v3125 = vcombine.low %v1493, %v1497
        %v3126 = vcombine.low %v1501, %v1505
        %v3128 = vunpack.c.l.s4 1983009808
        %v3129 = vunpack.c.0.s8 %v3128
        %v3130 = vlaneseq
        %v3131 = vshrl.u32 %v3130, 7
        %v3132 = vsub.s32 %v3129, %v3131
        %v3133 = vrot.slane %v3125, %v3132
        %v3135 = vunpack.c.l.s4 1983009808
        %v3136 = vunpack.c.0.s8 %v3135
        %v3137 = vlaneseq
        %v3138 = vshrl.u32 %v3137, 7
        %v3139 = vsub.s32 %v3136, %v3138
        %v3140 = vrot.slane %v3126, %v3139
        %v3141 = vcombine.low %v3133, %v3140
        %v3142 = vcombine.low %v1509, %v1513
        %v3143 = vcombine.low %v1517, %v1521
        %v3145 = vunpack.c.l.s4 1983009808
        %v3146 = vunpack.c.0.s8 %v3145
        %v3147 = vlaneseq
        %v3148 = vshrl.u32 %v3147, 7
        %v3149 = vsub.s32 %v3146, %v3148
        %v3150 = vrot.slane %v3142, %v3149
        %v3152 = vunpack.c.l.s4 1983009808
        %v3153 = vunpack.c.0.s8 %v3152
        %v3154 = vlaneseq
        %v3155 = vshrl.u32 %v3154, 7
        %v3156 = vsub.s32 %v3153, %v3155
        %v3157 = vrot.slane %v3143, %v3156
        %v3158 = vcombine.low %v3150, %v3157
        %v3159 = vcombine.low %v1525, %v1529
        %v3160 = vcombine.low %v1533, %v1537
        %v3162 = vunpack.c.l.s4 1983009808
        %v3163 = vunpack.c.0.s8 %v3162
        %v3164 = vlaneseq
        %v3165 = vshrl.u32 %v3164, 7
        %v3166 = vsub.s32 %v3163, %v3165
        %v3167 = vrot.slane %v3159, %v3166
        %v3169 = vunpack.c.l.s4 1983009808
        %v3170 = vunpack.c.0.s8 %v3169
        %v3171 = vlaneseq
        %v3172 = vshrl.u32 %v3171, 7
        %v3173 = vsub.s32 %v3170, %v3172
        %v3174 = vrot.slane %v3160, %v3173
        %v3175 = vcombine.low %v3167, %v3174
        %v3176 = vcombine.low %v1541, %v1545
        %v3177 = vcombine.low %v1549, %v1553
        %v3179 = vunpack.c.l.s4 1983009808
        %v3180 = vunpack.c.0.s8 %v3179
        %v3181 = vlaneseq
        %v3182 = vshrl.u32 %v3181, 7
        %v3183 = vsub.s32 %v3180, %v3182
        %v3184 = vrot.slane %v3176, %v3183
        %v3186 = vunpack.c.l.s4 1983009808
        %v3187 = vunpack.c.0.s8 %v3186
        %v3188 = vlaneseq
        %v3189 = vshrl.u32 %v3188, 7
        %v3190 = vsub.s32 %v3187, %v3189
        %v3191 = vrot.slane %v3177, %v3190
        %v3192 = vcombine.low %v3184, %v3191
        %v3193 = vcombine.low %v1557, %v1561
        %v3194 = vcombine.low %v1565, %v1569
        %v3196 = vunpack.c.l.s4 1983009808
        %v3197 = vunpack.c.0.s8 %v3196
        %v3198 = vlaneseq
        %v3199 = vshrl.u32 %v3198, 7
        %v3200 = vsub.s32 %v3197, %v3199
        %v3201 = vrot.slane %v3193, %v3200
        %v3203 = vunpack.c.l.s4 1983009808
        %v3204 = vunpack.c.0.s8 %v3203
        %v3205 = vlaneseq
        %v3206 = vshrl.u32 %v3205, 7
        %v3207 = vsub.s32 %v3204, %v3206
        %v3208 = vrot.slane %v3194, %v3207
        %v3209 = vcombine.low %v3201, %v3208
        %v3210 = vcombine.low %v1573, %v1577
        %v3211 = vcombine.low %v1581, %v1585
        %v3213 = vunpack.c.l.s4 1983009808
        %v3214 = vunpack.c.0.s8 %v3213
        %v3215 = vlaneseq
        %v3216 = vshrl.u32 %v3215, 7
        %v3217 = vsub.s32 %v3214, %v3216
        %v3218 = vrot.slane %v3210, %v3217
        %v3220 = vunpack.c.l.s4 1983009808
        %v3221 = vunpack.c.0.s8 %v3220
        %v3222 = vlaneseq
        %v3223 = vshrl.u32 %v3222, 7
        %v3224 = vsub.s32 %v3221, %v3223
        %v3225 = vrot.slane %v3211, %v3224
        %v3226 = vcombine.low %v3218, %v3225
        %v3227 = vcombine.low %v1589, %v1593
        %v3228 = vcombine.low %v1597, %v1601
        %v3230 = vunpack.c.l.s4 1983009808
        %v3231 = vunpack.c.0.s8 %v3230
        %v3232 = vlaneseq
        %v3233 = vshrl.u32 %v3232, 7
        %v3234 = vsub.s32 %v3231, %v3233
        %v3235 = vrot.slane %v3227, %v3234
        %v3237 = vunpack.c.l.s4 1983009808
        %v3238 = vunpack.c.0.s8 %v3237
        %v3239 = vlaneseq
        %v3240 = vshrl.u32 %v3239, 7
        %v3241 = vsub.s32 %v3238, %v3240
        %v3242 = vrot.slane %v3228, %v3241
        %v3243 = vcombine.low %v3235, %v3242
        %v3244 = vcombine.low %v1605, %v1609
        %v3245 = vcombine.low %v1613, %v1617
        %v3247 = vunpack.c.l.s4 1983009808
        %v3248 = vunpack.c.0.s8 %v3247
        %v3249 = vlaneseq
        %v3250 = vshrl.u32 %v3249, 7
        %v3251 = vsub.s32 %v3248, %v3250
        %v3252 = vrot.slane %v3244, %v3251
        %v3254 = vunpack.c.l.s4 1983009808
        %v3255 = vunpack.c.0.s8 %v3254
        %v3256 = vlaneseq
        %v3257 = vshrl.u32 %v3256, 7
        %v3258 = vsub.s32 %v3255, %v3257
        %v3259 = vrot.slane %v3245, %v3258
        %v3260 = vcombine.low %v3252, %v3259
        %v3261 = vcombine.low %v1621, %v1625
        %v3262 = vcombine.low %v1629, %v1633
        %v3264 = vunpack.c.l.s4 1983009808
        %v3265 = vunpack.c.0.s8 %v3264
        %v3266 = vlaneseq
        %v3267 = vshrl.u32 %v3266, 7
        %v3268 = vsub.s32 %v3265, %v3267
        %v3269 = vrot.slane %v3261, %v3268
        %v3271 = vunpack.c.l.s4 1983009808
        %v3272 = vunpack.c.0.s8 %v3271
        %v3273 = vlaneseq
        %v3274 = vshrl.u32 %v3273, 7
        %v3275 = vsub.s32 %v3272, %v3274
        %v3276 = vrot.slane %v3262, %v3275
        %v3277 = vcombine.low %v3269, %v3276
        %v3278 = vcombine.low %v1637, %v1641
        %v3279 = vcombine.low %v1645, %v1649
        %v3281 = vunpack.c.l.s4 1983009808
        %v3282 = vunpack.c.0.s8 %v3281
        %v3283 = vlaneseq
        %v3284 = vshrl.u32 %v3283, 7
        %v3285 = vsub.s32 %v3282, %v3284
        %v3286 = vrot.slane %v3278, %v3285
        %v3288 = vunpack.c.l.s4 1983009808
        %v3289 = vunpack.c.0.s8 %v3288
        %v3290 = vlaneseq
        %v3291 = vshrl.u32 %v3290, 7
        %v3292 = vsub.s32 %v3289, %v3291
        %v3293 = vrot.slane %v3279, %v3292
        %v3294 = vcombine.low %v3286, %v3293
        %v3295 = vcombine.low %v1653, %v1657
        %v3296 = vcombine.low %v1661, %v1665
        %v3298 = vunpack.c.l.s4 1983009808
        %v3299 = vunpack.c.0.s8 %v3298
        %v3300 = vlaneseq
        %v3301 = vshrl.u32 %v3300, 7
        %v3302 = vsub.s32 %v3299, %v3301
        %v3303 = vrot.slane %v3295, %v3302
        %v3305 = vunpack.c.l.s4 1983009808
        %v3306 = vunpack.c.0.s8 %v3305
        %v3307 = vlaneseq
        %v3308 = vshrl.u32 %v3307, 7
        %v3309 = vsub.s32 %v3306, %v3308
        %v3310 = vrot.slane %v3296, %v3309
        %v3311 = vcombine.low %v3303, %v3310
        %v3312 = vcombine.low %v1669, %v1673
        %v3313 = vcombine.low %v1677, %v1681
        %v3315 = vunpack.c.l.s4 1983009808
        %v3316 = vunpack.c.0.s8 %v3315
        %v3317 = vlaneseq
        %v3318 = vshrl.u32 %v3317, 7
        %v3319 = vsub.s32 %v3316, %v3318
        %v3320 = vrot.slane %v3312, %v3319
        %v3322 = vunpack.c.l.s4 1983009808
        %v3323 = vunpack.c.0.s8 %v3322
        %v3324 = vlaneseq
        %v3325 = vshrl.u32 %v3324, 7
        %v3326 = vsub.s32 %v3323, %v3325
        %v3327 = vrot.slane %v3313, %v3326
        %v3328 = vcombine.low %v3320, %v3327
        %v3329 = vcombine.low %v1685, %v1689
        %v3330 = vcombine.low %v1693, %v1697
        %v3332 = vunpack.c.l.s4 1983009808
        %v3333 = vunpack.c.0.s8 %v3332
        %v3334 = vlaneseq
        %v3335 = vshrl.u32 %v3334, 7
        %v3336 = vsub.s32 %v3333, %v3335
        %v3337 = vrot.slane %v3329, %v3336
        %v3339 = vunpack.c.l.s4 1983009808
        %v3340 = vunpack.c.0.s8 %v3339
        %v3341 = vlaneseq
        %v3342 = vshrl.u32 %v3341, 7
        %v3343 = vsub.s32 %v3340, %v3342
        %v3344 = vrot.slane %v3330, %v3343
        %v3345 = vcombine.low %v3337, %v3344
        %v3346 = vcombine.low %v1701, %v1705
        %v3347 = vcombine.low %v1709, %v1713
        %v3349 = vunpack.c.l.s4 1983009808
        %v3350 = vunpack.c.0.s8 %v3349
        %v3351 = vlaneseq
        %v3352 = vshrl.u32 %v3351, 7
        %v3353 = vsub.s32 %v3350, %v3352
        %v3354 = vrot.slane %v3346, %v3353
        %v3356 = vunpack.c.l.s4 1983009808
        %v3357 = vunpack.c.0.s8 %v3356
        %v3358 = vlaneseq
        %v3359 = vshrl.u32 %v3358, 7
        %v3360 = vsub.s32 %v3357, %v3359
        %v3361 = vrot.slane %v3347, %v3360
        %v3362 = vcombine.low %v3354, %v3361
        %v3363 = vcombine.low %v1717, %v1721
        %v3364 = vcombine.low %v1725, %v1729
        %v3366 = vunpack.c.l.s4 1983009808
        %v3367 = vunpack.c.0.s8 %v3366
        %v3368 = vlaneseq
        %v3369 = vshrl.u32 %v3368, 7
        %v3370 = vsub.s32 %v3367, %v3369
        %v3371 = vrot.slane %v3363, %v3370
        %v3373 = vunpack.c.l.s4 1983009808
        %v3374 = vunpack.c.0.s8 %v3373
        %v3375 = vlaneseq
        %v3376 = vshrl.u32 %v3375, 7
        %v3377 = vsub.s32 %v3374, %v3376
        %v3378 = vrot.slane %v3364, %v3377
        %v3379 = vcombine.low %v3371, %v3378
        %v3380 = vcombine.low %v1733, %v1737
        %v3381 = vcombine.low %v1741, %v1745
        %v3383 = vunpack.c.l.s4 1983009808
        %v3384 = vunpack.c.0.s8 %v3383
        %v3385 = vlaneseq
        %v3386 = vshrl.u32 %v3385, 7
        %v3387 = vsub.s32 %v3384, %v3386
        %v3388 = vrot.slane %v3380, %v3387
        %v3390 = vunpack.c.l.s4 1983009808
        %v3391 = vunpack.c.0.s8 %v3390
        %v3392 = vlaneseq
        %v3393 = vshrl.u32 %v3392, 7
        %v3394 = vsub.s32 %v3391, %v3393
        %v3395 = vrot.slane %v3381, %v3394
        %v3396 = vcombine.low %v3388, %v3395
        %v3397 = vcombine.low %v1749, %v1753
        %v3398 = vcombine.low %v1757, %v1761
        %v3400 = vunpack.c.l.s4 1983009808
        %v3401 = vunpack.c.0.s8 %v3400
        %v3402 = vlaneseq
        %v3403 = vshrl.u32 %v3402, 7
        %v3404 = vsub.s32 %v3401, %v3403
        %v3405 = vrot.slane %v3397, %v3404
        %v3407 = vunpack.c.l.s4 1983009808
        %v3408 = vunpack.c.0.s8 %v3407
        %v3409 = vlaneseq
        %v3410 = vshrl.u32 %v3409, 7
        %v3411 = vsub.s32 %v3408, %v3410
        %v3412 = vrot.slane %v3398, %v3411
        %v3413 = vcombine.low %v3405, %v3412
        %v3414 = vcombine.low %v1765, %v1769
        %v3415 = vcombine.low %v1773, %v1777
        %v3417 = vunpack.c.l.s4 1983009808
        %v3418 = vunpack.c.0.s8 %v3417
        %v3419 = vlaneseq
        %v3420 = vshrl.u32 %v3419, 7
        %v3421 = vsub.s32 %v3418, %v3420
        %v3422 = vrot.slane %v3414, %v3421
        %v3424 = vunpack.c.l.s4 1983009808
        %v3425 = vunpack.c.0.s8 %v3424
        %v3426 = vlaneseq
        %v3427 = vshrl.u32 %v3426, 7
        %v3428 = vsub.s32 %v3425, %v3427
        %v3429 = vrot.slane %v3415, %v3428
        %v3430 = vcombine.low %v3422, %v3429
        %v3431 = vcombine.low %v1781, %v1785
        %v3432 = vcombine.low %v1789, %v1793
        %v3434 = vunpack.c.l.s4 1983009808
        %v3435 = vunpack.c.0.s8 %v3434
        %v3436 = vlaneseq
        %v3437 = vshrl.u32 %v3436, 7
        %v3438 = vsub.s32 %v3435, %v3437
        %v3439 = vrot.slane %v3431, %v3438
        %v3441 = vunpack.c.l.s4 1983009808
        %v3442 = vunpack.c.0.s8 %v3441
        %v3443 = vlaneseq
        %v3444 = vshrl.u32 %v3443, 7
        %v3445 = vsub.s32 %v3442, %v3444
        %v3446 = vrot.slane %v3432, %v3445
        %v3447 = vcombine.low %v3439, %v3446
        %v3448 = vcombine.low %v1797, %v1801
        %v3449 = vcombine.low %v1805, %v1809
        %v3451 = vunpack.c.l.s4 1983009808
        %v3452 = vunpack.c.0.s8 %v3451
        %v3453 = vlaneseq
        %v3454 = vshrl.u32 %v3453, 7
        %v3455 = vsub.s32 %v3452, %v3454
        %v3456 = vrot.slane %v3448, %v3455
        %v3458 = vunpack.c.l.s4 1983009808
        %v3459 = vunpack.c.0.s8 %v3458
        %v3460 = vlaneseq
        %v3461 = vshrl.u32 %v3460, 7
        %v3462 = vsub.s32 %v3459, %v3461
        %v3463 = vrot.slane %v3449, %v3462
        %v3464 = vcombine.low %v3456, %v3463
        %v3465 = vcombine.low %v1813, %v1817
        %v3466 = vcombine.low %v1821, %v1825
        %v3468 = vunpack.c.l.s4 1983009808
        %v3469 = vunpack.c.0.s8 %v3468
        %v3470 = vlaneseq
        %v3471 = vshrl.u32 %v3470, 7
        %v3472 = vsub.s32 %v3469, %v3471
        %v3473 = vrot.slane %v3465, %v3472
        %v3475 = vunpack.c.l.s4 1983009808
        %v3476 = vunpack.c.0.s8 %v3475
        %v3477 = vlaneseq
        %v3478 = vshrl.u32 %v3477, 7
        %v3479 = vsub.s32 %v3476, %v3478
        %v3480 = vrot.slane %v3466, %v3479
        %v3481 = vcombine.low %v3473, %v3480
        %v3482 = vcombine.low %v1829, %v1833
        %v3483 = vcombine.low %v1837, %v1841
        %v3485 = vunpack.c.l.s4 1983009808
        %v3486 = vunpack.c.0.s8 %v3485
        %v3487 = vlaneseq
        %v3488 = vshrl.u32 %v3487, 7
        %v3489 = vsub.s32 %v3486, %v3488
        %v3490 = vrot.slane %v3482, %v3489
        %v3492 = vunpack.c.l.s4 1983009808
        %v3493 = vunpack.c.0.s8 %v3492
        %v3494 = vlaneseq
        %v3495 = vshrl.u32 %v3494, 7
        %v3496 = vsub.s32 %v3493, %v3495
        %v3497 = vrot.slane %v3483, %v3496
        %v3498 = vcombine.low %v3490, %v3497
        %v3499 = vcombine.low %v1845, %v1849
        %v3500 = vcombine.low %v1853, %v1857
        %v3502 = vunpack.c.l.s4 1983009808
        %v3503 = vunpack.c.0.s8 %v3502
        %v3504 = vlaneseq
        %v3505 = vshrl.u32 %v3504, 7
        %v3506 = vsub.s32 %v3503, %v3505
        %v3507 = vrot.slane %v3499, %v3506
        %v3509 = vunpack.c.l.s4 1983009808
        %v3510 = vunpack.c.0.s8 %v3509
        %v3511 = vlaneseq
        %v3512 = vshrl.u32 %v3511, 7
        %v3513 = vsub.s32 %v3510, %v3512
        %v3514 = vrot.slane %v3500, %v3513
        %v3515 = vcombine.low %v3507, %v3514
        %v3516 = vcombine.low %v1861, %v1865
        %v3517 = vcombine.low %v1869, %v1873
        %v3519 = vunpack.c.l.s4 1983009808
        %v3520 = vunpack.c.0.s8 %v3519
        %v3521 = vlaneseq
        %v3522 = vshrl.u32 %v3521, 7
        %v3523 = vsub.s32 %v3520, %v3522
        %v3524 = vrot.slane %v3516, %v3523
        %v3526 = vunpack.c.l.s4 1983009808
        %v3527 = vunpack.c.0.s8 %v3526
        %v3528 = vlaneseq
        %v3529 = vshrl.u32 %v3528, 7
        %v3530 = vsub.s32 %v3527, %v3529
        %v3531 = vrot.slane %v3517, %v3530
        %v3532 = vcombine.low %v3524, %v3531
        %v3533 = vcombine.low %v1877, %v1881
        %v3534 = vcombine.low %v1885, %v1889
        %v3536 = vunpack.c.l.s4 1983009808
        %v3537 = vunpack.c.0.s8 %v3536
        %v3538 = vlaneseq
        %v3539 = vshrl.u32 %v3538, 7
        %v3540 = vsub.s32 %v3537, %v3539
        %v3541 = vrot.slane %v3533, %v3540
        %v3543 = vunpack.c.l.s4 1983009808
        %v3544 = vunpack.c.0.s8 %v3543
        %v3545 = vlaneseq
        %v3546 = vshrl.u32 %v3545, 7
        %v3547 = vsub.s32 %v3544, %v3546
        %v3548 = vrot.slane %v3534, %v3547
        %v3549 = vcombine.low %v3541, %v3548
        %v3550 = vcombine.low %v1893, %v1897
        %v3551 = vcombine.low %v1901, %v1905
        %v3553 = vunpack.c.l.s4 1983009808
        %v3554 = vunpack.c.0.s8 %v3553
        %v3555 = vlaneseq
        %v3556 = vshrl.u32 %v3555, 7
        %v3557 = vsub.s32 %v3554, %v3556
        %v3558 = vrot.slane %v3550, %v3557
        %v3560 = vunpack.c.l.s4 1983009808
        %v3561 = vunpack.c.0.s8 %v3560
        %v3562 = vlaneseq
        %v3563 = vshrl.u32 %v3562, 7
        %v3564 = vsub.s32 %v3561, %v3563
        %v3565 = vrot.slane %v3551, %v3564
        %v3566 = vcombine.low %v3558, %v3565
        %v3567 = vcombine.low %v1909, %v1913
        %v3568 = vcombine.low %v1917, %v1921
        %v3570 = vunpack.c.l.s4 1983009808
        %v3571 = vunpack.c.0.s8 %v3570
        %v3572 = vlaneseq
        %v3573 = vshrl.u32 %v3572, 7
        %v3574 = vsub.s32 %v3571, %v3573
        %v3575 = vrot.slane %v3567, %v3574
        %v3577 = vunpack.c.l.s4 1983009808
        %v3578 = vunpack.c.0.s8 %v3577
        %v3579 = vlaneseq
        %v3580 = vshrl.u32 %v3579, 7
        %v3581 = vsub.s32 %v3578, %v3580
        %v3582 = vrot.slane %v3568, %v3581
        %v3583 = vcombine.low %v3575, %v3582
        %v3584 = vcombine.low %v1925, %v1929
        %v3585 = vcombine.low %v1933, %v1937
        %v3587 = vunpack.c.l.s4 1983009808
        %v3588 = vunpack.c.0.s8 %v3587
        %v3589 = vlaneseq
        %v3590 = vshrl.u32 %v3589, 7
        %v3591 = vsub.s32 %v3588, %v3590
        %v3592 = vrot.slane %v3584, %v3591
        %v3594 = vunpack.c.l.s4 1983009808
        %v3595 = vunpack.c.0.s8 %v3594
        %v3596 = vlaneseq
        %v3597 = vshrl.u32 %v3596, 7
        %v3598 = vsub.s32 %v3595, %v3597
        %v3599 = vrot.slane %v3585, %v3598
        %v3600 = vcombine.low %v3592, %v3599
        %v3601 = vcombine.low %v1941, %v1945
        %v3602 = vcombine.low %v1949, %v1953
        %v3604 = vunpack.c.l.s4 1983009808
        %v3605 = vunpack.c.0.s8 %v3604
        %v3606 = vlaneseq
        %v3607 = vshrl.u32 %v3606, 7
        %v3608 = vsub.s32 %v3605, %v3607
        %v3609 = vrot.slane %v3601, %v3608
        %v3611 = vunpack.c.l.s4 1983009808
        %v3612 = vunpack.c.0.s8 %v3611
        %v3613 = vlaneseq
        %v3614 = vshrl.u32 %v3613, 7
        %v3615 = vsub.s32 %v3612, %v3614
        %v3616 = vrot.slane %v3602, %v3615
        %v3617 = vcombine.low %v3609, %v3616
        %v3618 = vcombine.low %v1957, %v1961
        %v3619 = vcombine.low %v1965, %v1969
        %v3621 = vunpack.c.l.s4 1983009808
        %v3622 = vunpack.c.0.s8 %v3621
        %v3623 = vlaneseq
        %v3624 = vshrl.u32 %v3623, 7
        %v3625 = vsub.s32 %v3622, %v3624
        %v3626 = vrot.slane %v3618, %v3625
        %v3628 = vunpack.c.l.s4 1983009808
        %v3629 = vunpack.c.0.s8 %v3628
        %v3630 = vlaneseq
        %v3631 = vshrl.u32 %v3630, 7
        %v3632 = vsub.s32 %v3629, %v3631
        %v3633 = vrot.slane %v3619, %v3632
        %v3634 = vcombine.low %v3626, %v3633
        %v3635 = vcombine.low %v1973, %v1977
        %v3636 = vcombine.low %v1981, %v1985
        %v3638 = vunpack.c.l.s4 1983009808
        %v3639 = vunpack.c.0.s8 %v3638
        %v3640 = vlaneseq
        %v3641 = vshrl.u32 %v3640, 7
        %v3642 = vsub.s32 %v3639, %v3641
        %v3643 = vrot.slane %v3635, %v3642
        %v3645 = vunpack.c.l.s4 1983009808
        %v3646 = vunpack.c.0.s8 %v3645
        %v3647 = vlaneseq
        %v3648 = vshrl.u32 %v3647, 7
        %v3649 = vsub.s32 %v3646, %v3648
        %v3650 = vrot.slane %v3636, %v3649
        %v3651 = vcombine.low %v3643, %v3650
        %v3750 = vmul.f32 %v222, %v2002
        %v3751 = vmul.f32 %v223, %v2019
        %v3752 = vmul.f32 %v224, %v2036
        %v3753 = vmul.f32 %v225, %v2053
        %v3754 = vmul.f32 %v226, %v2070
        %v3755 = vmul.f32 %v227, %v2087
        %v3756 = vmul.f32 %v228, %v2104
        %v3757 = vmul.f32 %v229, %v2121
        %v3758 = vmul.f32 %v230, %v2138
        %v3759 = vmul.f32 %v231, %v2155
        %v3760 = vmul.f32 %v232, %v2172
        %v3761 = vmul.f32 %v233, %v2189
        %v3762 = vmul.f32 %v234, %v2206
        %v3763 = vmul.f32 %v235, %v2223
        %v3764 = vmul.f32 %v236, %v2240
        %v3765 = vmul.f32 %v237, %v2257
        %v3766 = vmul.f32 %v238, %v2274
        %v3767 = vmul.f32 %v239, %v2291
        %v3768 = vmul.f32 %v240, %v2308
        %v3769 = vmul.f32 %v241, %v2325
        %v3770 = vmul.f32 %v242, %v2342
        %v3771 = vmul.f32 %v243, %v2359
        %v3772 = vmul.f32 %v244, %v2376
        %v3773 = vmul.f32 %v245, %v2393
        %v3774 = vmul.f32 %v246, %v2410
        %v3775 = vmul.f32 %v247, %v2427
        %v3776 = vmul.f32 %v248, %v2444
        %v3777 = vmul.f32 %v249, %v2461
        %v3778 = vmul.f32 %v250, %v2478
        %v3779 = vmul.f32 %v251, %v2495
        %v3780 = vmul.f32 %v252, %v2512
        %v3781 = vmul.f32 %v253, %v2529
        %v3782 = vmul.f32 %v254, %v2546
        %v3783 = vmul.f32 %v255, %v2563
        %v3784 = vmul.f32 %v256, %v2580
        %v3785 = vmul.f32 %v257, %v2597
        %v3786 = vmul.f32 %v258, %v2614
        %v3787 = vmul.f32 %v259, %v2631
        %v3788 = vmul.f32 %v260, %v2648
        %v3789 = vmul.f32 %v261, %v2665
        %v3790 = vmul.f32 %v262, %v2682
        %v3791 = vmul.f32 %v263, %v2699
        %v3792 = vmul.f32 %v264, %v2716
        %v3793 = vmul.f32 %v265, %v2733
        %v3794 = vmul.f32 %v266, %v2750
        %v3795 = vmul.f32 %v267, %v2767
        %v3796 = vmul.f32 %v268, %v2784
        %v3797 = vmul.f32 %v269, %v2801
        %v3798 = vmul.f32 %v270, %v2818
        %v3799 = vmul.f32 %v271, %v2835
        %v3800 = vmul.f32 %v272, %v2852
        %v3801 = vmul.f32 %v273, %v2869
        %v3802 = vmul.f32 %v274, %v2886
        %v3803 = vmul.f32 %v275, %v2903
        %v3804 = vmul.f32 %v276, %v2920
        %v3805 = vmul.f32 %v277, %v2937
        %v3806 = vmul.f32 %v278, %v2954
        %v3807 = vmul.f32 %v279, %v2971
        %v3808 = vmul.f32 %v280, %v2988
        %v3809 = vmul.f32 %v281, %v3005
        %v3810 = vmul.f32 %v282, %v3022
        %v3811 = vmul.f32 %v283, %v3039
        %v3812 = vmul.f32 %v284, %v3056
        %v3813 = vmul.f32 %v285, %v3073
        %v3814 = vmul.f32 %v286, %v3090
        %v3815 = vmul.f32 %v287, %v3107
        %v3816 = vmul.f32 %v288, %v3124
        %v3817 = vmul.f32 %v289, %v3141
        %v3818 = vmul.f32 %v290, %v3158
        %v3819 = vmul.f32 %v291, %v3175
        %v3820 = vmul.f32 %v292, %v3192
        %v3821 = vmul.f32 %v293, %v3209
        %v3822 = vmul.f32 %v294, %v3226
        %v3823 = vmul.f32 %v295, %v3243
        %v3824 = vmul.f32 %v296, %v3260
        %v3825 = vmul.f32 %v297, %v3277
        %v3826 = vmul.f32 %v298, %v3294
        %v3827 = vmul.f32 %v299, %v3311
        %v3828 = vmul.f32 %v300, %v3328
        %v3829 = vmul.f32 %v301, %v3345
        %v3830 = vmul.f32 %v302, %v3362
        %v3831 = vmul.f32 %v303, %v3379
        %v3832 = vmul.f32 %v304, %v3396
        %v3833 = vmul.f32 %v305, %v3413
        %v3834 = vmul.f32 %v306, %v3430
        %v3835 = vmul.f32 %v307, %v3447
        %v3836 = vmul.f32 %v308, %v3464
        %v3837 = vmul.f32 %v309, %v3481
        %v3838 = vmul.f32 %v310, %v3498
        %v3839 = vmul.f32 %v311, %v3515
        %v3840 = vmul.f32 %v312, %v3532
        %v3841 = vmul.f32 %v313, %v3549
        %v3842 = vmul.f32 %v314, %v3566
        %v3843 = vmul.f32 %v315, %v3583
        %v3844 = vmul.f32 %v316, %v3600
        %v3845 = vmul.f32 %v317, %v3617
        %v3846 = vmul.f32 %v318, %v3634
        %v3847 = vmul.f32 %v319, %v3651
        %v3946 = vcombine.high %v3750, %v3750
        %v3948 = vunpack.c.l.s4 1983009808
        %v3949 = vunpack.c.0.s8 %v3948
        %v3950 = vlaneseq
        %v3951 = vshrl.u32 %v3950, 7
        %v3952 = vsub.s32 %v3949, %v3951
        %v3953 = vrot.slane %v3750, %v3952
        %v3955 = vunpack.c.l.s4 1983009808
        %v3956 = vunpack.c.0.s8 %v3955
        %v3957 = vlaneseq
        %v3958 = vshrl.u32 %v3957, 7
        %v3959 = vsub.s32 %v3956, %v3958
        %v3960 = vrot.slane %v3946, %v3959
        %v3961 = vcombine.high %v3953, %v3953
        %v3962 = vcombine.high %v3960, %v3960
        %v3963 = vcombine.high %v3751, %v3751
        %v3965 = vunpack.c.l.s4 1983009808
        %v3966 = vunpack.c.0.s8 %v3965
        %v3967 = vlaneseq
        %v3968 = vshrl.u32 %v3967, 7
        %v3969 = vsub.s32 %v3966, %v3968
        %v3970 = vrot.slane %v3751, %v3969
        %v3972 = vunpack.c.l.s4 1983009808
        %v3973 = vunpack.c.0.s8 %v3972
        %v3974 = vlaneseq
        %v3975 = vshrl.u32 %v3974, 7
        %v3976 = vsub.s32 %v3973, %v3975
        %v3977 = vrot.slane %v3963, %v3976
        %v3978 = vcombine.high %v3970, %v3970
        %v3979 = vcombine.high %v3977, %v3977
        %v3980 = vcombine.high %v3752, %v3752
        %v3982 = vunpack.c.l.s4 1983009808
        %v3983 = vunpack.c.0.s8 %v3982
        %v3984 = vlaneseq
        %v3985 = vshrl.u32 %v3984, 7
        %v3986 = vsub.s32 %v3983, %v3985
        %v3987 = vrot.slane %v3752, %v3986
        %v3989 = vunpack.c.l.s4 1983009808
        %v3990 = vunpack.c.0.s8 %v3989
        %v3991 = vlaneseq
        %v3992 = vshrl.u32 %v3991, 7
        %v3993 = vsub.s32 %v3990, %v3992
        %v3994 = vrot.slane %v3980, %v3993
        %v3995 = vcombine.high %v3987, %v3987
        %v3996 = vcombine.high %v3994, %v3994
        %v3997 = vcombine.high %v3753, %v3753
        %v3999 = vunpack.c.l.s4 1983009808
        %v4000 = vunpack.c.0.s8 %v3999
        %v4001 = vlaneseq
        %v4002 = vshrl.u32 %v4001, 7
        %v4003 = vsub.s32 %v4000, %v4002
        %v4004 = vrot.slane %v3753, %v4003
        %v4006 = vunpack.c.l.s4 1983009808
        %v4007 = vunpack.c.0.s8 %v4006
        %v4008 = vlaneseq
        %v4009 = vshrl.u32 %v4008, 7
        %v4010 = vsub.s32 %v4007, %v4009
        %v4011 = vrot.slane %v3997, %v4010
        %v4012 = vcombine.high %v4004, %v4004
        %v4013 = vcombine.high %v4011, %v4011
        %v4014 = vcombine.high %v3754, %v3754
        %v4016 = vunpack.c.l.s4 1983009808
        %v4017 = vunpack.c.0.s8 %v4016
        %v4018 = vlaneseq
        %v4019 = vshrl.u32 %v4018, 7
        %v4020 = vsub.s32 %v4017, %v4019
        %v4021 = vrot.slane %v3754, %v4020
        %v4023 = vunpack.c.l.s4 1983009808
        %v4024 = vunpack.c.0.s8 %v4023
        %v4025 = vlaneseq
        %v4026 = vshrl.u32 %v4025, 7
        %v4027 = vsub.s32 %v4024, %v4026
        %v4028 = vrot.slane %v4014, %v4027
        %v4029 = vcombine.high %v4021, %v4021
        %v4030 = vcombine.high %v4028, %v4028
        %v4031 = vcombine.high %v3755, %v3755
        %v4033 = vunpack.c.l.s4 1983009808
        %v4034 = vunpack.c.0.s8 %v4033
        %v4035 = vlaneseq
        %v4036 = vshrl.u32 %v4035, 7
        %v4037 = vsub.s32 %v4034, %v4036
        %v4038 = vrot.slane %v3755, %v4037
        %v4040 = vunpack.c.l.s4 1983009808
        %v4041 = vunpack.c.0.s8 %v4040
        %v4042 = vlaneseq
        %v4043 = vshrl.u32 %v4042, 7
        %v4044 = vsub.s32 %v4041, %v4043
        %v4045 = vrot.slane %v4031, %v4044
        %v4046 = vcombine.high %v4038, %v4038
        %v4047 = vcombine.high %v4045, %v4045
        %v4048 = vcombine.high %v3756, %v3756
        %v4050 = vunpack.c.l.s4 1983009808
        %v4051 = vunpack.c.0.s8 %v4050
        %v4052 = vlaneseq
        %v4053 = vshrl.u32 %v4052, 7
        %v4054 = vsub.s32 %v4051, %v4053
        %v4055 = vrot.slane %v3756, %v4054
        %v4057 = vunpack.c.l.s4 1983009808
        %v4058 = vunpack.c.0.s8 %v4057
        %v4059 = vlaneseq
        %v4060 = vshrl.u32 %v4059, 7
        %v4061 = vsub.s32 %v4058, %v4060
        %v4062 = vrot.slane %v4048, %v4061
        %v4063 = vcombine.high %v4055, %v4055
        %v4064 = vcombine.high %v4062, %v4062
        %v4065 = vcombine.high %v3757, %v3757
        %v4067 = vunpack.c.l.s4 1983009808
        %v4068 = vunpack.c.0.s8 %v4067
        %v4069 = vlaneseq
        %v4070 = vshrl.u32 %v4069, 7
        %v4071 = vsub.s32 %v4068, %v4070
        %v4072 = vrot.slane %v3757, %v4071
        %v4074 = vunpack.c.l.s4 1983009808
        %v4075 = vunpack.c.0.s8 %v4074
        %v4076 = vlaneseq
        %v4077 = vshrl.u32 %v4076, 7
        %v4078 = vsub.s32 %v4075, %v4077
        %v4079 = vrot.slane %v4065, %v4078
        %v4080 = vcombine.high %v4072, %v4072
        %v4081 = vcombine.high %v4079, %v4079
        %v4082 = vcombine.high %v3758, %v3758
        %v4084 = vunpack.c.l.s4 1983009808
        %v4085 = vunpack.c.0.s8 %v4084
        %v4086 = vlaneseq
        %v4087 = vshrl.u32 %v4086, 7
        %v4088 = vsub.s32 %v4085, %v4087
        %v4089 = vrot.slane %v3758, %v4088
        %v4091 = vunpack.c.l.s4 1983009808
        %v4092 = vunpack.c.0.s8 %v4091
        %v4093 = vlaneseq
        %v4094 = vshrl.u32 %v4093, 7
        %v4095 = vsub.s32 %v4092, %v4094
        %v4096 = vrot.slane %v4082, %v4095
        %v4097 = vcombine.high %v4089, %v4089
        %v4098 = vcombine.high %v4096, %v4096
        %v4099 = vcombine.high %v3759, %v3759
        %v4101 = vunpack.c.l.s4 1983009808
        %v4102 = vunpack.c.0.s8 %v4101
        %v4103 = vlaneseq
        %v4104 = vshrl.u32 %v4103, 7
        %v4105 = vsub.s32 %v4102, %v4104
        %v4106 = vrot.slane %v3759, %v4105
        %v4108 = vunpack.c.l.s4 1983009808
        %v4109 = vunpack.c.0.s8 %v4108
        %v4110 = vlaneseq
        %v4111 = vshrl.u32 %v4110, 7
        %v4112 = vsub.s32 %v4109, %v4111
        %v4113 = vrot.slane %v4099, %v4112
        %v4114 = vcombine.high %v4106, %v4106
        %v4115 = vcombine.high %v4113, %v4113
        %v4116 = vcombine.high %v3760, %v3760
        %v4118 = vunpack.c.l.s4 1983009808
        %v4119 = vunpack.c.0.s8 %v4118
        %v4120 = vlaneseq
        %v4121 = vshrl.u32 %v4120, 7
        %v4122 = vsub.s32 %v4119, %v4121
        %v4123 = vrot.slane %v3760, %v4122
        %v4125 = vunpack.c.l.s4 1983009808
        %v4126 = vunpack.c.0.s8 %v4125
        %v4127 = vlaneseq
        %v4128 = vshrl.u32 %v4127, 7
        %v4129 = vsub.s32 %v4126, %v4128
        %v4130 = vrot.slane %v4116, %v4129
        %v4131 = vcombine.high %v4123, %v4123
        %v4132 = vcombine.high %v4130, %v4130
        %v4133 = vcombine.high %v3761, %v3761
        %v4135 = vunpack.c.l.s4 1983009808
        %v4136 = vunpack.c.0.s8 %v4135
        %v4137 = vlaneseq
        %v4138 = vshrl.u32 %v4137, 7
        %v4139 = vsub.s32 %v4136, %v4138
        %v4140 = vrot.slane %v3761, %v4139
        %v4142 = vunpack.c.l.s4 1983009808
        %v4143 = vunpack.c.0.s8 %v4142
        %v4144 = vlaneseq
        %v4145 = vshrl.u32 %v4144, 7
        %v4146 = vsub.s32 %v4143, %v4145
        %v4147 = vrot.slane %v4133, %v4146
        %v4148 = vcombine.high %v4140, %v4140
        %v4149 = vcombine.high %v4147, %v4147
        %v4150 = vcombine.high %v3762, %v3762
        %v4152 = vunpack.c.l.s4 1983009808
        %v4153 = vunpack.c.0.s8 %v4152
        %v4154 = vlaneseq
        %v4155 = vshrl.u32 %v4154, 7
        %v4156 = vsub.s32 %v4153, %v4155
        %v4157 = vrot.slane %v3762, %v4156
        %v4159 = vunpack.c.l.s4 1983009808
        %v4160 = vunpack.c.0.s8 %v4159
        %v4161 = vlaneseq
        %v4162 = vshrl.u32 %v4161, 7
        %v4163 = vsub.s32 %v4160, %v4162
        %v4164 = vrot.slane %v4150, %v4163
        %v4165 = vcombine.high %v4157, %v4157
        %v4166 = vcombine.high %v4164, %v4164
        %v4167 = vcombine.high %v3763, %v3763
        %v4169 = vunpack.c.l.s4 1983009808
        %v4170 = vunpack.c.0.s8 %v4169
        %v4171 = vlaneseq
        %v4172 = vshrl.u32 %v4171, 7
        %v4173 = vsub.s32 %v4170, %v4172
        %v4174 = vrot.slane %v3763, %v4173
        %v4176 = vunpack.c.l.s4 1983009808
        %v4177 = vunpack.c.0.s8 %v4176
        %v4178 = vlaneseq
        %v4179 = vshrl.u32 %v4178, 7
        %v4180 = vsub.s32 %v4177, %v4179
        %v4181 = vrot.slane %v4167, %v4180
        %v4182 = vcombine.high %v4174, %v4174
        %v4183 = vcombine.high %v4181, %v4181
        %v4184 = vcombine.high %v3764, %v3764
        %v4186 = vunpack.c.l.s4 1983009808
        %v4187 = vunpack.c.0.s8 %v4186
        %v4188 = vlaneseq
        %v4189 = vshrl.u32 %v4188, 7
        %v4190 = vsub.s32 %v4187, %v4189
        %v4191 = vrot.slane %v3764, %v4190
        %v4193 = vunpack.c.l.s4 1983009808
        %v4194 = vunpack.c.0.s8 %v4193
        %v4195 = vlaneseq
        %v4196 = vshrl.u32 %v4195, 7
        %v4197 = vsub.s32 %v4194, %v4196
        %v4198 = vrot.slane %v4184, %v4197
        %v4199 = vcombine.high %v4191, %v4191
        %v4200 = vcombine.high %v4198, %v4198
        %v4201 = vcombine.high %v3765, %v3765
        %v4203 = vunpack.c.l.s4 1983009808
        %v4204 = vunpack.c.0.s8 %v4203
        %v4205 = vlaneseq
        %v4206 = vshrl.u32 %v4205, 7
        %v4207 = vsub.s32 %v4204, %v4206
        %v4208 = vrot.slane %v3765, %v4207
        %v4210 = vunpack.c.l.s4 1983009808
        %v4211 = vunpack.c.0.s8 %v4210
        %v4212 = vlaneseq
        %v4213 = vshrl.u32 %v4212, 7
        %v4214 = vsub.s32 %v4211, %v4213
        %v4215 = vrot.slane %v4201, %v4214
        %v4216 = vcombine.high %v4208, %v4208
        %v4217 = vcombine.high %v4215, %v4215
        %v4218 = vcombine.high %v3766, %v3766
        %v4220 = vunpack.c.l.s4 1983009808
        %v4221 = vunpack.c.0.s8 %v4220
        %v4222 = vlaneseq
        %v4223 = vshrl.u32 %v4222, 7
        %v4224 = vsub.s32 %v4221, %v4223
        %v4225 = vrot.slane %v3766, %v4224
        %v4227 = vunpack.c.l.s4 1983009808
        %v4228 = vunpack.c.0.s8 %v4227
        %v4229 = vlaneseq
        %v4230 = vshrl.u32 %v4229, 7
        %v4231 = vsub.s32 %v4228, %v4230
        %v4232 = vrot.slane %v4218, %v4231
        %v4233 = vcombine.high %v4225, %v4225
        %v4234 = vcombine.high %v4232, %v4232
        %v4235 = vcombine.high %v3767, %v3767
        %v4237 = vunpack.c.l.s4 1983009808
        %v4238 = vunpack.c.0.s8 %v4237
        %v4239 = vlaneseq
        %v4240 = vshrl.u32 %v4239, 7
        %v4241 = vsub.s32 %v4238, %v4240
        %v4242 = vrot.slane %v3767, %v4241
        %v4244 = vunpack.c.l.s4 1983009808
        %v4245 = vunpack.c.0.s8 %v4244
        %v4246 = vlaneseq
        %v4247 = vshrl.u32 %v4246, 7
        %v4248 = vsub.s32 %v4245, %v4247
        %v4249 = vrot.slane %v4235, %v4248
        %v4250 = vcombine.high %v4242, %v4242
        %v4251 = vcombine.high %v4249, %v4249
        %v4252 = vcombine.high %v3768, %v3768
        %v4254 = vunpack.c.l.s4 1983009808
        %v4255 = vunpack.c.0.s8 %v4254
        %v4256 = vlaneseq
        %v4257 = vshrl.u32 %v4256, 7
        %v4258 = vsub.s32 %v4255, %v4257
        %v4259 = vrot.slane %v3768, %v4258
        %v4261 = vunpack.c.l.s4 1983009808
        %v4262 = vunpack.c.0.s8 %v4261
        %v4263 = vlaneseq
        %v4264 = vshrl.u32 %v4263, 7
        %v4265 = vsub.s32 %v4262, %v4264
        %v4266 = vrot.slane %v4252, %v4265
        %v4267 = vcombine.high %v4259, %v4259
        %v4268 = vcombine.high %v4266, %v4266
        %v4269 = vcombine.high %v3769, %v3769
        %v4271 = vunpack.c.l.s4 1983009808
        %v4272 = vunpack.c.0.s8 %v4271
        %v4273 = vlaneseq
        %v4274 = vshrl.u32 %v4273, 7
        %v4275 = vsub.s32 %v4272, %v4274
        %v4276 = vrot.slane %v3769, %v4275
        %v4278 = vunpack.c.l.s4 1983009808
        %v4279 = vunpack.c.0.s8 %v4278
        %v4280 = vlaneseq
        %v4281 = vshrl.u32 %v4280, 7
        %v4282 = vsub.s32 %v4279, %v4281
        %v4283 = vrot.slane %v4269, %v4282
        %v4284 = vcombine.high %v4276, %v4276
        %v4285 = vcombine.high %v4283, %v4283
        %v4286 = vcombine.high %v3770, %v3770
        %v4288 = vunpack.c.l.s4 1983009808
        %v4289 = vunpack.c.0.s8 %v4288
        %v4290 = vlaneseq
        %v4291 = vshrl.u32 %v4290, 7
        %v4292 = vsub.s32 %v4289, %v4291
        %v4293 = vrot.slane %v3770, %v4292
        %v4295 = vunpack.c.l.s4 1983009808
        %v4296 = vunpack.c.0.s8 %v4295
        %v4297 = vlaneseq
        %v4298 = vshrl.u32 %v4297, 7
        %v4299 = vsub.s32 %v4296, %v4298
        %v4300 = vrot.slane %v4286, %v4299
        %v4301 = vcombine.high %v4293, %v4293
        %v4302 = vcombine.high %v4300, %v4300
        %v4303 = vcombine.high %v3771, %v3771
        %v4305 = vunpack.c.l.s4 1983009808
        %v4306 = vunpack.c.0.s8 %v4305
        %v4307 = vlaneseq
        %v4308 = vshrl.u32 %v4307, 7
        %v4309 = vsub.s32 %v4306, %v4308
        %v4310 = vrot.slane %v3771, %v4309
        %v4312 = vunpack.c.l.s4 1983009808
        %v4313 = vunpack.c.0.s8 %v4312
        %v4314 = vlaneseq
        %v4315 = vshrl.u32 %v4314, 7
        %v4316 = vsub.s32 %v4313, %v4315
        %v4317 = vrot.slane %v4303, %v4316
        %v4318 = vcombine.high %v4310, %v4310
        %v4319 = vcombine.high %v4317, %v4317
        %v4320 = vcombine.high %v3772, %v3772
        %v4322 = vunpack.c.l.s4 1983009808
        %v4323 = vunpack.c.0.s8 %v4322
        %v4324 = vlaneseq
        %v4325 = vshrl.u32 %v4324, 7
        %v4326 = vsub.s32 %v4323, %v4325
        %v4327 = vrot.slane %v3772, %v4326
        %v4329 = vunpack.c.l.s4 1983009808
        %v4330 = vunpack.c.0.s8 %v4329
        %v4331 = vlaneseq
        %v4332 = vshrl.u32 %v4331, 7
        %v4333 = vsub.s32 %v4330, %v4332
        %v4334 = vrot.slane %v4320, %v4333
        %v4335 = vcombine.high %v4327, %v4327
        %v4336 = vcombine.high %v4334, %v4334
        %v4337 = vcombine.high %v3773, %v3773
        %v4339 = vunpack.c.l.s4 1983009808
        %v4340 = vunpack.c.0.s8 %v4339
        %v4341 = vlaneseq
        %v4342 = vshrl.u32 %v4341, 7
        %v4343 = vsub.s32 %v4340, %v4342
        %v4344 = vrot.slane %v3773, %v4343
        %v4346 = vunpack.c.l.s4 1983009808
        %v4347 = vunpack.c.0.s8 %v4346
        %v4348 = vlaneseq
        %v4349 = vshrl.u32 %v4348, 7
        %v4350 = vsub.s32 %v4347, %v4349
        %v4351 = vrot.slane %v4337, %v4350
        %v4352 = vcombine.high %v4344, %v4344
        %v4353 = vcombine.high %v4351, %v4351
        %v4354 = vcombine.high %v3774, %v3774
        %v4356 = vunpack.c.l.s4 1983009808
        %v4357 = vunpack.c.0.s8 %v4356
        %v4358 = vlaneseq
        %v4359 = vshrl.u32 %v4358, 7
        %v4360 = vsub.s32 %v4357, %v4359
        %v4361 = vrot.slane %v3774, %v4360
        %v4363 = vunpack.c.l.s4 1983009808
        %v4364 = vunpack.c.0.s8 %v4363
        %v4365 = vlaneseq
        %v4366 = vshrl.u32 %v4365, 7
        %v4367 = vsub.s32 %v4364, %v4366
        %v4368 = vrot.slane %v4354, %v4367
        %v4369 = vcombine.high %v4361, %v4361
        %v4370 = vcombine.high %v4368, %v4368
        %v4371 = vcombine.high %v3775, %v3775
        %v4373 = vunpack.c.l.s4 1983009808
        %v4374 = vunpack.c.0.s8 %v4373
        %v4375 = vlaneseq
        %v4376 = vshrl.u32 %v4375, 7
        %v4377 = vsub.s32 %v4374, %v4376
        %v4378 = vrot.slane %v3775, %v4377
        %v4380 = vunpack.c.l.s4 1983009808
        %v4381 = vunpack.c.0.s8 %v4380
        %v4382 = vlaneseq
        %v4383 = vshrl.u32 %v4382, 7
        %v4384 = vsub.s32 %v4381, %v4383
        %v4385 = vrot.slane %v4371, %v4384
        %v4386 = vcombine.high %v4378, %v4378
        %v4387 = vcombine.high %v4385, %v4385
        %v4388 = vcombine.high %v3776, %v3776
        %v4390 = vunpack.c.l.s4 1983009808
        %v4391 = vunpack.c.0.s8 %v4390
        %v4392 = vlaneseq
        %v4393 = vshrl.u32 %v4392, 7
        %v4394 = vsub.s32 %v4391, %v4393
        %v4395 = vrot.slane %v3776, %v4394
        %v4397 = vunpack.c.l.s4 1983009808
        %v4398 = vunpack.c.0.s8 %v4397
        %v4399 = vlaneseq
        %v4400 = vshrl.u32 %v4399, 7
        %v4401 = vsub.s32 %v4398, %v4400
        %v4402 = vrot.slane %v4388, %v4401
        %v4403 = vcombine.high %v4395, %v4395
        %v4404 = vcombine.high %v4402, %v4402
        %v4405 = vcombine.high %v3777, %v3777
        %v4407 = vunpack.c.l.s4 1983009808
        %v4408 = vunpack.c.0.s8 %v4407
        %v4409 = vlaneseq
        %v4410 = vshrl.u32 %v4409, 7
        %v4411 = vsub.s32 %v4408, %v4410
        %v4412 = vrot.slane %v3777, %v4411
        %v4414 = vunpack.c.l.s4 1983009808
        %v4415 = vunpack.c.0.s8 %v4414
        %v4416 = vlaneseq
        %v4417 = vshrl.u32 %v4416, 7
        %v4418 = vsub.s32 %v4415, %v4417
        %v4419 = vrot.slane %v4405, %v4418
        %v4420 = vcombine.high %v4412, %v4412
        %v4421 = vcombine.high %v4419, %v4419
        %v4422 = vcombine.high %v3778, %v3778
        %v4424 = vunpack.c.l.s4 1983009808
        %v4425 = vunpack.c.0.s8 %v4424
        %v4426 = vlaneseq
        %v4427 = vshrl.u32 %v4426, 7
        %v4428 = vsub.s32 %v4425, %v4427
        %v4429 = vrot.slane %v3778, %v4428
        %v4431 = vunpack.c.l.s4 1983009808
        %v4432 = vunpack.c.0.s8 %v4431
        %v4433 = vlaneseq
        %v4434 = vshrl.u32 %v4433, 7
        %v4435 = vsub.s32 %v4432, %v4434
        %v4436 = vrot.slane %v4422, %v4435
        %v4437 = vcombine.high %v4429, %v4429
        %v4438 = vcombine.high %v4436, %v4436
        %v4439 = vcombine.high %v3779, %v3779
        %v4441 = vunpack.c.l.s4 1983009808
        %v4442 = vunpack.c.0.s8 %v4441
        %v4443 = vlaneseq
        %v4444 = vshrl.u32 %v4443, 7
        %v4445 = vsub.s32 %v4442, %v4444
        %v4446 = vrot.slane %v3779, %v4445
        %v4448 = vunpack.c.l.s4 1983009808
        %v4449 = vunpack.c.0.s8 %v4448
        %v4450 = vlaneseq
        %v4451 = vshrl.u32 %v4450, 7
        %v4452 = vsub.s32 %v4449, %v4451
        %v4453 = vrot.slane %v4439, %v4452
        %v4454 = vcombine.high %v4446, %v4446
        %v4455 = vcombine.high %v4453, %v4453
        %v4456 = vcombine.high %v3780, %v3780
        %v4458 = vunpack.c.l.s4 1983009808
        %v4459 = vunpack.c.0.s8 %v4458
        %v4460 = vlaneseq
        %v4461 = vshrl.u32 %v4460, 7
        %v4462 = vsub.s32 %v4459, %v4461
        %v4463 = vrot.slane %v3780, %v4462
        %v4465 = vunpack.c.l.s4 1983009808
        %v4466 = vunpack.c.0.s8 %v4465
        %v4467 = vlaneseq
        %v4468 = vshrl.u32 %v4467, 7
        %v4469 = vsub.s32 %v4466, %v4468
        %v4470 = vrot.slane %v4456, %v4469
        %v4471 = vcombine.high %v4463, %v4463
        %v4472 = vcombine.high %v4470, %v4470
        %v4473 = vcombine.high %v3781, %v3781
        %v4475 = vunpack.c.l.s4 1983009808
        %v4476 = vunpack.c.0.s8 %v4475
        %v4477 = vlaneseq
        %v4478 = vshrl.u32 %v4477, 7
        %v4479 = vsub.s32 %v4476, %v4478
        %v4480 = vrot.slane %v3781, %v4479
        %v4482 = vunpack.c.l.s4 1983009808
        %v4483 = vunpack.c.0.s8 %v4482
        %v4484 = vlaneseq
        %v4485 = vshrl.u32 %v4484, 7
        %v4486 = vsub.s32 %v4483, %v4485
        %v4487 = vrot.slane %v4473, %v4486
        %v4488 = vcombine.high %v4480, %v4480
        %v4489 = vcombine.high %v4487, %v4487
        %v4490 = vcombine.high %v3782, %v3782
        %v4492 = vunpack.c.l.s4 1983009808
        %v4493 = vunpack.c.0.s8 %v4492
        %v4494 = vlaneseq
        %v4495 = vshrl.u32 %v4494, 7
        %v4496 = vsub.s32 %v4493, %v4495
        %v4497 = vrot.slane %v3782, %v4496
        %v4499 = vunpack.c.l.s4 1983009808
        %v4500 = vunpack.c.0.s8 %v4499
        %v4501 = vlaneseq
        %v4502 = vshrl.u32 %v4501, 7
        %v4503 = vsub.s32 %v4500, %v4502
        %v4504 = vrot.slane %v4490, %v4503
        %v4505 = vcombine.high %v4497, %v4497
        %v4506 = vcombine.high %v4504, %v4504
        %v4507 = vcombine.high %v3783, %v3783
        %v4509 = vunpack.c.l.s4 1983009808
        %v4510 = vunpack.c.0.s8 %v4509
        %v4511 = vlaneseq
        %v4512 = vshrl.u32 %v4511, 7
        %v4513 = vsub.s32 %v4510, %v4512
        %v4514 = vrot.slane %v3783, %v4513
        %v4516 = vunpack.c.l.s4 1983009808
        %v4517 = vunpack.c.0.s8 %v4516
        %v4518 = vlaneseq
        %v4519 = vshrl.u32 %v4518, 7
        %v4520 = vsub.s32 %v4517, %v4519
        %v4521 = vrot.slane %v4507, %v4520
        %v4522 = vcombine.high %v4514, %v4514
        %v4523 = vcombine.high %v4521, %v4521
        %v4524 = vcombine.high %v3784, %v3784
        %v4526 = vunpack.c.l.s4 1983009808
        %v4527 = vunpack.c.0.s8 %v4526
        %v4528 = vlaneseq
        %v4529 = vshrl.u32 %v4528, 7
        %v4530 = vsub.s32 %v4527, %v4529
        %v4531 = vrot.slane %v3784, %v4530
        %v4533 = vunpack.c.l.s4 1983009808
        %v4534 = vunpack.c.0.s8 %v4533
        %v4535 = vlaneseq
        %v4536 = vshrl.u32 %v4535, 7
        %v4537 = vsub.s32 %v4534, %v4536
        %v4538 = vrot.slane %v4524, %v4537
        %v4539 = vcombine.high %v4531, %v4531
        %v4540 = vcombine.high %v4538, %v4538
        %v4541 = vcombine.high %v3785, %v3785
        %v4543 = vunpack.c.l.s4 1983009808
        %v4544 = vunpack.c.0.s8 %v4543
        %v4545 = vlaneseq
        %v4546 = vshrl.u32 %v4545, 7
        %v4547 = vsub.s32 %v4544, %v4546
        %v4548 = vrot.slane %v3785, %v4547
        %v4550 = vunpack.c.l.s4 1983009808
        %v4551 = vunpack.c.0.s8 %v4550
        %v4552 = vlaneseq
        %v4553 = vshrl.u32 %v4552, 7
        %v4554 = vsub.s32 %v4551, %v4553
        %v4555 = vrot.slane %v4541, %v4554
        %v4556 = vcombine.high %v4548, %v4548
        %v4557 = vcombine.high %v4555, %v4555
        %v4558 = vcombine.high %v3786, %v3786
        %v4560 = vunpack.c.l.s4 1983009808
        %v4561 = vunpack.c.0.s8 %v4560
        %v4562 = vlaneseq
        %v4563 = vshrl.u32 %v4562, 7
        %v4564 = vsub.s32 %v4561, %v4563
        %v4565 = vrot.slane %v3786, %v4564
        %v4567 = vunpack.c.l.s4 1983009808
        %v4568 = vunpack.c.0.s8 %v4567
        %v4569 = vlaneseq
        %v4570 = vshrl.u32 %v4569, 7
        %v4571 = vsub.s32 %v4568, %v4570
        %v4572 = vrot.slane %v4558, %v4571
        %v4573 = vcombine.high %v4565, %v4565
        %v4574 = vcombine.high %v4572, %v4572
        %v4575 = vcombine.high %v3787, %v3787
        %v4577 = vunpack.c.l.s4 1983009808
        %v4578 = vunpack.c.0.s8 %v4577
        %v4579 = vlaneseq
        %v4580 = vshrl.u32 %v4579, 7
        %v4581 = vsub.s32 %v4578, %v4580
        %v4582 = vrot.slane %v3787, %v4581
        %v4584 = vunpack.c.l.s4 1983009808
        %v4585 = vunpack.c.0.s8 %v4584
        %v4586 = vlaneseq
        %v4587 = vshrl.u32 %v4586, 7
        %v4588 = vsub.s32 %v4585, %v4587
        %v4589 = vrot.slane %v4575, %v4588
        %v4590 = vcombine.high %v4582, %v4582
        %v4591 = vcombine.high %v4589, %v4589
        %v4592 = vcombine.high %v3788, %v3788
        %v4594 = vunpack.c.l.s4 1983009808
        %v4595 = vunpack.c.0.s8 %v4594
        %v4596 = vlaneseq
        %v4597 = vshrl.u32 %v4596, 7
        %v4598 = vsub.s32 %v4595, %v4597
        %v4599 = vrot.slane %v3788, %v4598
        %v4601 = vunpack.c.l.s4 1983009808
        %v4602 = vunpack.c.0.s8 %v4601
        %v4603 = vlaneseq
        %v4604 = vshrl.u32 %v4603, 7
        %v4605 = vsub.s32 %v4602, %v4604
        %v4606 = vrot.slane %v4592, %v4605
        %v4607 = vcombine.high %v4599, %v4599
        %v4608 = vcombine.high %v4606, %v4606
        %v4609 = vcombine.high %v3789, %v3789
        %v4611 = vunpack.c.l.s4 1983009808
        %v4612 = vunpack.c.0.s8 %v4611
        %v4613 = vlaneseq
        %v4614 = vshrl.u32 %v4613, 7
        %v4615 = vsub.s32 %v4612, %v4614
        %v4616 = vrot.slane %v3789, %v4615
        %v4618 = vunpack.c.l.s4 1983009808
        %v4619 = vunpack.c.0.s8 %v4618
        %v4620 = vlaneseq
        %v4621 = vshrl.u32 %v4620, 7
        %v4622 = vsub.s32 %v4619, %v4621
        %v4623 = vrot.slane %v4609, %v4622
        %v4624 = vcombine.high %v4616, %v4616
        %v4625 = vcombine.high %v4623, %v4623
        %v4626 = vcombine.high %v3790, %v3790
        %v4628 = vunpack.c.l.s4 1983009808
        %v4629 = vunpack.c.0.s8 %v4628
        %v4630 = vlaneseq
        %v4631 = vshrl.u32 %v4630, 7
        %v4632 = vsub.s32 %v4629, %v4631
        %v4633 = vrot.slane %v3790, %v4632
        %v4635 = vunpack.c.l.s4 1983009808
        %v4636 = vunpack.c.0.s8 %v4635
        %v4637 = vlaneseq
        %v4638 = vshrl.u32 %v4637, 7
        %v4639 = vsub.s32 %v4636, %v4638
        %v4640 = vrot.slane %v4626, %v4639
        %v4641 = vcombine.high %v4633, %v4633
        %v4642 = vcombine.high %v4640, %v4640
        %v4643 = vcombine.high %v3791, %v3791
        %v4645 = vunpack.c.l.s4 1983009808
        %v4646 = vunpack.c.0.s8 %v4645
        %v4647 = vlaneseq
        %v4648 = vshrl.u32 %v4647, 7
        %v4649 = vsub.s32 %v4646, %v4648
        %v4650 = vrot.slane %v3791, %v4649
        %v4652 = vunpack.c.l.s4 1983009808
        %v4653 = vunpack.c.0.s8 %v4652
        %v4654 = vlaneseq
        %v4655 = vshrl.u32 %v4654, 7
        %v4656 = vsub.s32 %v4653, %v4655
        %v4657 = vrot.slane %v4643, %v4656
        %v4658 = vcombine.high %v4650, %v4650
        %v4659 = vcombine.high %v4657, %v4657
        %v4660 = vcombine.high %v3792, %v3792
        %v4662 = vunpack.c.l.s4 1983009808
        %v4663 = vunpack.c.0.s8 %v4662
        %v4664 = vlaneseq
        %v4665 = vshrl.u32 %v4664, 7
        %v4666 = vsub.s32 %v4663, %v4665
        %v4667 = vrot.slane %v3792, %v4666
        %v4669 = vunpack.c.l.s4 1983009808
        %v4670 = vunpack.c.0.s8 %v4669
        %v4671 = vlaneseq
        %v4672 = vshrl.u32 %v4671, 7
        %v4673 = vsub.s32 %v4670, %v4672
        %v4674 = vrot.slane %v4660, %v4673
        %v4675 = vcombine.high %v4667, %v4667
        %v4676 = vcombine.high %v4674, %v4674
        %v4677 = vcombine.high %v3793, %v3793
        %v4679 = vunpack.c.l.s4 1983009808
        %v4680 = vunpack.c.0.s8 %v4679
        %v4681 = vlaneseq
        %v4682 = vshrl.u32 %v4681, 7
        %v4683 = vsub.s32 %v4680, %v4682
        %v4684 = vrot.slane %v3793, %v4683
        %v4686 = vunpack.c.l.s4 1983009808
        %v4687 = vunpack.c.0.s8 %v4686
        %v4688 = vlaneseq
        %v4689 = vshrl.u32 %v4688, 7
        %v4690 = vsub.s32 %v4687, %v4689
        %v4691 = vrot.slane %v4677, %v4690
        %v4692 = vcombine.high %v4684, %v4684
        %v4693 = vcombine.high %v4691, %v4691
        %v4694 = vcombine.high %v3794, %v3794
        %v4696 = vunpack.c.l.s4 1983009808
        %v4697 = vunpack.c.0.s8 %v4696
        %v4698 = vlaneseq
        %v4699 = vshrl.u32 %v4698, 7
        %v4700 = vsub.s32 %v4697, %v4699
        %v4701 = vrot.slane %v3794, %v4700
        %v4703 = vunpack.c.l.s4 1983009808
        %v4704 = vunpack.c.0.s8 %v4703
        %v4705 = vlaneseq
        %v4706 = vshrl.u32 %v4705, 7
        %v4707 = vsub.s32 %v4704, %v4706
        %v4708 = vrot.slane %v4694, %v4707
        %v4709 = vcombine.high %v4701, %v4701
        %v4710 = vcombine.high %v4708, %v4708
        %v4711 = vcombine.high %v3795, %v3795
        %v4713 = vunpack.c.l.s4 1983009808
        %v4714 = vunpack.c.0.s8 %v4713
        %v4715 = vlaneseq
        %v4716 = vshrl.u32 %v4715, 7
        %v4717 = vsub.s32 %v4714, %v4716
        %v4718 = vrot.slane %v3795, %v4717
        %v4720 = vunpack.c.l.s4 1983009808
        %v4721 = vunpack.c.0.s8 %v4720
        %v4722 = vlaneseq
        %v4723 = vshrl.u32 %v4722, 7
        %v4724 = vsub.s32 %v4721, %v4723
        %v4725 = vrot.slane %v4711, %v4724
        %v4726 = vcombine.high %v4718, %v4718
        %v4727 = vcombine.high %v4725, %v4725
        %v4728 = vcombine.high %v3796, %v3796
        %v4730 = vunpack.c.l.s4 1983009808
        %v4731 = vunpack.c.0.s8 %v4730
        %v4732 = vlaneseq
        %v4733 = vshrl.u32 %v4732, 7
        %v4734 = vsub.s32 %v4731, %v4733
        %v4735 = vrot.slane %v3796, %v4734
        %v4737 = vunpack.c.l.s4 1983009808
        %v4738 = vunpack.c.0.s8 %v4737
        %v4739 = vlaneseq
        %v4740 = vshrl.u32 %v4739, 7
        %v4741 = vsub.s32 %v4738, %v4740
        %v4742 = vrot.slane %v4728, %v4741
        %v4743 = vcombine.high %v4735, %v4735
        %v4744 = vcombine.high %v4742, %v4742
        %v4745 = vcombine.high %v3797, %v3797
        %v4747 = vunpack.c.l.s4 1983009808
        %v4748 = vunpack.c.0.s8 %v4747
        %v4749 = vlaneseq
        %v4750 = vshrl.u32 %v4749, 7
        %v4751 = vsub.s32 %v4748, %v4750
        %v4752 = vrot.slane %v3797, %v4751
        %v4754 = vunpack.c.l.s4 1983009808
        %v4755 = vunpack.c.0.s8 %v4754
        %v4756 = vlaneseq
        %v4757 = vshrl.u32 %v4756, 7
        %v4758 = vsub.s32 %v4755, %v4757
        %v4759 = vrot.slane %v4745, %v4758
        %v4760 = vcombine.high %v4752, %v4752
        %v4761 = vcombine.high %v4759, %v4759
        %v4762 = vcombine.high %v3798, %v3798
        %v4764 = vunpack.c.l.s4 1983009808
        %v4765 = vunpack.c.0.s8 %v4764
        %v4766 = vlaneseq
        %v4767 = vshrl.u32 %v4766, 7
        %v4768 = vsub.s32 %v4765, %v4767
        %v4769 = vrot.slane %v3798, %v4768
        %v4771 = vunpack.c.l.s4 1983009808
        %v4772 = vunpack.c.0.s8 %v4771
        %v4773 = vlaneseq
        %v4774 = vshrl.u32 %v4773, 7
        %v4775 = vsub.s32 %v4772, %v4774
        %v4776 = vrot.slane %v4762, %v4775
        %v4777 = vcombine.high %v4769, %v4769
        %v4778 = vcombine.high %v4776, %v4776
        %v4779 = vcombine.high %v3799, %v3799
        %v4781 = vunpack.c.l.s4 1983009808
        %v4782 = vunpack.c.0.s8 %v4781
        %v4783 = vlaneseq
        %v4784 = vshrl.u32 %v4783, 7
        %v4785 = vsub.s32 %v4782, %v4784
        %v4786 = vrot.slane %v3799, %v4785
        %v4788 = vunpack.c.l.s4 1983009808
        %v4789 = vunpack.c.0.s8 %v4788
        %v4790 = vlaneseq
        %v4791 = vshrl.u32 %v4790, 7
        %v4792 = vsub.s32 %v4789, %v4791
        %v4793 = vrot.slane %v4779, %v4792
        %v4794 = vcombine.high %v4786, %v4786
        %v4795 = vcombine.high %v4793, %v4793
        %v4796 = vcombine.high %v3800, %v3800
        %v4798 = vunpack.c.l.s4 1983009808
        %v4799 = vunpack.c.0.s8 %v4798
        %v4800 = vlaneseq
        %v4801 = vshrl.u32 %v4800, 7
        %v4802 = vsub.s32 %v4799, %v4801
        %v4803 = vrot.slane %v3800, %v4802
        %v4805 = vunpack.c.l.s4 1983009808
        %v4806 = vunpack.c.0.s8 %v4805
        %v4807 = vlaneseq
        %v4808 = vshrl.u32 %v4807, 7
        %v4809 = vsub.s32 %v4806, %v4808
        %v4810 = vrot.slane %v4796, %v4809
        %v4811 = vcombine.high %v4803, %v4803
        %v4812 = vcombine.high %v4810, %v4810
        %v4813 = vcombine.high %v3801, %v3801
        %v4815 = vunpack.c.l.s4 1983009808
        %v4816 = vunpack.c.0.s8 %v4815
        %v4817 = vlaneseq
        %v4818 = vshrl.u32 %v4817, 7
        %v4819 = vsub.s32 %v4816, %v4818
        %v4820 = vrot.slane %v3801, %v4819
        %v4822 = vunpack.c.l.s4 1983009808
        %v4823 = vunpack.c.0.s8 %v4822
        %v4824 = vlaneseq
        %v4825 = vshrl.u32 %v4824, 7
        %v4826 = vsub.s32 %v4823, %v4825
        %v4827 = vrot.slane %v4813, %v4826
        %v4828 = vcombine.high %v4820, %v4820
        %v4829 = vcombine.high %v4827, %v4827
        %v4830 = vcombine.high %v3802, %v3802
        %v4832 = vunpack.c.l.s4 1983009808
        %v4833 = vunpack.c.0.s8 %v4832
        %v4834 = vlaneseq
        %v4835 = vshrl.u32 %v4834, 7
        %v4836 = vsub.s32 %v4833, %v4835
        %v4837 = vrot.slane %v3802, %v4836
        %v4839 = vunpack.c.l.s4 1983009808
        %v4840 = vunpack.c.0.s8 %v4839
        %v4841 = vlaneseq
        %v4842 = vshrl.u32 %v4841, 7
        %v4843 = vsub.s32 %v4840, %v4842
        %v4844 = vrot.slane %v4830, %v4843
        %v4845 = vcombine.high %v4837, %v4837
        %v4846 = vcombine.high %v4844, %v4844
        %v4847 = vcombine.high %v3803, %v3803
        %v4849 = vunpack.c.l.s4 1983009808
        %v4850 = vunpack.c.0.s8 %v4849
        %v4851 = vlaneseq
        %v4852 = vshrl.u32 %v4851, 7
        %v4853 = vsub.s32 %v4850, %v4852
        %v4854 = vrot.slane %v3803, %v4853
        %v4856 = vunpack.c.l.s4 1983009808
        %v4857 = vunpack.c.0.s8 %v4856
        %v4858 = vlaneseq
        %v4859 = vshrl.u32 %v4858, 7
        %v4860 = vsub.s32 %v4857, %v4859
        %v4861 = vrot.slane %v4847, %v4860
        %v4862 = vcombine.high %v4854, %v4854
        %v4863 = vcombine.high %v4861, %v4861
        %v4864 = vcombine.high %v3804, %v3804
        %v4866 = vunpack.c.l.s4 1983009808
        %v4867 = vunpack.c.0.s8 %v4866
        %v4868 = vlaneseq
        %v4869 = vshrl.u32 %v4868, 7
        %v4870 = vsub.s32 %v4867, %v4869
        %v4871 = vrot.slane %v3804, %v4870
        %v4873 = vunpack.c.l.s4 1983009808
        %v4874 = vunpack.c.0.s8 %v4873
        %v4875 = vlaneseq
        %v4876 = vshrl.u32 %v4875, 7
        %v4877 = vsub.s32 %v4874, %v4876
        %v4878 = vrot.slane %v4864, %v4877
        %v4879 = vcombine.high %v4871, %v4871
        %v4880 = vcombine.high %v4878, %v4878
        %v4881 = vcombine.high %v3805, %v3805
        %v4883 = vunpack.c.l.s4 1983009808
        %v4884 = vunpack.c.0.s8 %v4883
        %v4885 = vlaneseq
        %v4886 = vshrl.u32 %v4885, 7
        %v4887 = vsub.s32 %v4884, %v4886
        %v4888 = vrot.slane %v3805, %v4887
        %v4890 = vunpack.c.l.s4 1983009808
        %v4891 = vunpack.c.0.s8 %v4890
        %v4892 = vlaneseq
        %v4893 = vshrl.u32 %v4892, 7
        %v4894 = vsub.s32 %v4891, %v4893
        %v4895 = vrot.slane %v4881, %v4894
        %v4896 = vcombine.high %v4888, %v4888
        %v4897 = vcombine.high %v4895, %v4895
        %v4898 = vcombine.high %v3806, %v3806
        %v4900 = vunpack.c.l.s4 1983009808
        %v4901 = vunpack.c.0.s8 %v4900
        %v4902 = vlaneseq
        %v4903 = vshrl.u32 %v4902, 7
        %v4904 = vsub.s32 %v4901, %v4903
        %v4905 = vrot.slane %v3806, %v4904
        %v4907 = vunpack.c.l.s4 1983009808
        %v4908 = vunpack.c.0.s8 %v4907
        %v4909 = vlaneseq
        %v4910 = vshrl.u32 %v4909, 7
        %v4911 = vsub.s32 %v4908, %v4910
        %v4912 = vrot.slane %v4898, %v4911
        %v4913 = vcombine.high %v4905, %v4905
        %v4914 = vcombine.high %v4912, %v4912
        %v4915 = vcombine.high %v3807, %v3807
        %v4917 = vunpack.c.l.s4 1983009808
        %v4918 = vunpack.c.0.s8 %v4917
        %v4919 = vlaneseq
        %v4920 = vshrl.u32 %v4919, 7
        %v4921 = vsub.s32 %v4918, %v4920
        %v4922 = vrot.slane %v3807, %v4921
        %v4924 = vunpack.c.l.s4 1983009808
        %v4925 = vunpack.c.0.s8 %v4924
        %v4926 = vlaneseq
        %v4927 = vshrl.u32 %v4926, 7
        %v4928 = vsub.s32 %v4925, %v4927
        %v4929 = vrot.slane %v4915, %v4928
        %v4930 = vcombine.high %v4922, %v4922
        %v4931 = vcombine.high %v4929, %v4929
        %v4932 = vcombine.high %v3808, %v3808
        %v4934 = vunpack.c.l.s4 1983009808
        %v4935 = vunpack.c.0.s8 %v4934
        %v4936 = vlaneseq
        %v4937 = vshrl.u32 %v4936, 7
        %v4938 = vsub.s32 %v4935, %v4937
        %v4939 = vrot.slane %v3808, %v4938
        %v4941 = vunpack.c.l.s4 1983009808
        %v4942 = vunpack.c.0.s8 %v4941
        %v4943 = vlaneseq
        %v4944 = vshrl.u32 %v4943, 7
        %v4945 = vsub.s32 %v4942, %v4944
        %v4946 = vrot.slane %v4932, %v4945
        %v4947 = vcombine.high %v4939, %v4939
        %v4948 = vcombine.high %v4946, %v4946
        %v4949 = vcombine.high %v3809, %v3809
        %v4951 = vunpack.c.l.s4 1983009808
        %v4952 = vunpack.c.0.s8 %v4951
        %v4953 = vlaneseq
        %v4954 = vshrl.u32 %v4953, 7
        %v4955 = vsub.s32 %v4952, %v4954
        %v4956 = vrot.slane %v3809, %v4955
        %v4958 = vunpack.c.l.s4 1983009808
        %v4959 = vunpack.c.0.s8 %v4958
        %v4960 = vlaneseq
        %v4961 = vshrl.u32 %v4960, 7
        %v4962 = vsub.s32 %v4959, %v4961
        %v4963 = vrot.slane %v4949, %v4962
        %v4964 = vcombine.high %v4956, %v4956
        %v4965 = vcombine.high %v4963, %v4963
        %v4966 = vcombine.high %v3810, %v3810
        %v4968 = vunpack.c.l.s4 1983009808
        %v4969 = vunpack.c.0.s8 %v4968
        %v4970 = vlaneseq
        %v4971 = vshrl.u32 %v4970, 7
        %v4972 = vsub.s32 %v4969, %v4971
        %v4973 = vrot.slane %v3810, %v4972
        %v4975 = vunpack.c.l.s4 1983009808
        %v4976 = vunpack.c.0.s8 %v4975
        %v4977 = vlaneseq
        %v4978 = vshrl.u32 %v4977, 7
        %v4979 = vsub.s32 %v4976, %v4978
        %v4980 = vrot.slane %v4966, %v4979
        %v4981 = vcombine.high %v4973, %v4973
        %v4982 = vcombine.high %v4980, %v4980
        %v4983 = vcombine.high %v3811, %v3811
        %v4985 = vunpack.c.l.s4 1983009808
        %v4986 = vunpack.c.0.s8 %v4985
        %v4987 = vlaneseq
        %v4988 = vshrl.u32 %v4987, 7
        %v4989 = vsub.s32 %v4986, %v4988
        %v4990 = vrot.slane %v3811, %v4989
        %v4992 = vunpack.c.l.s4 1983009808
        %v4993 = vunpack.c.0.s8 %v4992
        %v4994 = vlaneseq
        %v4995 = vshrl.u32 %v4994, 7
        %v4996 = vsub.s32 %v4993, %v4995
        %v4997 = vrot.slane %v4983, %v4996
        %v4998 = vcombine.high %v4990, %v4990
        %v4999 = vcombine.high %v4997, %v4997
        %v5000 = vcombine.high %v3812, %v3812
        %v5002 = vunpack.c.l.s4 1983009808
        %v5003 = vunpack.c.0.s8 %v5002
        %v5004 = vlaneseq
        %v5005 = vshrl.u32 %v5004, 7
        %v5006 = vsub.s32 %v5003, %v5005
        %v5007 = vrot.slane %v3812, %v5006
        %v5009 = vunpack.c.l.s4 1983009808
        %v5010 = vunpack.c.0.s8 %v5009
        %v5011 = vlaneseq
        %v5012 = vshrl.u32 %v5011, 7
        %v5013 = vsub.s32 %v5010, %v5012
        %v5014 = vrot.slane %v5000, %v5013
        %v5015 = vcombine.high %v5007, %v5007
        %v5016 = vcombine.high %v5014, %v5014
        %v5017 = vcombine.high %v3813, %v3813
        %v5019 = vunpack.c.l.s4 1983009808
        %v5020 = vunpack.c.0.s8 %v5019
        %v5021 = vlaneseq
        %v5022 = vshrl.u32 %v5021, 7
        %v5023 = vsub.s32 %v5020, %v5022
        %v5024 = vrot.slane %v3813, %v5023
        %v5026 = vunpack.c.l.s4 1983009808
        %v5027 = vunpack.c.0.s8 %v5026
        %v5028 = vlaneseq
        %v5029 = vshrl.u32 %v5028, 7
        %v5030 = vsub.s32 %v5027, %v5029
        %v5031 = vrot.slane %v5017, %v5030
        %v5032 = vcombine.high %v5024, %v5024
        %v5033 = vcombine.high %v5031, %v5031
        %v5034 = vcombine.high %v3814, %v3814
        %v5036 = vunpack.c.l.s4 1983009808
        %v5037 = vunpack.c.0.s8 %v5036
        %v5038 = vlaneseq
        %v5039 = vshrl.u32 %v5038, 7
        %v5040 = vsub.s32 %v5037, %v5039
        %v5041 = vrot.slane %v3814, %v5040
        %v5043 = vunpack.c.l.s4 1983009808
        %v5044 = vunpack.c.0.s8 %v5043
        %v5045 = vlaneseq
        %v5046 = vshrl.u32 %v5045, 7
        %v5047 = vsub.s32 %v5044, %v5046
        %v5048 = vrot.slane %v5034, %v5047
        %v5049 = vcombine.high %v5041, %v5041
        %v5050 = vcombine.high %v5048, %v5048
        %v5051 = vcombine.high %v3815, %v3815
        %v5053 = vunpack.c.l.s4 1983009808
        %v5054 = vunpack.c.0.s8 %v5053
        %v5055 = vlaneseq
        %v5056 = vshrl.u32 %v5055, 7
        %v5057 = vsub.s32 %v5054, %v5056
        %v5058 = vrot.slane %v3815, %v5057
        %v5060 = vunpack.c.l.s4 1983009808
        %v5061 = vunpack.c.0.s8 %v5060
        %v5062 = vlaneseq
        %v5063 = vshrl.u32 %v5062, 7
        %v5064 = vsub.s32 %v5061, %v5063
        %v5065 = vrot.slane %v5051, %v5064
        %v5066 = vcombine.high %v5058, %v5058
        %v5067 = vcombine.high %v5065, %v5065
        %v5068 = vcombine.high %v3816, %v3816
        %v5070 = vunpack.c.l.s4 1983009808
        %v5071 = vunpack.c.0.s8 %v5070
        %v5072 = vlaneseq
        %v5073 = vshrl.u32 %v5072, 7
        %v5074 = vsub.s32 %v5071, %v5073
        %v5075 = vrot.slane %v3816, %v5074
        %v5077 = vunpack.c.l.s4 1983009808
        %v5078 = vunpack.c.0.s8 %v5077
        %v5079 = vlaneseq
        %v5080 = vshrl.u32 %v5079, 7
        %v5081 = vsub.s32 %v5078, %v5080
        %v5082 = vrot.slane %v5068, %v5081
        %v5083 = vcombine.high %v5075, %v5075
        %v5084 = vcombine.high %v5082, %v5082
        %v5085 = vcombine.high %v3817, %v3817
        %v5087 = vunpack.c.l.s4 1983009808
        %v5088 = vunpack.c.0.s8 %v5087
        %v5089 = vlaneseq
        %v5090 = vshrl.u32 %v5089, 7
        %v5091 = vsub.s32 %v5088, %v5090
        %v5092 = vrot.slane %v3817, %v5091
        %v5094 = vunpack.c.l.s4 1983009808
        %v5095 = vunpack.c.0.s8 %v5094
        %v5096 = vlaneseq
        %v5097 = vshrl.u32 %v5096, 7
        %v5098 = vsub.s32 %v5095, %v5097
        %v5099 = vrot.slane %v5085, %v5098
        %v5100 = vcombine.high %v5092, %v5092
        %v5101 = vcombine.high %v5099, %v5099
        %v5102 = vcombine.high %v3818, %v3818
        %v5104 = vunpack.c.l.s4 1983009808
        %v5105 = vunpack.c.0.s8 %v5104
        %v5106 = vlaneseq
        %v5107 = vshrl.u32 %v5106, 7
        %v5108 = vsub.s32 %v5105, %v5107
        %v5109 = vrot.slane %v3818, %v5108
        %v5111 = vunpack.c.l.s4 1983009808
        %v5112 = vunpack.c.0.s8 %v5111
        %v5113 = vlaneseq
        %v5114 = vshrl.u32 %v5113, 7
        %v5115 = vsub.s32 %v5112, %v5114
        %v5116 = vrot.slane %v5102, %v5115
        %v5117 = vcombine.high %v5109, %v5109
        %v5118 = vcombine.high %v5116, %v5116
        %v5119 = vcombine.high %v3819, %v3819
        %v5121 = vunpack.c.l.s4 1983009808
        %v5122 = vunpack.c.0.s8 %v5121
        %v5123 = vlaneseq
        %v5124 = vshrl.u32 %v5123, 7
        %v5125 = vsub.s32 %v5122, %v5124
        %v5126 = vrot.slane %v3819, %v5125
        %v5128 = vunpack.c.l.s4 1983009808
        %v5129 = vunpack.c.0.s8 %v5128
        %v5130 = vlaneseq
        %v5131 = vshrl.u32 %v5130, 7
        %v5132 = vsub.s32 %v5129, %v5131
        %v5133 = vrot.slane %v5119, %v5132
        %v5134 = vcombine.high %v5126, %v5126
        %v5135 = vcombine.high %v5133, %v5133
        %v5136 = vcombine.high %v3820, %v3820
        %v5138 = vunpack.c.l.s4 1983009808
        %v5139 = vunpack.c.0.s8 %v5138
        %v5140 = vlaneseq
        %v5141 = vshrl.u32 %v5140, 7
        %v5142 = vsub.s32 %v5139, %v5141
        %v5143 = vrot.slane %v3820, %v5142
        %v5145 = vunpack.c.l.s4 1983009808
        %v5146 = vunpack.c.0.s8 %v5145
        %v5147 = vlaneseq
        %v5148 = vshrl.u32 %v5147, 7
        %v5149 = vsub.s32 %v5146, %v5148
        %v5150 = vrot.slane %v5136, %v5149
        %v5151 = vcombine.high %v5143, %v5143
        %v5152 = vcombine.high %v5150, %v5150
        %v5153 = vcombine.high %v3821, %v3821
        %v5155 = vunpack.c.l.s4 1983009808
        %v5156 = vunpack.c.0.s8 %v5155
        %v5157 = vlaneseq
        %v5158 = vshrl.u32 %v5157, 7
        %v5159 = vsub.s32 %v5156, %v5158
        %v5160 = vrot.slane %v3821, %v5159
        %v5162 = vunpack.c.l.s4 1983009808
        %v5163 = vunpack.c.0.s8 %v5162
        %v5164 = vlaneseq
        %v5165 = vshrl.u32 %v5164, 7
        %v5166 = vsub.s32 %v5163, %v5165
        %v5167 = vrot.slane %v5153, %v5166
        %v5168 = vcombine.high %v5160, %v5160
        %v5169 = vcombine.high %v5167, %v5167
        %v5170 = vcombine.high %v3822, %v3822
        %v5172 = vunpack.c.l.s4 1983009808
        %v5173 = vunpack.c.0.s8 %v5172
        %v5174 = vlaneseq
        %v5175 = vshrl.u32 %v5174, 7
        %v5176 = vsub.s32 %v5173, %v5175
        %v5177 = vrot.slane %v3822, %v5176
        %v5179 = vunpack.c.l.s4 1983009808
        %v5180 = vunpack.c.0.s8 %v5179
        %v5181 = vlaneseq
        %v5182 = vshrl.u32 %v5181, 7
        %v5183 = vsub.s32 %v5180, %v5182
        %v5184 = vrot.slane %v5170, %v5183
        %v5185 = vcombine.high %v5177, %v5177
        %v5186 = vcombine.high %v5184, %v5184
        %v5187 = vcombine.high %v3823, %v3823
        %v5189 = vunpack.c.l.s4 1983009808
        %v5190 = vunpack.c.0.s8 %v5189
        %v5191 = vlaneseq
        %v5192 = vshrl.u32 %v5191, 7
        %v5193 = vsub.s32 %v5190, %v5192
        %v5194 = vrot.slane %v3823, %v5193
        %v5196 = vunpack.c.l.s4 1983009808
        %v5197 = vunpack.c.0.s8 %v5196
        %v5198 = vlaneseq
        %v5199 = vshrl.u32 %v5198, 7
        %v5200 = vsub.s32 %v5197, %v5199
        %v5201 = vrot.slane %v5187, %v5200
        %v5202 = vcombine.high %v5194, %v5194
        %v5203 = vcombine.high %v5201, %v5201
        %v5204 = vcombine.high %v3824, %v3824
        %v5206 = vunpack.c.l.s4 1983009808
        %v5207 = vunpack.c.0.s8 %v5206
        %v5208 = vlaneseq
        %v5209 = vshrl.u32 %v5208, 7
        %v5210 = vsub.s32 %v5207, %v5209
        %v5211 = vrot.slane %v3824, %v5210
        %v5213 = vunpack.c.l.s4 1983009808
        %v5214 = vunpack.c.0.s8 %v5213
        %v5215 = vlaneseq
        %v5216 = vshrl.u32 %v5215, 7
        %v5217 = vsub.s32 %v5214, %v5216
        %v5218 = vrot.slane %v5204, %v5217
        %v5219 = vcombine.high %v5211, %v5211
        %v5220 = vcombine.high %v5218, %v5218
        %v5221 = vcombine.high %v3825, %v3825
        %v5223 = vunpack.c.l.s4 1983009808
        %v5224 = vunpack.c.0.s8 %v5223
        %v5225 = vlaneseq
        %v5226 = vshrl.u32 %v5225, 7
        %v5227 = vsub.s32 %v5224, %v5226
        %v5228 = vrot.slane %v3825, %v5227
        %v5230 = vunpack.c.l.s4 1983009808
        %v5231 = vunpack.c.0.s8 %v5230
        %v5232 = vlaneseq
        %v5233 = vshrl.u32 %v5232, 7
        %v5234 = vsub.s32 %v5231, %v5233
        %v5235 = vrot.slane %v5221, %v5234
        %v5236 = vcombine.high %v5228, %v5228
        %v5237 = vcombine.high %v5235, %v5235
        %v5238 = vcombine.high %v3826, %v3826
        %v5240 = vunpack.c.l.s4 1983009808
        %v5241 = vunpack.c.0.s8 %v5240
        %v5242 = vlaneseq
        %v5243 = vshrl.u32 %v5242, 7
        %v5244 = vsub.s32 %v5241, %v5243
        %v5245 = vrot.slane %v3826, %v5244
        %v5247 = vunpack.c.l.s4 1983009808
        %v5248 = vunpack.c.0.s8 %v5247
        %v5249 = vlaneseq
        %v5250 = vshrl.u32 %v5249, 7
        %v5251 = vsub.s32 %v5248, %v5250
        %v5252 = vrot.slane %v5238, %v5251
        %v5253 = vcombine.high %v5245, %v5245
        %v5254 = vcombine.high %v5252, %v5252
        %v5255 = vcombine.high %v3827, %v3827
        %v5257 = vunpack.c.l.s4 1983009808
        %v5258 = vunpack.c.0.s8 %v5257
        %v5259 = vlaneseq
        %v5260 = vshrl.u32 %v5259, 7
        %v5261 = vsub.s32 %v5258, %v5260
        %v5262 = vrot.slane %v3827, %v5261
        %v5264 = vunpack.c.l.s4 1983009808
        %v5265 = vunpack.c.0.s8 %v5264
        %v5266 = vlaneseq
        %v5267 = vshrl.u32 %v5266, 7
        %v5268 = vsub.s32 %v5265, %v5267
        %v5269 = vrot.slane %v5255, %v5268
        %v5270 = vcombine.high %v5262, %v5262
        %v5271 = vcombine.high %v5269, %v5269
        %v5272 = vcombine.high %v3828, %v3828
        %v5274 = vunpack.c.l.s4 1983009808
        %v5275 = vunpack.c.0.s8 %v5274
        %v5276 = vlaneseq
        %v5277 = vshrl.u32 %v5276, 7
        %v5278 = vsub.s32 %v5275, %v5277
        %v5279 = vrot.slane %v3828, %v5278
        %v5281 = vunpack.c.l.s4 1983009808
        %v5282 = vunpack.c.0.s8 %v5281
        %v5283 = vlaneseq
        %v5284 = vshrl.u32 %v5283, 7
        %v5285 = vsub.s32 %v5282, %v5284
        %v5286 = vrot.slane %v5272, %v5285
        %v5287 = vcombine.high %v5279, %v5279
        %v5288 = vcombine.high %v5286, %v5286
        %v5289 = vcombine.high %v3829, %v3829
        %v5291 = vunpack.c.l.s4 1983009808
        %v5292 = vunpack.c.0.s8 %v5291
        %v5293 = vlaneseq
        %v5294 = vshrl.u32 %v5293, 7
        %v5295 = vsub.s32 %v5292, %v5294
        %v5296 = vrot.slane %v3829, %v5295
        %v5298 = vunpack.c.l.s4 1983009808
        %v5299 = vunpack.c.0.s8 %v5298
        %v5300 = vlaneseq
        %v5301 = vshrl.u32 %v5300, 7
        %v5302 = vsub.s32 %v5299, %v5301
        %v5303 = vrot.slane %v5289, %v5302
        %v5304 = vcombine.high %v5296, %v5296
        %v5305 = vcombine.high %v5303, %v5303
        %v5306 = vcombine.high %v3830, %v3830
        %v5308 = vunpack.c.l.s4 1983009808
        %v5309 = vunpack.c.0.s8 %v5308
        %v5310 = vlaneseq
        %v5311 = vshrl.u32 %v5310, 7
        %v5312 = vsub.s32 %v5309, %v5311
        %v5313 = vrot.slane %v3830, %v5312
        %v5315 = vunpack.c.l.s4 1983009808
        %v5316 = vunpack.c.0.s8 %v5315
        %v5317 = vlaneseq
        %v5318 = vshrl.u32 %v5317, 7
        %v5319 = vsub.s32 %v5316, %v5318
        %v5320 = vrot.slane %v5306, %v5319
        %v5321 = vcombine.high %v5313, %v5313
        %v5322 = vcombine.high %v5320, %v5320
        %v5323 = vcombine.high %v3831, %v3831
        %v5325 = vunpack.c.l.s4 1983009808
        %v5326 = vunpack.c.0.s8 %v5325
        %v5327 = vlaneseq
        %v5328 = vshrl.u32 %v5327, 7
        %v5329 = vsub.s32 %v5326, %v5328
        %v5330 = vrot.slane %v3831, %v5329
        %v5332 = vunpack.c.l.s4 1983009808
        %v5333 = vunpack.c.0.s8 %v5332
        %v5334 = vlaneseq
        %v5335 = vshrl.u32 %v5334, 7
        %v5336 = vsub.s32 %v5333, %v5335
        %v5337 = vrot.slane %v5323, %v5336
        %v5338 = vcombine.high %v5330, %v5330
        %v5339 = vcombine.high %v5337, %v5337
        %v5340 = vcombine.high %v3832, %v3832
        %v5342 = vunpack.c.l.s4 1983009808
        %v5343 = vunpack.c.0.s8 %v5342
        %v5344 = vlaneseq
        %v5345 = vshrl.u32 %v5344, 7
        %v5346 = vsub.s32 %v5343, %v5345
        %v5347 = vrot.slane %v3832, %v5346
        %v5349 = vunpack.c.l.s4 1983009808
        %v5350 = vunpack.c.0.s8 %v5349
        %v5351 = vlaneseq
        %v5352 = vshrl.u32 %v5351, 7
        %v5353 = vsub.s32 %v5350, %v5352
        %v5354 = vrot.slane %v5340, %v5353
        %v5355 = vcombine.high %v5347, %v5347
        %v5356 = vcombine.high %v5354, %v5354
        %v5357 = vcombine.high %v3833, %v3833
        %v5359 = vunpack.c.l.s4 1983009808
        %v5360 = vunpack.c.0.s8 %v5359
        %v5361 = vlaneseq
        %v5362 = vshrl.u32 %v5361, 7
        %v5363 = vsub.s32 %v5360, %v5362
        %v5364 = vrot.slane %v3833, %v5363
        %v5366 = vunpack.c.l.s4 1983009808
        %v5367 = vunpack.c.0.s8 %v5366
        %v5368 = vlaneseq
        %v5369 = vshrl.u32 %v5368, 7
        %v5370 = vsub.s32 %v5367, %v5369
        %v5371 = vrot.slane %v5357, %v5370
        %v5372 = vcombine.high %v5364, %v5364
        %v5373 = vcombine.high %v5371, %v5371
        %v5374 = vcombine.high %v3834, %v3834
        %v5376 = vunpack.c.l.s4 1983009808
        %v5377 = vunpack.c.0.s8 %v5376
        %v5378 = vlaneseq
        %v5379 = vshrl.u32 %v5378, 7
        %v5380 = vsub.s32 %v5377, %v5379
        %v5381 = vrot.slane %v3834, %v5380
        %v5383 = vunpack.c.l.s4 1983009808
        %v5384 = vunpack.c.0.s8 %v5383
        %v5385 = vlaneseq
        %v5386 = vshrl.u32 %v5385, 7
        %v5387 = vsub.s32 %v5384, %v5386
        %v5388 = vrot.slane %v5374, %v5387
        %v5389 = vcombine.high %v5381, %v5381
        %v5390 = vcombine.high %v5388, %v5388
        %v5391 = vcombine.high %v3835, %v3835
        %v5393 = vunpack.c.l.s4 1983009808
        %v5394 = vunpack.c.0.s8 %v5393
        %v5395 = vlaneseq
        %v5396 = vshrl.u32 %v5395, 7
        %v5397 = vsub.s32 %v5394, %v5396
        %v5398 = vrot.slane %v3835, %v5397
        %v5400 = vunpack.c.l.s4 1983009808
        %v5401 = vunpack.c.0.s8 %v5400
        %v5402 = vlaneseq
        %v5403 = vshrl.u32 %v5402, 7
        %v5404 = vsub.s32 %v5401, %v5403
        %v5405 = vrot.slane %v5391, %v5404
        %v5406 = vcombine.high %v5398, %v5398
        %v5407 = vcombine.high %v5405, %v5405
        %v5408 = vcombine.high %v3836, %v3836
        %v5410 = vunpack.c.l.s4 1983009808
        %v5411 = vunpack.c.0.s8 %v5410
        %v5412 = vlaneseq
        %v5413 = vshrl.u32 %v5412, 7
        %v5414 = vsub.s32 %v5411, %v5413
        %v5415 = vrot.slane %v3836, %v5414
        %v5417 = vunpack.c.l.s4 1983009808
        %v5418 = vunpack.c.0.s8 %v5417
        %v5419 = vlaneseq
        %v5420 = vshrl.u32 %v5419, 7
        %v5421 = vsub.s32 %v5418, %v5420
        %v5422 = vrot.slane %v5408, %v5421
        %v5423 = vcombine.high %v5415, %v5415
        %v5424 = vcombine.high %v5422, %v5422
        %v5425 = vcombine.high %v3837, %v3837
        %v5427 = vunpack.c.l.s4 1983009808
        %v5428 = vunpack.c.0.s8 %v5427
        %v5429 = vlaneseq
        %v5430 = vshrl.u32 %v5429, 7
        %v5431 = vsub.s32 %v5428, %v5430
        %v5432 = vrot.slane %v3837, %v5431
        %v5434 = vunpack.c.l.s4 1983009808
        %v5435 = vunpack.c.0.s8 %v5434
        %v5436 = vlaneseq
        %v5437 = vshrl.u32 %v5436, 7
        %v5438 = vsub.s32 %v5435, %v5437
        %v5439 = vrot.slane %v5425, %v5438
        %v5440 = vcombine.high %v5432, %v5432
        %v5441 = vcombine.high %v5439, %v5439
        %v5442 = vcombine.high %v3838, %v3838
        %v5444 = vunpack.c.l.s4 1983009808
        %v5445 = vunpack.c.0.s8 %v5444
        %v5446 = vlaneseq
        %v5447 = vshrl.u32 %v5446, 7
        %v5448 = vsub.s32 %v5445, %v5447
        %v5449 = vrot.slane %v3838, %v5448
        %v5451 = vunpack.c.l.s4 1983009808
        %v5452 = vunpack.c.0.s8 %v5451
        %v5453 = vlaneseq
        %v5454 = vshrl.u32 %v5453, 7
        %v5455 = vsub.s32 %v5452, %v5454
        %v5456 = vrot.slane %v5442, %v5455
        %v5457 = vcombine.high %v5449, %v5449
        %v5458 = vcombine.high %v5456, %v5456
        %v5459 = vcombine.high %v3839, %v3839
        %v5461 = vunpack.c.l.s4 1983009808
        %v5462 = vunpack.c.0.s8 %v5461
        %v5463 = vlaneseq
        %v5464 = vshrl.u32 %v5463, 7
        %v5465 = vsub.s32 %v5462, %v5464
        %v5466 = vrot.slane %v3839, %v5465
        %v5468 = vunpack.c.l.s4 1983009808
        %v5469 = vunpack.c.0.s8 %v5468
        %v5470 = vlaneseq
        %v5471 = vshrl.u32 %v5470, 7
        %v5472 = vsub.s32 %v5469, %v5471
        %v5473 = vrot.slane %v5459, %v5472
        %v5474 = vcombine.high %v5466, %v5466
        %v5475 = vcombine.high %v5473, %v5473
        %v5476 = vcombine.high %v3840, %v3840
        %v5478 = vunpack.c.l.s4 1983009808
        %v5479 = vunpack.c.0.s8 %v5478
        %v5480 = vlaneseq
        %v5481 = vshrl.u32 %v5480, 7
        %v5482 = vsub.s32 %v5479, %v5481
        %v5483 = vrot.slane %v3840, %v5482
        %v5485 = vunpack.c.l.s4 1983009808
        %v5486 = vunpack.c.0.s8 %v5485
        %v5487 = vlaneseq
        %v5488 = vshrl.u32 %v5487, 7
        %v5489 = vsub.s32 %v5486, %v5488
        %v5490 = vrot.slane %v5476, %v5489
        %v5491 = vcombine.high %v5483, %v5483
        %v5492 = vcombine.high %v5490, %v5490
        %v5493 = vcombine.high %v3841, %v3841
        %v5495 = vunpack.c.l.s4 1983009808
        %v5496 = vunpack.c.0.s8 %v5495
        %v5497 = vlaneseq
        %v5498 = vshrl.u32 %v5497, 7
        %v5499 = vsub.s32 %v5496, %v5498
        %v5500 = vrot.slane %v3841, %v5499
        %v5502 = vunpack.c.l.s4 1983009808
        %v5503 = vunpack.c.0.s8 %v5502
        %v5504 = vlaneseq
        %v5505 = vshrl.u32 %v5504, 7
        %v5506 = vsub.s32 %v5503, %v5505
        %v5507 = vrot.slane %v5493, %v5506
        %v5508 = vcombine.high %v5500, %v5500
        %v5509 = vcombine.high %v5507, %v5507
        %v5510 = vcombine.high %v3842, %v3842
        %v5512 = vunpack.c.l.s4 1983009808
        %v5513 = vunpack.c.0.s8 %v5512
        %v5514 = vlaneseq
        %v5515 = vshrl.u32 %v5514, 7
        %v5516 = vsub.s32 %v5513, %v5515
        %v5517 = vrot.slane %v3842, %v5516
        %v5519 = vunpack.c.l.s4 1983009808
        %v5520 = vunpack.c.0.s8 %v5519
        %v5521 = vlaneseq
        %v5522 = vshrl.u32 %v5521, 7
        %v5523 = vsub.s32 %v5520, %v5522
        %v5524 = vrot.slane %v5510, %v5523
        %v5525 = vcombine.high %v5517, %v5517
        %v5526 = vcombine.high %v5524, %v5524
        %v5527 = vcombine.high %v3843, %v3843
        %v5529 = vunpack.c.l.s4 1983009808
        %v5530 = vunpack.c.0.s8 %v5529
        %v5531 = vlaneseq
        %v5532 = vshrl.u32 %v5531, 7
        %v5533 = vsub.s32 %v5530, %v5532
        %v5534 = vrot.slane %v3843, %v5533
        %v5536 = vunpack.c.l.s4 1983009808
        %v5537 = vunpack.c.0.s8 %v5536
        %v5538 = vlaneseq
        %v5539 = vshrl.u32 %v5538, 7
        %v5540 = vsub.s32 %v5537, %v5539
        %v5541 = vrot.slane %v5527, %v5540
        %v5542 = vcombine.high %v5534, %v5534
        %v5543 = vcombine.high %v5541, %v5541
        %v5544 = vcombine.high %v3844, %v3844
        %v5546 = vunpack.c.l.s4 1983009808
        %v5547 = vunpack.c.0.s8 %v5546
        %v5548 = vlaneseq
        %v5549 = vshrl.u32 %v5548, 7
        %v5550 = vsub.s32 %v5547, %v5549
        %v5551 = vrot.slane %v3844, %v5550
        %v5553 = vunpack.c.l.s4 1983009808
        %v5554 = vunpack.c.0.s8 %v5553
        %v5555 = vlaneseq
        %v5556 = vshrl.u32 %v5555, 7
        %v5557 = vsub.s32 %v5554, %v5556
        %v5558 = vrot.slane %v5544, %v5557
        %v5559 = vcombine.high %v5551, %v5551
        %v5560 = vcombine.high %v5558, %v5558
        %v5561 = vcombine.high %v3845, %v3845
        %v5563 = vunpack.c.l.s4 1983009808
        %v5564 = vunpack.c.0.s8 %v5563
        %v5565 = vlaneseq
        %v5566 = vshrl.u32 %v5565, 7
        %v5567 = vsub.s32 %v5564, %v5566
        %v5568 = vrot.slane %v3845, %v5567
        %v5570 = vunpack.c.l.s4 1983009808
        %v5571 = vunpack.c.0.s8 %v5570
        %v5572 = vlaneseq
        %v5573 = vshrl.u32 %v5572, 7
        %v5574 = vsub.s32 %v5571, %v5573
        %v5575 = vrot.slane %v5561, %v5574
        %v5576 = vcombine.high %v5568, %v5568
        %v5577 = vcombine.high %v5575, %v5575
        %v5578 = vcombine.high %v3846, %v3846
        %v5580 = vunpack.c.l.s4 1983009808
        %v5581 = vunpack.c.0.s8 %v5580
        %v5582 = vlaneseq
        %v5583 = vshrl.u32 %v5582, 7
        %v5584 = vsub.s32 %v5581, %v5583
        %v5585 = vrot.slane %v3846, %v5584
        %v5587 = vunpack.c.l.s4 1983009808
        %v5588 = vunpack.c.0.s8 %v5587
        %v5589 = vlaneseq
        %v5590 = vshrl.u32 %v5589, 7
        %v5591 = vsub.s32 %v5588, %v5590
        %v5592 = vrot.slane %v5578, %v5591
        %v5593 = vcombine.high %v5585, %v5585
        %v5594 = vcombine.high %v5592, %v5592
        %v5595 = vcombine.high %v3847, %v3847
        %v5597 = vunpack.c.l.s4 1983009808
        %v5598 = vunpack.c.0.s8 %v5597
        %v5599 = vlaneseq
        %v5600 = vshrl.u32 %v5599, 7
        %v5601 = vsub.s32 %v5598, %v5600
        %v5602 = vrot.slane %v3847, %v5601
        %v5604 = vunpack.c.l.s4 1983009808
        %v5605 = vunpack.c.0.s8 %v5604
        %v5606 = vlaneseq
        %v5607 = vshrl.u32 %v5606, 7
        %v5608 = vsub.s32 %v5605, %v5607
        %v5609 = vrot.slane %v5595, %v5608
        %v5610 = vcombine.high %v5602, %v5602
        %v5611 = vcombine.high %v5609, %v5609
        %vm6004 = vcmask 1041408
        %v6005 = vsel %vm6004, %v3953, 0.0
        %v6006 = vsel %vm6004, %v3961, 0.0
        %v6007 = vadd.f32 %v6005, %v6006
        %v6008 = vsel %vm6004, %v3960, 0.0
        %v6009 = vadd.f32 %v6007, %v6008
        %v6010 = vsel %vm6004, %v3962, 0.0
        %v6011 = vadd.f32 %v6009, %v6010
        %v6012 = vsel %vm6004, %v3970, 0.0
        %v6013 = vadd.f32 %v6011, %v6012
        %v6014 = vsel %vm6004, %v3978, 0.0
        %v6015 = vadd.f32 %v6013, %v6014
        %v6016 = vsel %vm6004, %v3977, 0.0
        %v6017 = vadd.f32 %v6015, %v6016
        %v6018 = vsel %vm6004, %v3979, 0.0
        %v6019 = vadd.f32 %v6017, %v6018
        %v6020 = vsel %vm6004, %v3987, 0.0
        %v6021 = vadd.f32 %v6019, %v6020
        %v6022 = vsel %vm6004, %v3995, 0.0
        %v6023 = vadd.f32 %v6021, %v6022
        %v6024 = vsel %vm6004, %v3994, 0.0
        %v6025 = vadd.f32 %v6023, %v6024
        %v6026 = vsel %vm6004, %v3996, 0.0
        %v6027 = vadd.f32 %v6025, %v6026
        %v6028 = vsel %vm6004, %v4004, 0.0
        %v6029 = vadd.f32 %v6027, %v6028
        %v6030 = vsel %vm6004, %v4012, 0.0
        %v6031 = vadd.f32 %v6029, %v6030
        %v6032 = vsel %vm6004, %v4011, 0.0
        %v6033 = vadd.f32 %v6031, %v6032
        %v6034 = vsel %vm6004, %v4013, 0.0
        %v6035 = vadd.f32 %v6033, %v6034
        %v6036 = vsel %vm6004, %v4021, 0.0
        %v6037 = vadd.f32 %v6035, %v6036
        %v6038 = vsel %vm6004, %v4029, 0.0
        %v6039 = vadd.f32 %v6037, %v6038
        %v6040 = vsel %vm6004, %v4028, 0.0
        %v6041 = vadd.f32 %v6039, %v6040
        %v6042 = vsel %vm6004, %v4030, 0.0
        %v6043 = vadd.f32 %v6041, %v6042
        %v6044 = vsel %vm6004, %v4038, 0.0
        %v6045 = vadd.f32 %v6043, %v6044
        %v6046 = vsel %vm6004, %v4046, 0.0
        %v6047 = vadd.f32 %v6045, %v6046
        %v6048 = vsel %vm6004, %v4045, 0.0
        %v6049 = vadd.f32 %v6047, %v6048
        %v6050 = vsel %vm6004, %v4047, 0.0
        %v6051 = vadd.f32 %v6049, %v6050
        %v6052 = vsel %vm6004, %v4055, 0.0
        %v6053 = vadd.f32 %v6051, %v6052
        %v6054 = vsel %vm6004, %v4063, 0.0
        %v6055 = vadd.f32 %v6053, %v6054
        %v6056 = vsel %vm6004, %v4062, 0.0
        %v6057 = vadd.f32 %v6055, %v6056
        %v6058 = vsel %vm6004, %v4064, 0.0
        %v6059 = vadd.f32 %v6057, %v6058
        %v6060 = vsel %vm6004, %v4072, 0.0
        %v6061 = vadd.f32 %v6059, %v6060
        %v6062 = vsel %vm6004, %v4080, 0.0
        %v6063 = vadd.f32 %v6061, %v6062
        %v6064 = vsel %vm6004, %v4079, 0.0
        %v6065 = vadd.f32 %v6063, %v6064
        %v6066 = vsel %vm6004, %v4081, 0.0
        %v6067 = vadd.f32 %v6065, %v6066
        %v6068 = vsel %vm6004, %v4089, 0.0
        %v6069 = vadd.f32 %v6067, %v6068
        %v6070 = vsel %vm6004, %v4097, 0.0
        %v6071 = vadd.f32 %v6069, %v6070
        %v6072 = vsel %vm6004, %v4096, 0.0
        %v6073 = vadd.f32 %v6071, %v6072
        %v6074 = vsel %vm6004, %v4098, 0.0
        %v6075 = vadd.f32 %v6073, %v6074
        %v6076 = vsel %vm6004, %v4106, 0.0
        %v6077 = vadd.f32 %v6075, %v6076
        %v6078 = vsel %vm6004, %v4114, 0.0
        %v6079 = vadd.f32 %v6077, %v6078
        %v6080 = vsel %vm6004, %v4113, 0.0
        %v6081 = vadd.f32 %v6079, %v6080
        %v6082 = vsel %vm6004, %v4115, 0.0
        %v6083 = vadd.f32 %v6081, %v6082
        %v6084 = vsel %vm6004, %v4123, 0.0
        %v6085 = vadd.f32 %v6083, %v6084
        %v6086 = vsel %vm6004, %v4131, 0.0
        %v6087 = vadd.f32 %v6085, %v6086
        %v6088 = vsel %vm6004, %v4130, 0.0
        %v6089 = vadd.f32 %v6087, %v6088
        %v6090 = vsel %vm6004, %v4132, 0.0
        %v6091 = vadd.f32 %v6089, %v6090
        %v6092 = vsel %vm6004, %v4140, 0.0
        %v6093 = vadd.f32 %v6091, %v6092
        %v6094 = vsel %vm6004, %v4148, 0.0
        %v6095 = vadd.f32 %v6093, %v6094
        %v6096 = vsel %vm6004, %v4147, 0.0
        %v6097 = vadd.f32 %v6095, %v6096
        %v6098 = vsel %vm6004, %v4149, 0.0
        %v6099 = vadd.f32 %v6097, %v6098
        %v6100 = vsel %vm6004, %v4157, 0.0
        %v6101 = vadd.f32 %v6099, %v6100
        %v6102 = vsel %vm6004, %v4165, 0.0
        %v6103 = vadd.f32 %v6101, %v6102
        %v6104 = vsel %vm6004, %v4164, 0.0
        %v6105 = vadd.f32 %v6103, %v6104
        %v6106 = vsel %vm6004, %v4166, 0.0
        %v6107 = vadd.f32 %v6105, %v6106
        %v6108 = vsel %vm6004, %v4174, 0.0
        %v6109 = vadd.f32 %v6107, %v6108
        %v6110 = vsel %vm6004, %v4182, 0.0
        %v6111 = vadd.f32 %v6109, %v6110
        %v6112 = vsel %vm6004, %v4181, 0.0
        %v6113 = vadd.f32 %v6111, %v6112
        %v6114 = vsel %vm6004, %v4183, 0.0
        %v6115 = vadd.f32 %v6113, %v6114
        %v6116 = vsel %vm6004, %v4191, 0.0
        %v6117 = vadd.f32 %v6115, %v6116
        %v6118 = vsel %vm6004, %v4199, 0.0
        %v6119 = vadd.f32 %v6117, %v6118
        %v6120 = vsel %vm6004, %v4198, 0.0
        %v6121 = vadd.f32 %v6119, %v6120
        %v6122 = vsel %vm6004, %v4200, 0.0
        %v6123 = vadd.f32 %v6121, %v6122
        %v6124 = vsel %vm6004, %v4208, 0.0
        %v6125 = vadd.f32 %v6123, %v6124
        %v6126 = vsel %vm6004, %v4216, 0.0
        %v6127 = vadd.f32 %v6125, %v6126
        %v6128 = vsel %vm6004, %v4215, 0.0
        %v6129 = vadd.f32 %v6127, %v6128
        %v6130 = vsel %vm6004, %v4217, 0.0
        %v6131 = vadd.f32 %v6129, %v6130
        %v6132 = vsel %vm6004, %v4225, 0.0
        %v6133 = vadd.f32 %v6131, %v6132
        %v6134 = vsel %vm6004, %v4233, 0.0
        %v6135 = vadd.f32 %v6133, %v6134
        %v6136 = vsel %vm6004, %v4232, 0.0
        %v6137 = vadd.f32 %v6135, %v6136
        %v6138 = vsel %vm6004, %v4234, 0.0
        %v6139 = vadd.f32 %v6137, %v6138
        %v6140 = vsel %vm6004, %v4242, 0.0
        %v6141 = vadd.f32 %v6139, %v6140
        %v6142 = vsel %vm6004, %v4250, 0.0
        %v6143 = vadd.f32 %v6141, %v6142
        %v6144 = vsel %vm6004, %v4249, 0.0
        %v6145 = vadd.f32 %v6143, %v6144
        %v6146 = vsel %vm6004, %v4251, 0.0
        %v6147 = vadd.f32 %v6145, %v6146
        %v6148 = vsel %vm6004, %v4259, 0.0
        %v6149 = vadd.f32 %v6147, %v6148
        %v6150 = vsel %vm6004, %v4267, 0.0
        %v6151 = vadd.f32 %v6149, %v6150
        %v6152 = vsel %vm6004, %v4266, 0.0
        %v6153 = vadd.f32 %v6151, %v6152
        %v6154 = vsel %vm6004, %v4268, 0.0
        %v6155 = vadd.f32 %v6153, %v6154
        %v6156 = vsel %vm6004, %v4276, 0.0
        %v6157 = vadd.f32 %v6155, %v6156
        %v6158 = vsel %vm6004, %v4284, 0.0
        %v6159 = vadd.f32 %v6157, %v6158
        %v6160 = vsel %vm6004, %v4283, 0.0
        %v6161 = vadd.f32 %v6159, %v6160
        %v6162 = vsel %vm6004, %v4285, 0.0
        %v6163 = vadd.f32 %v6161, %v6162
        %v6164 = vsel %vm6004, %v4293, 0.0
        %v6165 = vadd.f32 %v6163, %v6164
        %v6166 = vsel %vm6004, %v4301, 0.0
        %v6167 = vadd.f32 %v6165, %v6166
        %v6168 = vsel %vm6004, %v4300, 0.0
        %v6169 = vadd.f32 %v6167, %v6168
        %v6170 = vsel %vm6004, %v4302, 0.0
        %v6171 = vadd.f32 %v6169, %v6170
        %v6172 = vsel %vm6004, %v4310, 0.0
        %v6173 = vadd.f32 %v6171, %v6172
        %v6174 = vsel %vm6004, %v4318, 0.0
        %v6175 = vadd.f32 %v6173, %v6174
        %v6176 = vsel %vm6004, %v4317, 0.0
        %v6177 = vadd.f32 %v6175, %v6176
        %v6178 = vsel %vm6004, %v4319, 0.0
        %v6179 = vadd.f32 %v6177, %v6178
        %v6180 = vsel %vm6004, %v4327, 0.0
        %v6181 = vadd.f32 %v6179, %v6180
        %v6182 = vsel %vm6004, %v4335, 0.0
        %v6183 = vadd.f32 %v6181, %v6182
        %v6184 = vsel %vm6004, %v4334, 0.0
        %v6185 = vadd.f32 %v6183, %v6184
        %v6186 = vsel %vm6004, %v4336, 0.0
        %v6187 = vadd.f32 %v6185, %v6186
        %v6188 = vsel %vm6004, %v4344, 0.0
        %v6189 = vadd.f32 %v6187, %v6188
        %v6190 = vsel %vm6004, %v4352, 0.0
        %v6191 = vadd.f32 %v6189, %v6190
        %v6192 = vsel %vm6004, %v4351, 0.0
        %v6193 = vadd.f32 %v6191, %v6192
        %v6194 = vsel %vm6004, %v4353, 0.0
        %v6195 = vadd.f32 %v6193, %v6194
        %v6196 = vsel %vm6004, %v4361, 0.0
        %v6197 = vadd.f32 %v6195, %v6196
        %v6198 = vsel %vm6004, %v4369, 0.0
        %v6199 = vadd.f32 %v6197, %v6198
        %v6200 = vsel %vm6004, %v4368, 0.0
        %v6201 = vadd.f32 %v6199, %v6200
        %v6202 = vsel %vm6004, %v4370, 0.0
        %v6203 = vadd.f32 %v6201, %v6202
        %v6204 = vsel %vm6004, %v4378, 0.0
        %v6205 = vadd.f32 %v6203, %v6204
        %v6206 = vsel %vm6004, %v4386, 0.0
        %v6207 = vadd.f32 %v6205, %v6206
        %v6208 = vsel %vm6004, %v4385, 0.0
        %v6209 = vadd.f32 %v6207, %v6208
        %v6210 = vsel %vm6004, %v4387, 0.0
        %v6211 = vadd.f32 %v6209, %v6210
        %v6212 = vsel %vm6004, %v4395, 0.0
        %v6213 = vadd.f32 %v6211, %v6212
        %v6214 = vsel %vm6004, %v4403, 0.0
        %v6215 = vadd.f32 %v6213, %v6214
        %v6216 = vsel %vm6004, %v4402, 0.0
        %v6217 = vadd.f32 %v6215, %v6216
        %v6218 = vsel %vm6004, %v4404, 0.0
        %v6219 = vadd.f32 %v6217, %v6218
        %v6220 = vsel %vm6004, %v4412, 0.0
        %v6221 = vadd.f32 %v6219, %v6220
        %v6222 = vsel %vm6004, %v4420, 0.0
        %v6223 = vadd.f32 %v6221, %v6222
        %v6224 = vsel %vm6004, %v4419, 0.0
        %v6225 = vadd.f32 %v6223, %v6224
        %v6226 = vsel %vm6004, %v4421, 0.0
        %v6227 = vadd.f32 %v6225, %v6226
        %v6228 = vsel %vm6004, %v4429, 0.0
        %v6229 = vadd.f32 %v6227, %v6228
        %v6230 = vsel %vm6004, %v4437, 0.0
        %v6231 = vadd.f32 %v6229, %v6230
        %v6232 = vsel %vm6004, %v4436, 0.0
        %v6233 = vadd.f32 %v6231, %v6232
        %v6234 = vsel %vm6004, %v4438, 0.0
        %v6235 = vadd.f32 %v6233, %v6234
        %v6236 = vsel %vm6004, %v4446, 0.0
        %v6237 = vadd.f32 %v6235, %v6236
        %v6238 = vsel %vm6004, %v4454, 0.0
        %v6239 = vadd.f32 %v6237, %v6238
        %v6240 = vsel %vm6004, %v4453, 0.0
        %v6241 = vadd.f32 %v6239, %v6240
        %v6242 = vsel %vm6004, %v4455, 0.0
        %v6243 = vadd.f32 %v6241, %v6242
        %v6244 = vsel %vm6004, %v4463, 0.0
        %v6245 = vadd.f32 %v6243, %v6244
        %v6246 = vsel %vm6004, %v4471, 0.0
        %v6247 = vadd.f32 %v6245, %v6246
        %v6248 = vsel %vm6004, %v4470, 0.0
        %v6249 = vadd.f32 %v6247, %v6248
        %v6250 = vsel %vm6004, %v4472, 0.0
        %v6251 = vadd.f32 %v6249, %v6250
        %v6252 = vsel %vm6004, %v4480, 0.0
        %v6253 = vadd.f32 %v6251, %v6252
        %v6254 = vsel %vm6004, %v4488, 0.0
        %v6255 = vadd.f32 %v6253, %v6254
        %v6256 = vsel %vm6004, %v4487, 0.0
        %v6257 = vadd.f32 %v6255, %v6256
        %v6258 = vsel %vm6004, %v4489, 0.0
        %v6259 = vadd.f32 %v6257, %v6258
        %v6260 = vsel %vm6004, %v4497, 0.0
        %v6261 = vadd.f32 %v6259, %v6260
        %v6262 = vsel %vm6004, %v4505, 0.0
        %v6263 = vadd.f32 %v6261, %v6262
        %v6264 = vsel %vm6004, %v4504, 0.0
        %v6265 = vadd.f32 %v6263, %v6264
        %v6266 = vsel %vm6004, %v4506, 0.0
        %v6267 = vadd.f32 %v6265, %v6266
        %v6268 = vsel %vm6004, %v4514, 0.0
        %v6269 = vadd.f32 %v6267, %v6268
        %v6270 = vsel %vm6004, %v4522, 0.0
        %v6271 = vadd.f32 %v6269, %v6270
        %v6272 = vsel %vm6004, %v4521, 0.0
        %v6273 = vadd.f32 %v6271, %v6272
        %v6274 = vsel %vm6004, %v4523, 0.0
        %v6275 = vadd.f32 %v6273, %v6274
        %v6276 = vsel %vm6004, %v4531, 0.0
        %v6277 = vadd.f32 %v6275, %v6276
        %v6278 = vsel %vm6004, %v4539, 0.0
        %v6279 = vadd.f32 %v6277, %v6278
        %v6280 = vsel %vm6004, %v4538, 0.0
        %v6281 = vadd.f32 %v6279, %v6280
        %v6282 = vsel %vm6004, %v4540, 0.0
        %v6283 = vadd.f32 %v6281, %v6282
        %v6284 = vsel %vm6004, %v4548, 0.0
        %v6285 = vadd.f32 %v6283, %v6284
        %v6286 = vsel %vm6004, %v4556, 0.0
        %v6287 = vadd.f32 %v6285, %v6286
        %v6288 = vsel %vm6004, %v4555, 0.0
        %v6289 = vadd.f32 %v6287, %v6288
        %v6290 = vsel %vm6004, %v4557, 0.0
        %v6291 = vadd.f32 %v6289, %v6290
        %v6292 = vsel %vm6004, %v4565, 0.0
        %v6293 = vadd.f32 %v6291, %v6292
        %v6294 = vsel %vm6004, %v4573, 0.0
        %v6295 = vadd.f32 %v6293, %v6294
        %v6296 = vsel %vm6004, %v4572, 0.0
        %v6297 = vadd.f32 %v6295, %v6296
        %v6298 = vsel %vm6004, %v4574, 0.0
        %v6299 = vadd.f32 %v6297, %v6298
        %v6300 = vsel %vm6004, %v4582, 0.0
        %v6301 = vadd.f32 %v6299, %v6300
        %v6302 = vsel %vm6004, %v4590, 0.0
        %v6303 = vadd.f32 %v6301, %v6302
        %v6304 = vsel %vm6004, %v4589, 0.0
        %v6305 = vadd.f32 %v6303, %v6304
        %v6306 = vsel %vm6004, %v4591, 0.0
        %v6307 = vadd.f32 %v6305, %v6306
        %v6308 = vsel %vm6004, %v4599, 0.0
        %v6309 = vadd.f32 %v6307, %v6308
        %v6310 = vsel %vm6004, %v4607, 0.0
        %v6311 = vadd.f32 %v6309, %v6310
        %v6312 = vsel %vm6004, %v4606, 0.0
        %v6313 = vadd.f32 %v6311, %v6312
        %v6314 = vsel %vm6004, %v4608, 0.0
        %v6315 = vadd.f32 %v6313, %v6314
        %v6316 = vsel %vm6004, %v4616, 0.0
        %v6317 = vadd.f32 %v6315, %v6316
        %v6318 = vsel %vm6004, %v4624, 0.0
        %v6319 = vadd.f32 %v6317, %v6318
        %v6320 = vsel %vm6004, %v4623, 0.0
        %v6321 = vadd.f32 %v6319, %v6320
        %v6322 = vsel %vm6004, %v4625, 0.0
        %v6323 = vadd.f32 %v6321, %v6322
        %v6324 = vsel %vm6004, %v4633, 0.0
        %v6325 = vadd.f32 %v6323, %v6324
        %v6326 = vsel %vm6004, %v4641, 0.0
        %v6327 = vadd.f32 %v6325, %v6326
        %v6328 = vsel %vm6004, %v4640, 0.0
        %v6329 = vadd.f32 %v6327, %v6328
        %v6330 = vsel %vm6004, %v4642, 0.0
        %v6331 = vadd.f32 %v6329, %v6330
        %v6332 = vsel %vm6004, %v4650, 0.0
        %v6333 = vadd.f32 %v6331, %v6332
        %v6334 = vsel %vm6004, %v4658, 0.0
        %v6335 = vadd.f32 %v6333, %v6334
        %v6336 = vsel %vm6004, %v4657, 0.0
        %v6337 = vadd.f32 %v6335, %v6336
        %v6338 = vsel %vm6004, %v4659, 0.0
        %v6339 = vadd.f32 %v6337, %v6338
        %v6340 = vsel %vm6004, %v4667, 0.0
        %v6341 = vadd.f32 %v6339, %v6340
        %v6342 = vsel %vm6004, %v4675, 0.0
        %v6343 = vadd.f32 %v6341, %v6342
        %v6344 = vsel %vm6004, %v4674, 0.0
        %v6345 = vadd.f32 %v6343, %v6344
        %v6346 = vsel %vm6004, %v4676, 0.0
        %v6347 = vadd.f32 %v6345, %v6346
        %v6348 = vsel %vm6004, %v4684, 0.0
        %v6349 = vadd.f32 %v6347, %v6348
        %v6350 = vsel %vm6004, %v4692, 0.0
        %v6351 = vadd.f32 %v6349, %v6350
        %v6352 = vsel %vm6004, %v4691, 0.0
        %v6353 = vadd.f32 %v6351, %v6352
        %v6354 = vsel %vm6004, %v4693, 0.0
        %v6355 = vadd.f32 %v6353, %v6354
        %v6356 = vsel %vm6004, %v4701, 0.0
        %v6357 = vadd.f32 %v6355, %v6356
        %v6358 = vsel %vm6004, %v4709, 0.0
        %v6359 = vadd.f32 %v6357, %v6358
        %v6360 = vsel %vm6004, %v4708, 0.0
        %v6361 = vadd.f32 %v6359, %v6360
        %v6362 = vsel %vm6004, %v4710, 0.0
        %v6363 = vadd.f32 %v6361, %v6362
        %v6364 = vsel %vm6004, %v4718, 0.0
        %v6365 = vadd.f32 %v6363, %v6364
        %v6366 = vsel %vm6004, %v4726, 0.0
        %v6367 = vadd.f32 %v6365, %v6366
        %v6368 = vsel %vm6004, %v4725, 0.0
        %v6369 = vadd.f32 %v6367, %v6368
        %v6370 = vsel %vm6004, %v4727, 0.0
        %v6371 = vadd.f32 %v6369, %v6370
        %v6372 = vsel %vm6004, %v4735, 0.0
        %v6373 = vadd.f32 %v6371, %v6372
        %v6374 = vsel %vm6004, %v4743, 0.0
        %v6375 = vadd.f32 %v6373, %v6374
        %v6376 = vsel %vm6004, %v4742, 0.0
        %v6377 = vadd.f32 %v6375, %v6376
        %v6378 = vsel %vm6004, %v4744, 0.0
        %v6379 = vadd.f32 %v6377, %v6378
        %v6380 = vsel %vm6004, %v4752, 0.0
        %v6381 = vadd.f32 %v6379, %v6380
        %v6382 = vsel %vm6004, %v4760, 0.0
        %v6383 = vadd.f32 %v6381, %v6382
        %v6384 = vsel %vm6004, %v4759, 0.0
        %v6385 = vadd.f32 %v6383, %v6384
        %v6386 = vsel %vm6004, %v4761, 0.0
        %v6387 = vadd.f32 %v6385, %v6386
        %v6388 = vsel %vm6004, %v4769, 0.0
        %v6389 = vadd.f32 %v6387, %v6388
        %v6390 = vsel %vm6004, %v4777, 0.0
        %v6391 = vadd.f32 %v6389, %v6390
        %v6392 = vsel %vm6004, %v4776, 0.0
        %v6393 = vadd.f32 %v6391, %v6392
        %v6394 = vsel %vm6004, %v4778, 0.0
        %v6395 = vadd.f32 %v6393, %v6394
        %v6396 = vsel %vm6004, %v4786, 0.0
        %v6397 = vadd.f32 %v6395, %v6396
        %v6398 = vsel %vm6004, %v4794, 0.0
        %v6399 = vadd.f32 %v6397, %v6398
        %v6400 = vsel %vm6004, %v4793, 0.0
        %v6401 = vadd.f32 %v6399, %v6400
        %v6402 = vsel %vm6004, %v4795, 0.0
        %v6403 = vadd.f32 %v6401, %v6402
        %v6404 = vsel %vm6004, %v4803, 0.0
        %v6405 = vadd.f32 %v6403, %v6404
        %v6406 = vsel %vm6004, %v4811, 0.0
        %v6407 = vadd.f32 %v6405, %v6406
        %v6408 = vsel %vm6004, %v4810, 0.0
        %v6409 = vadd.f32 %v6407, %v6408
        %v6410 = vsel %vm6004, %v4812, 0.0
        %v6411 = vadd.f32 %v6409, %v6410
        %v6412 = vsel %vm6004, %v4820, 0.0
        %v6413 = vadd.f32 %v6411, %v6412
        %v6414 = vsel %vm6004, %v4828, 0.0
        %v6415 = vadd.f32 %v6413, %v6414
        %v6416 = vsel %vm6004, %v4827, 0.0
        %v6417 = vadd.f32 %v6415, %v6416
        %v6418 = vsel %vm6004, %v4829, 0.0
        %v6419 = vadd.f32 %v6417, %v6418
        %v6420 = vsel %vm6004, %v4837, 0.0
        %v6421 = vadd.f32 %v6419, %v6420
        %v6422 = vsel %vm6004, %v4845, 0.0
        %v6423 = vadd.f32 %v6421, %v6422
        %v6424 = vsel %vm6004, %v4844, 0.0
        %v6425 = vadd.f32 %v6423, %v6424
        %v6426 = vsel %vm6004, %v4846, 0.0
        %v6427 = vadd.f32 %v6425, %v6426
        %v6428 = vsel %vm6004, %v4854, 0.0
        %v6429 = vadd.f32 %v6427, %v6428
        %v6430 = vsel %vm6004, %v4862, 0.0
        %v6431 = vadd.f32 %v6429, %v6430
        %v6432 = vsel %vm6004, %v4861, 0.0
        %v6433 = vadd.f32 %v6431, %v6432
        %v6434 = vsel %vm6004, %v4863, 0.0
        %v6435 = vadd.f32 %v6433, %v6434
        %v6436 = vsel %vm6004, %v4871, 0.0
        %v6437 = vadd.f32 %v6435, %v6436
        %v6438 = vsel %vm6004, %v4879, 0.0
        %v6439 = vadd.f32 %v6437, %v6438
        %v6440 = vsel %vm6004, %v4878, 0.0
        %v6441 = vadd.f32 %v6439, %v6440
        %v6442 = vsel %vm6004, %v4880, 0.0
        %v6443 = vadd.f32 %v6441, %v6442
        %v6444 = vsel %vm6004, %v4888, 0.0
        %v6445 = vadd.f32 %v6443, %v6444
        %v6446 = vsel %vm6004, %v4896, 0.0
        %v6447 = vadd.f32 %v6445, %v6446
        %v6448 = vsel %vm6004, %v4895, 0.0
        %v6449 = vadd.f32 %v6447, %v6448
        %v6450 = vsel %vm6004, %v4897, 0.0
        %v6451 = vadd.f32 %v6449, %v6450
        %v6452 = vsel %vm6004, %v4905, 0.0
        %v6453 = vadd.f32 %v6451, %v6452
        %v6454 = vsel %vm6004, %v4913, 0.0
        %v6455 = vadd.f32 %v6453, %v6454
        %v6456 = vsel %vm6004, %v4912, 0.0
        %v6457 = vadd.f32 %v6455, %v6456
        %v6458 = vsel %vm6004, %v4914, 0.0
        %v6459 = vadd.f32 %v6457, %v6458
        %v6460 = vsel %vm6004, %v4922, 0.0
        %v6461 = vadd.f32 %v6459, %v6460
        %v6462 = vsel %vm6004, %v4930, 0.0
        %v6463 = vadd.f32 %v6461, %v6462
        %v6464 = vsel %vm6004, %v4929, 0.0
        %v6465 = vadd.f32 %v6463, %v6464
        %v6466 = vsel %vm6004, %v4931, 0.0
        %v6467 = vadd.f32 %v6465, %v6466
        %v6468 = vsel %vm6004, %v4939, 0.0
        %v6469 = vadd.f32 %v6467, %v6468
        %v6470 = vsel %vm6004, %v4947, 0.0
        %v6471 = vadd.f32 %v6469, %v6470
        %v6472 = vsel %vm6004, %v4946, 0.0
        %v6473 = vadd.f32 %v6471, %v6472
        %v6474 = vsel %vm6004, %v4948, 0.0
        %v6475 = vadd.f32 %v6473, %v6474
        %v6476 = vsel %vm6004, %v4956, 0.0
        %v6477 = vadd.f32 %v6475, %v6476
        %v6478 = vsel %vm6004, %v4964, 0.0
        %v6479 = vadd.f32 %v6477, %v6478
        %v6480 = vsel %vm6004, %v4963, 0.0
        %v6481 = vadd.f32 %v6479, %v6480
        %v6482 = vsel %vm6004, %v4965, 0.0
        %v6483 = vadd.f32 %v6481, %v6482
        %v6484 = vsel %vm6004, %v4973, 0.0
        %v6485 = vadd.f32 %v6483, %v6484
        %v6486 = vsel %vm6004, %v4981, 0.0
        %v6487 = vadd.f32 %v6485, %v6486
        %v6488 = vsel %vm6004, %v4980, 0.0
        %v6489 = vadd.f32 %v6487, %v6488
        %v6490 = vsel %vm6004, %v4982, 0.0
        %v6491 = vadd.f32 %v6489, %v6490
        %v6492 = vsel %vm6004, %v4990, 0.0
        %v6493 = vadd.f32 %v6491, %v6492
        %v6494 = vsel %vm6004, %v4998, 0.0
        %v6495 = vadd.f32 %v6493, %v6494
        %v6496 = vsel %vm6004, %v4997, 0.0
        %v6497 = vadd.f32 %v6495, %v6496
        %v6498 = vsel %vm6004, %v4999, 0.0
        %v6499 = vadd.f32 %v6497, %v6498
        %v6500 = vsel %vm6004, %v5007, 0.0
        %v6501 = vadd.f32 %v6499, %v6500
        %v6502 = vsel %vm6004, %v5015, 0.0
        %v6503 = vadd.f32 %v6501, %v6502
        %v6504 = vsel %vm6004, %v5014, 0.0
        %v6505 = vadd.f32 %v6503, %v6504
        %v6506 = vsel %vm6004, %v5016, 0.0
        %v6507 = vadd.f32 %v6505, %v6506
        %v6508 = vsel %vm6004, %v5024, 0.0
        %v6509 = vadd.f32 %v6507, %v6508
        %v6510 = vsel %vm6004, %v5032, 0.0
        %v6511 = vadd.f32 %v6509, %v6510
        %v6512 = vsel %vm6004, %v5031, 0.0
        %v6513 = vadd.f32 %v6511, %v6512
        %v6514 = vsel %vm6004, %v5033, 0.0
        %v6515 = vadd.f32 %v6513, %v6514
        %v6516 = vsel %vm6004, %v5041, 0.0
        %v6517 = vadd.f32 %v6515, %v6516
        %v6518 = vsel %vm6004, %v5049, 0.0
        %v6519 = vadd.f32 %v6517, %v6518
        %v6520 = vsel %vm6004, %v5048, 0.0
        %v6521 = vadd.f32 %v6519, %v6520
        %v6522 = vsel %vm6004, %v5050, 0.0
        %v6523 = vadd.f32 %v6521, %v6522
        %v6524 = vsel %vm6004, %v5058, 0.0
        %v6525 = vadd.f32 %v6523, %v6524
        %v6526 = vsel %vm6004, %v5066, 0.0
        %v6527 = vadd.f32 %v6525, %v6526
        %v6528 = vsel %vm6004, %v5065, 0.0
        %v6529 = vadd.f32 %v6527, %v6528
        %v6530 = vsel %vm6004, %v5067, 0.0
        %v6531 = vadd.f32 %v6529, %v6530
        %v6532 = vsel %vm6004, %v5075, 0.0
        %v6533 = vadd.f32 %v6531, %v6532
        %v6534 = vsel %vm6004, %v5083, 0.0
        %v6535 = vadd.f32 %v6533, %v6534
        %v6536 = vsel %vm6004, %v5082, 0.0
        %v6537 = vadd.f32 %v6535, %v6536
        %v6538 = vsel %vm6004, %v5084, 0.0
        %v6539 = vadd.f32 %v6537, %v6538
        %v6540 = vsel %vm6004, %v5092, 0.0
        %v6541 = vadd.f32 %v6539, %v6540
        %v6542 = vsel %vm6004, %v5100, 0.0
        %v6543 = vadd.f32 %v6541, %v6542
        %v6544 = vsel %vm6004, %v5099, 0.0
        %v6545 = vadd.f32 %v6543, %v6544
        %v6546 = vsel %vm6004, %v5101, 0.0
        %v6547 = vadd.f32 %v6545, %v6546
        %v6548 = vsel %vm6004, %v5109, 0.0
        %v6549 = vadd.f32 %v6547, %v6548
        %v6550 = vsel %vm6004, %v5117, 0.0
        %v6551 = vadd.f32 %v6549, %v6550
        %v6552 = vsel %vm6004, %v5116, 0.0
        %v6553 = vadd.f32 %v6551, %v6552
        %v6554 = vsel %vm6004, %v5118, 0.0
        %v6555 = vadd.f32 %v6553, %v6554
        %v6556 = vsel %vm6004, %v5126, 0.0
        %v6557 = vadd.f32 %v6555, %v6556
        %v6558 = vsel %vm6004, %v5134, 0.0
        %v6559 = vadd.f32 %v6557, %v6558
        %v6560 = vsel %vm6004, %v5133, 0.0
        %v6561 = vadd.f32 %v6559, %v6560
        %v6562 = vsel %vm6004, %v5135, 0.0
        %v6563 = vadd.f32 %v6561, %v6562
        %v6564 = vsel %vm6004, %v5143, 0.0
        %v6565 = vadd.f32 %v6563, %v6564
        %v6566 = vsel %vm6004, %v5151, 0.0
        %v6567 = vadd.f32 %v6565, %v6566
        %v6568 = vsel %vm6004, %v5150, 0.0
        %v6569 = vadd.f32 %v6567, %v6568
        %v6570 = vsel %vm6004, %v5152, 0.0
        %v6571 = vadd.f32 %v6569, %v6570
        %v6572 = vsel %vm6004, %v5160, 0.0
        %v6573 = vadd.f32 %v6571, %v6572
        %v6574 = vsel %vm6004, %v5168, 0.0
        %v6575 = vadd.f32 %v6573, %v6574
        %v6576 = vsel %vm6004, %v5167, 0.0
        %v6577 = vadd.f32 %v6575, %v6576
        %v6578 = vsel %vm6004, %v5169, 0.0
        %v6579 = vadd.f32 %v6577, %v6578
        %v6580 = vsel %vm6004, %v5177, 0.0
        %v6581 = vadd.f32 %v6579, %v6580
        %v6582 = vsel %vm6004, %v5185, 0.0
        %v6583 = vadd.f32 %v6581, %v6582
        %v6584 = vsel %vm6004, %v5184, 0.0
        %v6585 = vadd.f32 %v6583, %v6584
        %v6586 = vsel %vm6004, %v5186, 0.0
        %v6587 = vadd.f32 %v6585, %v6586
        %v6588 = vsel %vm6004, %v5194, 0.0
        %v6589 = vadd.f32 %v6587, %v6588
        %v6590 = vsel %vm6004, %v5202, 0.0
        %v6591 = vadd.f32 %v6589, %v6590
        %v6592 = vsel %vm6004, %v5201, 0.0
        %v6593 = vadd.f32 %v6591, %v6592
        %v6594 = vsel %vm6004, %v5203, 0.0
        %v6595 = vadd.f32 %v6593, %v6594
        %v6596 = vsel %vm6004, %v5211, 0.0
        %v6597 = vadd.f32 %v6595, %v6596
        %v6598 = vsel %vm6004, %v5219, 0.0
        %v6599 = vadd.f32 %v6597, %v6598
        %v6600 = vsel %vm6004, %v5218, 0.0
        %v6601 = vadd.f32 %v6599, %v6600
        %v6602 = vsel %vm6004, %v5220, 0.0
        %v6603 = vadd.f32 %v6601, %v6602
        %v6604 = vsel %vm6004, %v5228, 0.0
        %v6605 = vadd.f32 %v6603, %v6604
        %v6606 = vsel %vm6004, %v5236, 0.0
        %v6607 = vadd.f32 %v6605, %v6606
        %v6608 = vsel %vm6004, %v5235, 0.0
        %v6609 = vadd.f32 %v6607, %v6608
        %v6610 = vsel %vm6004, %v5237, 0.0
        %v6611 = vadd.f32 %v6609, %v6610
        %v6612 = vsel %vm6004, %v5245, 0.0
        %v6613 = vadd.f32 %v6611, %v6612
        %v6614 = vsel %vm6004, %v5253, 0.0
        %v6615 = vadd.f32 %v6613, %v6614
        %v6616 = vsel %vm6004, %v5252, 0.0
        %v6617 = vadd.f32 %v6615, %v6616
        %v6618 = vsel %vm6004, %v5254, 0.0
        %v6619 = vadd.f32 %v6617, %v6618
        %v6620 = vsel %vm6004, %v5262, 0.0
        %v6621 = vadd.f32 %v6619, %v6620
        %v6622 = vsel %vm6004, %v5270, 0.0
        %v6623 = vadd.f32 %v6621, %v6622
        %v6624 = vsel %vm6004, %v5269, 0.0
        %v6625 = vadd.f32 %v6623, %v6624
        %v6626 = vsel %vm6004, %v5271, 0.0
        %v6627 = vadd.f32 %v6625, %v6626
        %v6628 = vsel %vm6004, %v5279, 0.0
        %v6629 = vadd.f32 %v6627, %v6628
        %v6630 = vsel %vm6004, %v5287, 0.0
        %v6631 = vadd.f32 %v6629, %v6630
        %v6632 = vsel %vm6004, %v5286, 0.0
        %v6633 = vadd.f32 %v6631, %v6632
        %v6634 = vsel %vm6004, %v5288, 0.0
        %v6635 = vadd.f32 %v6633, %v6634
        %v6636 = vsel %vm6004, %v5296, 0.0
        %v6637 = vadd.f32 %v6635, %v6636
        %v6638 = vsel %vm6004, %v5304, 0.0
        %v6639 = vadd.f32 %v6637, %v6638
        %v6640 = vsel %vm6004, %v5303, 0.0
        %v6641 = vadd.f32 %v6639, %v6640
        %v6642 = vsel %vm6004, %v5305, 0.0
        %v6643 = vadd.f32 %v6641, %v6642
        %v6644 = vsel %vm6004, %v5313, 0.0
        %v6645 = vadd.f32 %v6643, %v6644
        %v6646 = vsel %vm6004, %v5321, 0.0
        %v6647 = vadd.f32 %v6645, %v6646
        %v6648 = vsel %vm6004, %v5320, 0.0
        %v6649 = vadd.f32 %v6647, %v6648
        %v6650 = vsel %vm6004, %v5322, 0.0
        %v6651 = vadd.f32 %v6649, %v6650
        %v6652 = vsel %vm6004, %v5330, 0.0
        %v6653 = vadd.f32 %v6651, %v6652
        %v6654 = vsel %vm6004, %v5338, 0.0
        %v6655 = vadd.f32 %v6653, %v6654
        %v6656 = vsel %vm6004, %v5337, 0.0
        %v6657 = vadd.f32 %v6655, %v6656
        %v6658 = vsel %vm6004, %v5339, 0.0
        %v6659 = vadd.f32 %v6657, %v6658
        %v6660 = vsel %vm6004, %v5347, 0.0
        %v6661 = vadd.f32 %v6659, %v6660
        %v6662 = vsel %vm6004, %v5355, 0.0
        %v6663 = vadd.f32 %v6661, %v6662
        %v6664 = vsel %vm6004, %v5354, 0.0
        %v6665 = vadd.f32 %v6663, %v6664
        %v6666 = vsel %vm6004, %v5356, 0.0
        %v6667 = vadd.f32 %v6665, %v6666
        %v6668 = vsel %vm6004, %v5364, 0.0
        %v6669 = vadd.f32 %v6667, %v6668
        %v6670 = vsel %vm6004, %v5372, 0.0
        %v6671 = vadd.f32 %v6669, %v6670
        %v6672 = vsel %vm6004, %v5371, 0.0
        %v6673 = vadd.f32 %v6671, %v6672
        %v6674 = vsel %vm6004, %v5373, 0.0
        %v6675 = vadd.f32 %v6673, %v6674
        %v6676 = vsel %vm6004, %v5381, 0.0
        %v6677 = vadd.f32 %v6675, %v6676
        %v6678 = vsel %vm6004, %v5389, 0.0
        %v6679 = vadd.f32 %v6677, %v6678
        %v6680 = vsel %vm6004, %v5388, 0.0
        %v6681 = vadd.f32 %v6679, %v6680
        %v6682 = vsel %vm6004, %v5390, 0.0
        %v6683 = vadd.f32 %v6681, %v6682
        %v6684 = vsel %vm6004, %v5398, 0.0
        %v6685 = vadd.f32 %v6683, %v6684
        %v6686 = vsel %vm6004, %v5406, 0.0
        %v6687 = vadd.f32 %v6685, %v6686
        %v6688 = vsel %vm6004, %v5405, 0.0
        %v6689 = vadd.f32 %v6687, %v6688
        %v6690 = vsel %vm6004, %v5407, 0.0
        %v6691 = vadd.f32 %v6689, %v6690
        %v6692 = vsel %vm6004, %v5415, 0.0
        %v6693 = vadd.f32 %v6691, %v6692
        %v6694 = vsel %vm6004, %v5423, 0.0
        %v6695 = vadd.f32 %v6693, %v6694
        %v6696 = vsel %vm6004, %v5422, 0.0
        %v6697 = vadd.f32 %v6695, %v6696
        %v6698 = vsel %vm6004, %v5424, 0.0
        %v6699 = vadd.f32 %v6697, %v6698
        %v6700 = vsel %vm6004, %v5432, 0.0
        %v6701 = vadd.f32 %v6699, %v6700
        %v6702 = vsel %vm6004, %v5440, 0.0
        %v6703 = vadd.f32 %v6701, %v6702
        %v6704 = vsel %vm6004, %v5439, 0.0
        %v6705 = vadd.f32 %v6703, %v6704
        %v6706 = vsel %vm6004, %v5441, 0.0
        %v6707 = vadd.f32 %v6705, %v6706
        %v6708 = vsel %vm6004, %v5449, 0.0
        %v6709 = vadd.f32 %v6707, %v6708
        %v6710 = vsel %vm6004, %v5457, 0.0
        %v6711 = vadd.f32 %v6709, %v6710
        %v6712 = vsel %vm6004, %v5456, 0.0
        %v6713 = vadd.f32 %v6711, %v6712
        %v6714 = vsel %vm6004, %v5458, 0.0
        %v6715 = vadd.f32 %v6713, %v6714
        %v6716 = vsel %vm6004, %v5466, 0.0
        %v6717 = vadd.f32 %v6715, %v6716
        %v6718 = vsel %vm6004, %v5474, 0.0
        %v6719 = vadd.f32 %v6717, %v6718
        %v6720 = vsel %vm6004, %v5473, 0.0
        %v6721 = vadd.f32 %v6719, %v6720
        %v6722 = vsel %vm6004, %v5475, 0.0
        %v6723 = vadd.f32 %v6721, %v6722
        %v6724 = vsel %vm6004, %v5483, 0.0
        %v6725 = vadd.f32 %v6723, %v6724
        %v6726 = vsel %vm6004, %v5491, 0.0
        %v6727 = vadd.f32 %v6725, %v6726
        %v6728 = vsel %vm6004, %v5490, 0.0
        %v6729 = vadd.f32 %v6727, %v6728
        %v6730 = vsel %vm6004, %v5492, 0.0
        %v6731 = vadd.f32 %v6729, %v6730
        %v6732 = vsel %vm6004, %v5500, 0.0
        %v6733 = vadd.f32 %v6731, %v6732
        %v6734 = vsel %vm6004, %v5508, 0.0
        %v6735 = vadd.f32 %v6733, %v6734
        %v6736 = vsel %vm6004, %v5507, 0.0
        %v6737 = vadd.f32 %v6735, %v6736
        %v6738 = vsel %vm6004, %v5509, 0.0
        %v6739 = vadd.f32 %v6737, %v6738
        %v6740 = vsel %vm6004, %v5517, 0.0
        %v6741 = vadd.f32 %v6739, %v6740
        %v6742 = vsel %vm6004, %v5525, 0.0
        %v6743 = vadd.f32 %v6741, %v6742
        %v6744 = vsel %vm6004, %v5524, 0.0
        %v6745 = vadd.f32 %v6743, %v6744
        %v6746 = vsel %vm6004, %v5526, 0.0
        %v6747 = vadd.f32 %v6745, %v6746
        %v6748 = vsel %vm6004, %v5534, 0.0
        %v6749 = vadd.f32 %v6747, %v6748
        %v6750 = vsel %vm6004, %v5542, 0.0
        %v6751 = vadd.f32 %v6749, %v6750
        %v6752 = vsel %vm6004, %v5541, 0.0
        %v6753 = vadd.f32 %v6751, %v6752
        %v6754 = vsel %vm6004, %v5543, 0.0
        %v6755 = vadd.f32 %v6753, %v6754
        %v6756 = vsel %vm6004, %v5551, 0.0
        %v6757 = vadd.f32 %v6755, %v6756
        %v6758 = vsel %vm6004, %v5559, 0.0
        %v6759 = vadd.f32 %v6757, %v6758
        %v6760 = vsel %vm6004, %v5558, 0.0
        %v6761 = vadd.f32 %v6759, %v6760
        %v6762 = vsel %vm6004, %v5560, 0.0
        %v6763 = vadd.f32 %v6761, %v6762
        %v6764 = vsel %vm6004, %v5568, 0.0
        %v6765 = vadd.f32 %v6763, %v6764
        %v6766 = vsel %vm6004, %v5576, 0.0
        %v6767 = vadd.f32 %v6765, %v6766
        %v6768 = vsel %vm6004, %v5575, 0.0
        %v6769 = vadd.f32 %v6767, %v6768
        %v6770 = vsel %vm6004, %v5577, 0.0
        %v6771 = vadd.f32 %v6769, %v6770
        %v6772 = vsel %vm6004, %v5585, 0.0
        %v6773 = vadd.f32 %v6771, %v6772
        %v6774 = vsel %vm6004, %v5593, 0.0
        %v6775 = vadd.f32 %v6773, %v6774
        %v6776 = vsel %vm6004, %v5592, 0.0
        %v6777 = vadd.f32 %v6775, %v6776
        %v6778 = vsel %vm6004, %v5594, 0.0
        %v6779 = vadd.f32 %v6777, %v6778
        %v6780 = vsel %vm6004, %v5602, 0.0
        %v6781 = vadd.f32 %v6779, %v6780
        %v6782 = vsel %vm6004, %v5610, 0.0
        %v6783 = vadd.f32 %v6781, %v6782
        %v6784 = vsel %vm6004, %v5609, 0.0
        %v6785 = vadd.f32 %v6783, %v6784
        %v6786 = vsel %vm6004, %v5611, 0.0
        %v6787 = vadd.f32 %v6785, %v6786
        %6788 = vadd.xlane.f32.xlu0 %v6787
        %v6789 = vpop.xlane.xlu0 %6788
        %v6790 = vadd.f32 %v221, %v6789
        %vm6791 = vcmask 1024
        %6792 = vst.msk [vmem:[#allocation2] sm:$0x3] %vm6791, %v6790
        %p6793 = scmp.eq.s32.totalorder %s21, 2
        // Predicated region
        $region45: #{tpu_custom_call.1} parent=31 // pred_check
          %p6794 = pneg %p6793
        $region46: #{tpu_custom_call.1} parent=31 // pred_check_branch
          %6796 = sbr.rel (%p6794) target = $region48
        $region47: #{tpu_custom_call.1} parent=31 // pred_region
          %v6797 = vld [vmem:[#allocation2] sm:$0x3]
          %s6798 = sld [smem:[#allocation3]]
          %v6799 = vstv %s6798
          %v6800 = vadd.f32 %v6797, %v6799
          %6801 = vst.msk [vmem:[%s3] sm:$0x3] %vm6791, %v6800
        $region48: #{tpu_custom_call.1} parent=31 // pred_fallthru
          _
        // Predicated region
        $region49: #{tpu_custom_call.1} parent=31 // pred_check
          %p6802 = pneg %p107
        $region50: #{tpu_custom_call.1} parent=31 // pred_check_branch
          %6804 = sbr.rel (%p6802) target = $region52
        $region51: #{tpu_custom_call.1} parent=31 // pred_region
          _
        $region52: #{tpu_custom_call.1} parent=31 // pred_fallthru
          _
        // Predicated region
        $region53: #{tpu_custom_call.1} parent=31 // pred_check
          %p6805 = pneg %p107
        $region54: #{tpu_custom_call.1} parent=31 // pred_check_branch
          %6807 = sbr.rel (%p6805) target = $region56
        $region55: #{tpu_custom_call.1} parent=31 // pred_region
          _
        $region56: #{tpu_custom_call.1} parent=31 // pred_fallthru
          _
      $region32: #{tpu_custom_call.1} parent=5 // pred_fallthru
        _
      %p6808 = scmp.le.s32.totalorder 2, %s16
      // Predicated region
      $region57: #{tpu_custom_call.1} parent=5 // pred_check
        %p6809 = pneg %p6808
      $region58: #{tpu_custom_call.1} parent=5 // pred_check_branch
        %6811 = sbr.rel (%p6809) target = $region60
      $region59: #{tpu_custom_call.1} parent=5 // pred_region
        %s6812 = ssub.s32 %s16, 2
      $region60: #{tpu_custom_call.1} parent=5 // pred_fallthru
        _
    $region6: #{tpu_custom_call.1} parent=1 // loop_footer
      %s20 = sadd.s32 1, %s16
    $region7: #{tpu_custom_call.1} parent=1 // loop_footer_branch
      %15 = sbr.rel target = $region3
    $region8: #{tpu_custom_call.1} parent=1 // loop_exit
      _
    %6813 = vsyncpa [#allocation5], 1
    %s6814 = scalar_lea.sflag [#allocation5], 1
    %6815 = vsyncpa %s6814, 1
    %6816 = vsyncpa [#allocation7], 1
    %s6817 = scalar_lea.sflag [#allocation7], 1
    %6818 = vsyncpa %s6817, 1

</llo_original>
